<compile_context>
chip_gen: v7x
topology: tpu7x:2x2x1
jax: 0.10.0
libtpu: 0.0.40
codegen_flags: <defaults>
</compile_context>

<pallas_src>
import functools
import math

import numpy as np
import jax
import jax.numpy as jnp
from jax import lax
from jax.experimental import pallas as pl
from jax.experimental.pallas import tpu as pltpu


# ----------------------------------------------------------------------------
# In-kernel helpers
# ----------------------------------------------------------------------------

def _ln(x, g, b, eps):
    mean = jnp.mean(x, axis=-1, keepdims=True)
    var = jnp.mean(jnp.square(x - mean), axis=-1, keepdims=True)
    return (x - mean) * lax.rsqrt(var + eps) * g + b


# ----------------------------------------------------------------------------
# Fully fused kernel: ViT encoder + relationship head, one batch element per
# grid step, weights VMEM-resident, depth loop unrolled in-kernel.
# ----------------------------------------------------------------------------

def _sg_vit_kernel(p_ref, pw_ref, pb_ref, pos_ref,
                   ln1g, ln1b, qkvw, qkvb, outw, outb,
                   ln2g, ln2b, m1w, m1b, m2w, m2b,
                   lnfg, lnfb, sw_ref, sb_ref, ow_ref, ob_ref,
                   q_ref, s_ref, attn_scr,
                   *, depth, n_heads, eps, mm_dtype):
    d = pw_ref.shape[-1]
    n = pos_ref.shape[0]
    dh = d // n_heads
    scale = 1.0 / math.sqrt(dh)

    def mm(a, b):
        # Optional bf16-cast matmul (fp32 accumulate). Default mm_dtype=f32
        # keeps parity with the fp32 PyTorch reference.
        return jnp.dot(a.astype(mm_dtype), b.astype(mm_dtype),
                       preferred_element_type=jnp.float32)

    # --- patch embedding + positional encoding --------------------------------
    x = (mm(p_ref[0].astype(jnp.float32), pw_ref[...])
         + pb_ref[...] + pos_ref[...])

    # --- transformer layers (weights resident; depth unrolled) ----------------
    for li in range(depth):
        # attention sub-block (pre-LN)
        h = _ln(x, ln1g[li], ln1b[li], eps)
        qkv = mm(h, qkvw[li]) + qkvb[li]
        q = qkv[:, :d]
        k = qkv[:, d:2 * d]
        v = qkv[:, 2 * d:]

        # Per-head attention; each head's (n, dh) output is written into the
        # (n, dim) scratch at its static lane offset so the output projection
        # is a single full-K MXU push afterwards.
        for hh in range(n_heads):
            sl = slice(hh * dh, (hh + 1) * dh)
            qh = q[:, sl] * scale                       # fold 1/sqrt(dh) into q
            s = lax.dot_general(qh, k[:, sl], (((1,), (1,)), ((), ())),
                                preferred_element_type=jnp.float32)
            s = s - jnp.max(s, axis=-1, keepdims=True)
            e = jnp.exp(s)
            p = e / jnp.sum(e, axis=-1, keepdims=True)  # exact softmax
            attn_scr[:, sl] = jnp.dot(p, v[:, sl],
                                      preferred_element_type=jnp.float32)
        x = x + mm(attn_scr[...], outw[li]) + outb[li]

        # MLP sub-block (pre-LN)
        h = _ln(x, ln2g[li], ln2b[li], eps)
        h = mm(h, m1w[li]) + m1b[li]
        # TODO(synk): PyTorch nn.GELU defaults to exact erf; tanh approximation
        # used here (the reference ViT internals are unspecified).
        h = jax.nn.gelu(h, approximate=True)
        x = x + mm(h, m2w[li]) + m2b[li]

    # --- final LayerNorm -------------------------------------------------------
    tokens = _ln(x, lnfg[...], lnfb[...], eps)

    # --- fused relationship head: subject/object projections + row softmax ----
    qs = mm(tokens, sw_ref[...]) + sb_ref[...]
    ks = mm(tokens, ow_ref[...]) + ob_ref[...]
    s = lax.dot_general(qs, ks, (((1,), (1,)), ((), ())),
                        preferred_element_type=jnp.float32)
    s = s - jnp.max(s, axis=-1, keepdims=True)
    e = jnp.exp(s)
    sm = e / jnp.sum(e, axis=-1, keepdims=True)         # exact: feeds top-k

    q_ref[0] = qs.astype(q_ref.dtype)
    n_pad = s_ref.shape[-1]
    # Lane-dense zero fill of the (n, n_pad) output block, then store the
    # real (n, n) scores into the first n lanes (no in-kernel concatenate).
    s_ref[0] = jnp.zeros((n, n_pad), jnp.float32)
    s_ref[0, :, :n] = sm.astype(s_ref.dtype)


def encoder_rel_forward(params, x, *, dim, patch_size, n_heads, mlp_dim,
                        depth, mm_dtype=jnp.float32):
    b, c, H, W = x.shape
    ps = patch_size
    gh, gw = H // ps, W // ps
    n = gh * gw
    pdim = c * ps * ps
    # TODO(synk): patchification transpose stays in XLA (not expressible as a
    # rectangular BlockSpec tile); negligible at these image sizes.
    patches = x.reshape(b, c, gh, ps, gw, ps)
    patches = jnp.transpose(patches, (0, 2, 4, 1, 3, 5)).reshape(b, n, pdim)

    n_pad = max(128, -(-n // 128) * 128)

    def resident(shape):
        # Full-array block + constant index_map -> DMA'd once, VMEM-resident
        # across all grid steps (no per-batch weight re-fetch).
        zeros = (0,) * len(shape)
        return pl.BlockSpec(shape, lambda bi: zeros)

    q, scores_p = pl.pallas_call(
        functools.partial(_sg_vit_kernel, depth=depth, n_heads=n_heads,
                          eps=1e-5, mm_dtype=mm_dtype),
        out_shape=(jax.ShapeDtypeStruct((b, n, dim), jnp.float32),
                   jax.ShapeDtypeStruct((b, n, n_pad), jnp.float32)),
        grid=(b,),
        in_specs=[
            pl.BlockSpec((1, n, pdim), lambda bi: (bi, 0, 0)),   # patches
            resident((pdim, dim)),                               # patch_w
            resident((1, dim)),                                  # patch_b
            resident((n, dim)),                                  # pos
            resident((depth, 1, dim)),                           # ln1_g
            resident((depth, 1, dim)),                           # ln1_b
            resident((depth, dim, 3 * dim)),                     # qkv_w
            resident((depth, 1, 3 * dim)),                       # qkv_b
            resident((depth, dim, dim)),                         # out_w
            resident((depth, 1, dim)),                           # out_b
            resident((depth, 1, dim)),                           # ln2_g
            resident((depth, 1, dim)),                           # ln2_b
            resident((depth, dim, mlp_dim)),                     # mlp1_w
            resident((depth, 1, mlp_dim)),                       # mlp1_b
            resident((depth, mlp_dim, dim)),                     # mlp2_w
            resident((depth, 1, dim)),                           # mlp2_b
            resident((1, dim)),                                  # lnf_g
            resident((1, dim)),                                  # lnf_b
            resident((dim, dim)),                                # subj_w
            resident((1, dim)),                                  # subj_b
            resident((dim, dim)),                                # obj_w
            resident((1, dim)),                                  # obj_b
        ],
        out_specs=(pl.BlockSpec((1, n, dim), lambda bi: (bi, 0, 0)),
                   pl.BlockSpec((1, n, n_pad), lambda bi: (bi, 0, 0))),
        scratch_shapes=[pltpu.VMEM((n, dim), jnp.float32)],
        compiler_params=pltpu.CompilerParams(
            dimension_semantics=("parallel",)),
    )(patches, params["patch_w"], params["patch_b"], params["pos"],
      params["ln1_g"], params["ln1_b"], params["qkv_w"], params["qkv_b"],
      params["out_w"], params["out_b"], params["ln2_g"], params["ln2_b"],
      params["mlp1_w"], params["mlp1_b"], params["mlp2_w"], params["mlp2_b"],
      params["lnf_g"], params["lnf_b"],
      params["subj_w"], params["subj_b"].reshape(1, dim),
      params["obj_w"], params["obj_b"].reshape(1, dim))
    return q, scores_p[:, :, :n]


# ----------------------------------------------------------------------------
# Relationship attention indexing (data-dependent top-k / gather in plain JAX)
# ----------------------------------------------------------------------------
# TODO(synk): torch.topk / torch.where tie-breaking order may differ from
# lax.top_k + sort when scores tie exactly.

def relationship_attention(q, scores, top_k_instances=10, top_k_relationships=5):
    b, n, d = q.shape
    K, R = top_k_instances, top_k_relationships
    diag = jnp.diagonal(scores, axis1=-2, axis2=-1)                    # (b, n)
    _, inst_idx = lax.top_k(diag, K)
    inst_idx = jnp.sort(inst_idx, axis=-1)                             # (b, K)

    rows = jnp.take_along_axis(scores, inst_idx[:, :, None], axis=1)   # (b,K,n)
    col_gather = jnp.broadcast_to(inst_idx[:, None, :], (b, K, K))
    rel_scores = jnp.take_along_axis(rows, col_gather, axis=2)         # (b,K,K)

    _, col_idx = lax.top_k(rel_scores, R)                              # (b,K,R)
    col_idx = jnp.sort(col_idx, axis=-1)                # torch.where() ordering
    row_idx = jnp.broadcast_to(jnp.arange(K)[None, :, None], (b, K, R))
    row_flat = row_idx.reshape(b, K * R)
    col_flat = col_idx.reshape(b, K * R)

    subj_tok = jnp.take_along_axis(inst_idx, row_flat, axis=-1)        # (b,K*R)
    obj_tok = jnp.take_along_axis(inst_idx, col_flat, axis=-1)
    batch_ids = jnp.broadcast_to(jnp.arange(b)[:, None], (b, K * R))
    soi = jnp.stack([batch_ids, subj_tok, obj_tok], axis=-1)

    subject_embeds = jnp.take_along_axis(q, subj_tok[:, :, None], axis=1)
    object_embeds = jnp.take_along_axis(q, obj_tok[:, :, None], axis=1)
    rel = subject_embeds + object_embeds
    # F.layer_norm with no affine params (matches the reference).
    mean = jnp.mean(rel, axis=-1, keepdims=True)
    var = jnp.mean(jnp.square(rel - mean), axis=-1, keepdims=True)
    rel = (rel - mean) / jnp.sqrt(var + 1e-5)
    return soi, rel


# ----------------------------------------------------------------------------
# Parameters (deterministic synthetic init) — per-layer weights stacked along
# a leading depth axis so the kernel can index them per unrolled layer.
# ----------------------------------------------------------------------------

def init_params(key, *, dim, image_size, patch_size, depth, n_heads, mlp_dim,
                channels=3):
    n_patches = (image_size // patch_size) ** 2
    patch_dim = channels * patch_size * patch_size
    keys = iter(jax.random.split(key, 8 + 4 * depth))

    def lin(k, fan_in, fan_out):
        kw, kb = jax.random.split(k)
        return (jax.random.normal(kw, (fan_in, fan_out), jnp.float32) * 0.02,
                jax.random.normal(kb, (fan_out,), jnp.float32) * 0.02)

    p = {}
    pw, pb = lin(next(keys), patch_dim, dim)
    p["patch_w"], p["patch_b"] = pw, pb.reshape(1, dim)
    p["pos"] = jax.random.normal(next(keys), (n_patches, dim), jnp.float32) * 0.02

    qkv_w, qkv_b, out_w, out_b = [], [], [], []
    m1_w, m1_b, m2_w, m2_b = [], [], [], []
    for _ in range(depth):
        w, bb = lin(next(keys), dim, 3 * dim); qkv_w.append(w); qkv_b.append(bb)
        w, bb = lin(next(keys), dim, dim);     out_w.append(w); out_b.append(bb)
        w, bb = lin(next(keys), dim, mlp_dim); m1_w.append(w);  m1_b.append(bb)
        w, bb = lin(next(keys), mlp_dim, dim); m2_w.append(w);  m2_b.append(bb)

    p["qkv_w"] = jnp.stack(qkv_w)                       # (depth, dim, 3*dim)
    p["qkv_b"] = jnp.stack(qkv_b)[:, None, :]           # (depth, 1, 3*dim)
    p["out_w"] = jnp.stack(out_w)
    p["out_b"] = jnp.stack(out_b)[:, None, :]
    p["mlp1_w"] = jnp.stack(m1_w)
    p["mlp1_b"] = jnp.stack(m1_b)[:, None, :]
    p["mlp2_w"] = jnp.stack(m2_w)
    p["mlp2_b"] = jnp.stack(m2_b)[:, None, :]
    p["ln1_g"] = jnp.ones((depth, 1, dim), jnp.float32)
    p["ln1_b"] = jnp.zeros((depth, 1, dim), jnp.float32)
    p["ln2_g"] = jnp.ones((depth, 1, dim), jnp.float32)
    p["ln2_b"] = jnp.zeros((depth, 1, dim), jnp.float32)
    p["lnf_g"] = jnp.ones((1, dim), jnp.float32)
    p["lnf_b"] = jnp.zeros((1, dim), jnp.float32)

    sw, sb = lin(next(keys), dim, dim); p["subj_w"], p["subj_b"] = sw, sb
    ow, ob = lin(next(keys), dim, dim); p["obj_w"], p["obj_b"] = ow, ob
    cw, cb = lin(next(keys), dim, 100); p["cls_w"], p["cls_b"] = cw, cb
    bw, bb = lin(next(keys), dim, 4);   p["bbox_w"], p["bbox_b"] = bw, bb
    return p


# ----------------------------------------------------------------------------
# Full forward
# ----------------------------------------------------------------------------
# TODO(synk): the reference `ViT` class is not provided; a standard pre-LN ViT
# encoder returning all patch tokens is used.

def scene_graph_vit_forward(params, x, annotations, cfg):
    del annotations  # unused by the reference forward as well
    mm_dtype = jnp.bfloat16 if cfg.get("use_bf16", False) else jnp.float32
    q, scores = encoder_rel_forward(
        params, x, dim=cfg["dim"], patch_size=cfg["patch_size"],
        n_heads=cfg["n_heads"], mlp_dim=cfg["mlp_dim"], depth=cfg["depth"],
        mm_dtype=mm_dtype)
    soi, rel_embeds = relationship_attention(
        q, scores, top_k_instances=cfg["top_k_instances"],
        top_k_relationships=cfg["top_k_relationships"])
    return soi, rel_embeds


# ----------------------------------------------------------------------------
# Main
# ----------------------------------------------------------------------------

if __name__ == "__main__":
    cfg = dict(dim=128, image_size=64, patch_size=16, depth=2, n_heads=4,
               mlp_dim=256, channels=3, top_k_instances=10,
               top_k_relationships=5, use_bf16=False)

    params = init_params(jax.random.PRNGKey(42), dim=cfg["dim"],
                         image_size=cfg["image_size"],
                         patch_size=cfg["patch_size"], depth=cfg["depth"],
                         n_heads=cfg["n_heads"], mlp_dim=cfg["mlp_dim"],
                         channels=cfg["channels"])

    key = jax.random.PRNGKey(0)
    x = jax.random.normal(key, (2, cfg["channels"], cfg["image_size"],
                                cfg["image_size"]), jnp.float32)

    annotations = {"gt_classes": [[1, 2, 3], [4, 5, 6]],
                   "gt_boxes": [[[1, 2, 3, 4], [5, 6, 7, 8]],
                                [[13, 14, 15, 16], [21, 22, 23, 24]]]}

    fwd = jax.jit(functools.partial(scene_graph_vit_forward, cfg=cfg))
    soi, relationship_embeds = fwd(params, x, None)
    relationship_embeds = jax.block_until_ready(relationship_embeds)

    # Side branch of the reference forward: bbox / class heads on self-pairs.
    # Dynamic-size torch.where selection + 4/100-wide heads stay in host
    # JAX/NumPy (a pallas_call here would be pure dispatch overhead).
    mask = np.asarray(soi[:, :, 1] == soi[:, :, 2])
    bidx, pidx = np.nonzero(mask)
    if bidx.size > 0:
        obj_rel = relationship_embeds[jnp.asarray(bidx), jnp.asarray(pidx)]
        bbox = jnp.maximum(obj_rel @ params["bbox_w"] + params["bbox_b"], 0.0)
        cls_scores = obj_rel @ params["cls_w"] + params["cls_b"]
        jax.block_until_ready((bbox, cls_scores))

    assert relationship_embeds.shape == (2, cfg["top_k_instances"] *
                                         cfg["top_k_relationships"], cfg["dim"])
    print("KERNEL_OK")
</pallas_src>

<mosaic_0001>
module attributes {stable_mosaic.version = 11 : i64} {
  func.func @_sg_vit_kernel(%arg0: i32, %arg1: memref<1x16x768xf32, #tpu.memory_space<vmem>>, %arg2: memref<768x128xf32, #tpu.memory_space<vmem>>, %arg3: memref<1x128xf32, #tpu.memory_space<vmem>>, %arg4: memref<16x128xf32, #tpu.memory_space<vmem>>, %arg5: memref<2x1x128xf32, #tpu.memory_space<vmem>>, %arg6: memref<2x1x128xf32, #tpu.memory_space<vmem>>, %arg7: memref<2x128x384xf32, #tpu.memory_space<vmem>>, %arg8: memref<2x1x384xf32, #tpu.memory_space<vmem>>, %arg9: memref<2x128x128xf32, #tpu.memory_space<vmem>>, %arg10: memref<2x1x128xf32, #tpu.memory_space<vmem>>, %arg11: memref<2x1x128xf32, #tpu.memory_space<vmem>>, %arg12: memref<2x1x128xf32, #tpu.memory_space<vmem>>, %arg13: memref<2x128x256xf32, #tpu.memory_space<vmem>>, %arg14: memref<2x1x256xf32, #tpu.memory_space<vmem>>, %arg15: memref<2x256x128xf32, #tpu.memory_space<vmem>>, %arg16: memref<2x1x128xf32, #tpu.memory_space<vmem>>, %arg17: memref<1x128xf32, #tpu.memory_space<vmem>>, %arg18: memref<1x128xf32, #tpu.memory_space<vmem>>, %arg19: memref<128x128xf32, #tpu.memory_space<vmem>>, %arg20: memref<1x128xf32, #tpu.memory_space<vmem>>, %arg21: memref<128x128xf32, #tpu.memory_space<vmem>>, %arg22: memref<1x128xf32, #tpu.memory_space<vmem>>, %arg23: memref<1x16x128xf32, #tpu.memory_space<vmem>>, %arg24: memref<1x16x128xf32, #tpu.memory_space<vmem>>, %arg25: memref<16x128xf32, #tpu.memory_space<vmem>>) attributes {dimension_semantics = [#tpu.dimension_semantics<parallel>], iteration_bounds = array<i64: 2>, scalar_prefetch = 0 : i64, scratch_operands = 1 : i64, tpu.core_type = #tpu.core_type<tc>, window_params = [{transform_indices = @transform_0, window_bounds = array<i64: 1, 16, 768>}, {pipeline_mode = #tpu.pipeline_mode<synchronous>, transform_indices = @transform_1, window_bounds = array<i64: 768, 128>}, {pipeline_mode = #tpu.pipeline_mode<synchronous>, transform_indices = @transform_2, window_bounds = array<i64: 1, 128>}, {pipeline_mode = #tpu.pipeline_mode<synchronous>, transform_indices = @transform_3, window_bounds = array<i64: 16, 128>}, {pipeline_mode = #tpu.pipeline_mode<synchronous>, transform_indices = @transform_4, window_bounds = array<i64: 2, 1, 128>}, {pipeline_mode = #tpu.pipeline_mode<synchronous>, transform_indices = @transform_5, window_bounds = array<i64: 2, 1, 128>}, {pipeline_mode = #tpu.pipeline_mode<synchronous>, transform_indices = @transform_6, window_bounds = array<i64: 2, 128, 384>}, {pipeline_mode = #tpu.pipeline_mode<synchronous>, transform_indices = @transform_7, window_bounds = array<i64: 2, 1, 384>}, {pipeline_mode = #tpu.pipeline_mode<synchronous>, transform_indices = @transform_8, window_bounds = array<i64: 2, 128, 128>}, {pipeline_mode = #tpu.pipeline_mode<synchronous>, transform_indices = @transform_9, window_bounds = array<i64: 2, 1, 128>}, {pipeline_mode = #tpu.pipeline_mode<synchronous>, transform_indices = @transform_10, window_bounds = array<i64: 2, 1, 128>}, {pipeline_mode = #tpu.pipeline_mode<synchronous>, transform_indices = @transform_11, window_bounds = array<i64: 2, 1, 128>}, {pipeline_mode = #tpu.pipeline_mode<synchronous>, transform_indices = @transform_12, window_bounds = array<i64: 2, 128, 256>}, {pipeline_mode = #tpu.pipeline_mode<synchronous>, transform_indices = @transform_13, window_bounds = array<i64: 2, 1, 256>}, {pipeline_mode = #tpu.pipeline_mode<synchronous>, transform_indices = @transform_14, window_bounds = array<i64: 2, 256, 128>}, {pipeline_mode = #tpu.pipeline_mode<synchronous>, transform_indices = @transform_15, window_bounds = array<i64: 2, 1, 128>}, {pipeline_mode = #tpu.pipeline_mode<synchronous>, transform_indices = @transform_16, window_bounds = array<i64: 1, 128>}, {pipeline_mode = #tpu.pipeline_mode<synchronous>, transform_indices = @transform_17, window_bounds = array<i64: 1, 128>}, {pipeline_mode = #tpu.pipeline_mode<synchronous>, transform_indices = @transform_18, window_bounds = array<i64: 128, 128>}, {pipeline_mode = #tpu.pipeline_mode<synchronous>, transform_indices = @transform_19, window_bounds = array<i64: 1, 128>}, {pipeline_mode = #tpu.pipeline_mode<synchronous>, transform_indices = @transform_20, window_bounds = array<i64: 128, 128>}, {pipeline_mode = #tpu.pipeline_mode<synchronous>, transform_indices = @transform_21, window_bounds = array<i64: 1, 128>}, {transform_indices = @transform_22, window_bounds = array<i64: 1, 16, 128>}, {transform_indices = @transform_23, window_bounds = array<i64: 1, 16, 128>}]} {
    %c0 = arith.constant 0 : index
    %c0_0 = arith.constant 0 : index
    %c0_1 = arith.constant 0 : index
    %0 = vector.load %arg1[%c0, %c0_0, %c0_1] : memref<1x16x768xf32, #tpu.memory_space<vmem>>, vector<1x16x768xf32>
    %1 = vector.shape_cast %0 : vector<1x16x768xf32> to vector<16x768xf32>
    %c0_2 = arith.constant 0 : index
    %c0_3 = arith.constant 0 : index
    %2 = vector.load %arg2[%c0_2, %c0_3] : memref<768x128xf32, #tpu.memory_space<vmem>>, vector<768x128xf32>
    %cst = arith.constant dense<0.000000e+00> : vector<16x128xf32>
    %3 = tpu.matmul %1, %2, %cst {dimension_numbers = #tpu.dot_dimension_numbers<[1], [0], [0], [1], [0, 0, 1, 1], [], []>} : vector<16x768xf32>, vector<768x128xf32>, vector<16x128xf32> -> vector<16x128xf32>
    %c0_4 = arith.constant 0 : index
    %c0_5 = arith.constant 0 : index
    %4 = vector.load %arg3[%c0_4, %c0_5] : memref<1x128xf32, #tpu.memory_space<vmem>>, vector<1x128xf32>
    %5 = vector.broadcast %4 : vector<1x128xf32> to vector<16x128xf32>
    %6 = arith.addf %3, %5 : vector<16x128xf32>
    %c0_6 = arith.constant 0 : index
    %c0_7 = arith.constant 0 : index
    %7 = vector.load %arg4[%c0_6, %c0_7] : memref<16x128xf32, #tpu.memory_space<vmem>>, vector<16x128xf32>
    %8 = arith.addf %6, %7 : vector<16x128xf32>
    %c0_8 = arith.constant 0 : index
    %c0_9 = arith.constant 0 : index
    %c0_10 = arith.constant 0 : index
    %9 = vector.load %arg5[%c0_8, %c0_9, %c0_10] : memref<2x1x128xf32, #tpu.memory_space<vmem>>, vector<1x1x128xf32>
    %10 = vector.shape_cast %9 : vector<1x1x128xf32> to vector<1x128xf32>
    %c0_11 = arith.constant 0 : index
    %c0_12 = arith.constant 0 : index
    %c0_13 = arith.constant 0 : index
    %11 = vector.load %arg6[%c0_11, %c0_12, %c0_13] : memref<2x1x128xf32, #tpu.memory_space<vmem>>, vector<1x1x128xf32>
    %12 = vector.shape_cast %11 : vector<1x1x128xf32> to vector<1x128xf32>
    %cst_14 = arith.constant dense<0.000000e+00> : vector<16xf32>
    %13 = vector.multi_reduction <add>, %8, %cst_14 [1] : vector<16x128xf32> to vector<16xf32>
    %14 = vector.shape_cast %13 : vector<16xf32> to vector<16x1xf32>
    %cst_15 = arith.constant 1.280000e+02 : f32
    %15 = vector.broadcast %cst_15 : f32 to vector<16x1xf32>
    %16 = arith.divf %14, %15 : vector<16x1xf32>
    %17 = vector.broadcast %16 : vector<16x1xf32> to vector<16x128xf32>
    %18 = arith.subf %8, %17 : vector<16x128xf32>
    %19 = arith.mulf %18, %18 : vector<16x128xf32>
    %cst_16 = arith.constant dense<0.000000e+00> : vector<16xf32>
    %20 = vector.multi_reduction <add>, %19, %cst_16 [1] : vector<16x128xf32> to vector<16xf32>
    %21 = vector.shape_cast %20 : vector<16xf32> to vector<16x1xf32>
    %cst_17 = arith.constant 1.280000e+02 : f32
    %22 = vector.broadcast %cst_17 : f32 to vector<16x1xf32>
    %23 = arith.divf %21, %22 : vector<16x1xf32>
    %24 = vector.broadcast %16 : vector<16x1xf32> to vector<16x128xf32>
    %25 = arith.subf %8, %24 : vector<16x128xf32>
    %cst_18 = arith.constant 9.99999974E-6 : f32
    %26 = vector.broadcast %cst_18 : f32 to vector<16x1xf32>
    %27 = arith.addf %23, %26 : vector<16x1xf32>
    %28 = math.rsqrt %27 : vector<16x1xf32>
    %29 = vector.broadcast %28 : vector<16x1xf32> to vector<16x128xf32>
    %30 = arith.mulf %25, %29 : vector<16x128xf32>
    %31 = vector.broadcast %10 : vector<1x128xf32> to vector<16x128xf32>
    %32 = arith.mulf %30, %31 : vector<16x128xf32>
    %33 = vector.broadcast %12 : vector<1x128xf32> to vector<16x128xf32>
    %34 = arith.addf %32, %33 : vector<16x128xf32>
    %c0_19 = arith.constant 0 : index
    %c0_20 = arith.constant 0 : index
    %c0_21 = arith.constant 0 : index
    %35 = vector.load %arg7[%c0_19, %c0_20, %c0_21] : memref<2x128x384xf32, #tpu.memory_space<vmem>>, vector<1x128x384xf32>
    %36 = vector.shape_cast %35 : vector<1x128x384xf32> to vector<128x384xf32>
    %cst_22 = arith.constant dense<0.000000e+00> : vector<16x384xf32>
    %37 = tpu.matmul %34, %36, %cst_22 {dimension_numbers = #tpu.dot_dimension_numbers<[1], [0], [0], [1], [0, 0, 1, 1], [], []>} : vector<16x128xf32>, vector<128x384xf32>, vector<16x384xf32> -> vector<16x384xf32>
    %c0_23 = arith.constant 0 : index
    %c0_24 = arith.constant 0 : index
    %c0_25 = arith.constant 0 : index
    %38 = vector.load %arg8[%c0_23, %c0_24, %c0_25] : memref<2x1x384xf32, #tpu.memory_space<vmem>>, vector<1x1x384xf32>
    %39 = vector.shape_cast %38 : vector<1x1x384xf32> to vector<1x384xf32>
    %40 = vector.broadcast %39 : vector<1x384xf32> to vector<16x384xf32>
    %41 = arith.addf %37, %40 : vector<16x384xf32>
    %42 = vector.extract_strided_slice %41 {offsets = [0, 0], sizes = [16, 128], strides = [1, 1]} : vector<16x384xf32> to vector<16x128xf32>
    %43 = vector.extract_strided_slice %41 {offsets = [0, 128], sizes = [16, 128], strides = [1, 1]} : vector<16x384xf32> to vector<16x128xf32>
    %44 = vector.extract_strided_slice %41 {offsets = [0, 256], sizes = [16, 128], strides = [1, 1]} : vector<16x384xf32> to vector<16x128xf32>
    %45 = vector.extract_strided_slice %42 {offsets = [0, 0], sizes = [16, 32], strides = [1, 1]} : vector<16x128xf32> to vector<16x32xf32>
    %cst_26 = arith.constant 0.176776692 : f32
    %46 = vector.broadcast %cst_26 : f32 to vector<16x32xf32>
    %47 = arith.mulf %45, %46 : vector<16x32xf32>
    %48 = vector.extract_strided_slice %43 {offsets = [0, 0], sizes = [16, 32], strides = [1, 1]} : vector<16x128xf32> to vector<16x32xf32>
    %cst_27 = arith.constant dense<0.000000e+00> : vector<16x16xf32>
    %49 = tpu.matmul %47, %48, %cst_27 {dimension_numbers = #tpu.dot_dimension_numbers<[1], [1], [0], [0], [0, 0, 1, 0], [], []>} : vector<16x32xf32>, vector<16x32xf32>, vector<16x16xf32> -> vector<16x16xf32>
    %cst_28 = arith.constant dense<0xFF800000> : vector<16xf32>
    %50 = vector.multi_reduction <maximumf>, %49, %cst_28 [1] : vector<16x16xf32> to vector<16xf32>
    %51 = vector.shape_cast %50 : vector<16xf32> to vector<16x1xf32>
    %52 = vector.broadcast %51 : vector<16x1xf32> to vector<16x16xf32>
    %53 = arith.subf %49, %52 : vector<16x16xf32>
    %54 = math.exp %53 : vector<16x16xf32>
    %cst_29 = arith.constant dense<0.000000e+00> : vector<16xf32>
    %55 = vector.multi_reduction <add>, %54, %cst_29 [1] : vector<16x16xf32> to vector<16xf32>
    %56 = vector.shape_cast %55 : vector<16xf32> to vector<16x1xf32>
    %57 = vector.broadcast %56 : vector<16x1xf32> to vector<16x16xf32>
    %58 = arith.divf %54, %57 : vector<16x16xf32>
    %59 = vector.extract_strided_slice %44 {offsets = [0, 0], sizes = [16, 32], strides = [1, 1]} : vector<16x128xf32> to vector<16x32xf32>
    %cst_30 = arith.constant dense<0.000000e+00> : vector<16x32xf32>
    %60 = tpu.matmul %58, %59, %cst_30 {dimension_numbers = #tpu.dot_dimension_numbers<[1], [0], [0], [1], [0, 0, 1, 1], [], []>} : vector<16x16xf32>, vector<16x32xf32>, vector<16x32xf32> -> vector<16x32xf32>
    %c0_31 = arith.constant 0 : index
    %c0_32 = arith.constant 0 : index
    %61 = vector.load %arg25[%c0_31, %c0_32] : memref<16x128xf32, #tpu.memory_space<vmem>>, vector<16x32xf32>
    tpu.vector_store %arg25[%c0_31, %c0_32], %60 {strides = array<i32>} : memref<16x128xf32, #tpu.memory_space<vmem>>, vector<16x32xf32>,
    %62 = vector.extract_strided_slice %42 {offsets = [0, 32], sizes = [16, 32], strides = [1, 1]} : vector<16x128xf32> to vector<16x32xf32>
    %cst_33 = arith.constant 0.176776692 : f32
    %63 = vector.broadcast %cst_33 : f32 to vector<16x32xf32>
    %64 = arith.mulf %62, %63 : vector<16x32xf32>
    %65 = vector.extract_strided_slice %43 {offsets = [0, 32], sizes = [16, 32], strides = [1, 1]} : vector<16x128xf32> to vector<16x32xf32>
    %cst_34 = arith.constant dense<0.000000e+00> : vector<16x16xf32>
    %66 = tpu.matmul %64, %65, %cst_34 {dimension_numbers = #tpu.dot_dimension_numbers<[1], [1], [0], [0], [0, 0, 1, 0], [], []>} : vector<16x32xf32>, vector<16x32xf32>, vector<16x16xf32> -> vector<16x16xf32>
    %cst_35 = arith.constant dense<0xFF800000> : vector<16xf32>
    %67 = vector.multi_reduction <maximumf>, %66, %cst_35 [1] : vector<16x16xf32> to vector<16xf32>
    %68 = vector.shape_cast %67 : vector<16xf32> to vector<16x1xf32>
    %69 = vector.broadcast %68 : vector<16x1xf32> to vector<16x16xf32>
    %70 = arith.subf %66, %69 : vector<16x16xf32>
    %71 = math.exp %70 : vector<16x16xf32>
    %cst_36 = arith.constant dense<0.000000e+00> : vector<16xf32>
    %72 = vector.multi_reduction <add>, %71, %cst_36 [1] : vector<16x16xf32> to vector<16xf32>
    %73 = vector.shape_cast %72 : vector<16xf32> to vector<16x1xf32>
    %74 = vector.broadcast %73 : vector<16x1xf32> to vector<16x16xf32>
    %75 = arith.divf %71, %74 : vector<16x16xf32>
    %76 = vector.extract_strided_slice %44 {offsets = [0, 32], sizes = [16, 32], strides = [1, 1]} : vector<16x128xf32> to vector<16x32xf32>
    %cst_37 = arith.constant dense<0.000000e+00> : vector<16x32xf32>
    %77 = tpu.matmul %75, %76, %cst_37 {dimension_numbers = #tpu.dot_dimension_numbers<[1], [0], [0], [1], [0, 0, 1, 1], [], []>} : vector<16x16xf32>, vector<16x32xf32>, vector<16x32xf32> -> vector<16x32xf32>
    %c0_38 = arith.constant 0 : index
    %c32 = arith.constant 32 : index
    %78 = vector.load %arg25[%c0_38, %c32] : memref<16x128xf32, #tpu.memory_space<vmem>>, vector<16x32xf32>
    tpu.vector_store %arg25[%c0_38, %c32], %77 {strides = array<i32>} : memref<16x128xf32, #tpu.memory_space<vmem>>, vector<16x32xf32>,
    %79 = vector.extract_strided_slice %42 {offsets = [0, 64], sizes = [16, 32], strides = [1, 1]} : vector<16x128xf32> to vector<16x32xf32>
    %cst_39 = arith.constant 0.176776692 : f32
    %80 = vector.broadcast %cst_39 : f32 to vector<16x32xf32>
    %81 = arith.mulf %79, %80 : vector<16x32xf32>
    %82 = vector.extract_strided_slice %43 {offsets = [0, 64], sizes = [16, 32], strides = [1, 1]} : vector<16x128xf32> to vector<16x32xf32>
    %cst_40 = arith.constant dense<0.000000e+00> : vector<16x16xf32>
    %83 = tpu.matmul %81, %82, %cst_40 {dimension_numbers = #tpu.dot_dimension_numbers<[1], [1], [0], [0], [0, 0, 1, 0], [], []>} : vector<16x32xf32>, vector<16x32xf32>, vector<16x16xf32> -> vector<16x16xf32>
    %cst_41 = arith.constant dense<0xFF800000> : vector<16xf32>
    %84 = vector.multi_reduction <maximumf>, %83, %cst_41 [1] : vector<16x16xf32> to vector<16xf32>
    %85 = vector.shape_cast %84 : vector<16xf32> to vector<16x1xf32>
    %86 = vector.broadcast %85 : vector<16x1xf32> to vector<16x16xf32>
    %87 = arith.subf %83, %86 : vector<16x16xf32>
    %88 = math.exp %87 : vector<16x16xf32>
    %cst_42 = arith.constant dense<0.000000e+00> : vector<16xf32>
    %89 = vector.multi_reduction <add>, %88, %cst_42 [1] : vector<16x16xf32> to vector<16xf32>
    %90 = vector.shape_cast %89 : vector<16xf32> to vector<16x1xf32>
    %91 = vector.broadcast %90 : vector<16x1xf32> to vector<16x16xf32>
    %92 = arith.divf %88, %91 : vector<16x16xf32>
    %93 = vector.extract_strided_slice %44 {offsets = [0, 64], sizes = [16, 32], strides = [1, 1]} : vector<16x128xf32> to vector<16x32xf32>
    %cst_43 = arith.constant dense<0.000000e+00> : vector<16x32xf32>
    %94 = tpu.matmul %92, %93, %cst_43 {dimension_numbers = #tpu.dot_dimension_numbers<[1], [0], [0], [1], [0, 0, 1, 1], [], []>} : vector<16x16xf32>, vector<16x32xf32>, vector<16x32xf32> -> vector<16x32xf32>
    %c0_44 = arith.constant 0 : index
    %c64 = arith.constant 64 : index
    %95 = vector.load %arg25[%c0_44, %c64] : memref<16x128xf32, #tpu.memory_space<vmem>>, vector<16x32xf32>
    tpu.vector_store %arg25[%c0_44, %c64], %94 {strides = array<i32>} : memref<16x128xf32, #tpu.memory_space<vmem>>, vector<16x32xf32>,
    %96 = vector.extract_strided_slice %42 {offsets = [0, 96], sizes = [16, 32], strides = [1, 1]} : vector<16x128xf32> to vector<16x32xf32>
    %cst_45 = arith.constant 0.176776692 : f32
    %97 = vector.broadcast %cst_45 : f32 to vector<16x32xf32>
    %98 = arith.mulf %96, %97 : vector<16x32xf32>
    %99 = vector.extract_strided_slice %43 {offsets = [0, 96], sizes = [16, 32], strides = [1, 1]} : vector<16x128xf32> to vector<16x32xf32>
    %cst_46 = arith.constant dense<0.000000e+00> : vector<16x16xf32>
    %100 = tpu.matmul %98, %99, %cst_46 {dimension_numbers = #tpu.dot_dimension_numbers<[1], [1], [0], [0], [0, 0, 1, 0], [], []>} : vector<16x32xf32>, vector<16x32xf32>, vector<16x16xf32> -> vector<16x16xf32>
    %cst_47 = arith.constant dense<0xFF800000> : vector<16xf32>
    %101 = vector.multi_reduction <maximumf>, %100, %cst_47 [1] : vector<16x16xf32> to vector<16xf32>
    %102 = vector.shape_cast %101 : vector<16xf32> to vector<16x1xf32>
    %103 = vector.broadcast %102 : vector<16x1xf32> to vector<16x16xf32>
    %104 = arith.subf %100, %103 : vector<16x16xf32>
    %105 = math.exp %104 : vector<16x16xf32>
    %cst_48 = arith.constant dense<0.000000e+00> : vector<16xf32>
    %106 = vector.multi_reduction <add>, %105, %cst_48 [1] : vector<16x16xf32> to vector<16xf32>
    %107 = vector.shape_cast %106 : vector<16xf32> to vector<16x1xf32>
    %108 = vector.broadcast %107 : vector<16x1xf32> to vector<16x16xf32>
    %109 = arith.divf %105, %108 : vector<16x16xf32>
    %110 = vector.extract_strided_slice %44 {offsets = [0, 96], sizes = [16, 32], strides = [1, 1]} : vector<16x128xf32> to vector<16x32xf32>
    %cst_49 = arith.constant dense<0.000000e+00> : vector<16x32xf32>
    %111 = tpu.matmul %109, %110, %cst_49 {dimension_numbers = #tpu.dot_dimension_numbers<[1], [0], [0], [1], [0, 0, 1, 1], [], []>} : vector<16x16xf32>, vector<16x32xf32>, vector<16x32xf32> -> vector<16x32xf32>
    %c0_50 = arith.constant 0 : index
    %c96 = arith.constant 96 : index
    %112 = vector.load %arg25[%c0_50, %c96] : memref<16x128xf32, #tpu.memory_space<vmem>>, vector<16x32xf32>
    tpu.vector_store %arg25[%c0_50, %c96], %111 {strides = array<i32>} : memref<16x128xf32, #tpu.memory_space<vmem>>, vector<16x32xf32>,
    %c0_51 = arith.constant 0 : index
    %c0_52 = arith.constant 0 : index
    %113 = vector.load %arg25[%c0_51, %c0_52] : memref<16x128xf32, #tpu.memory_space<vmem>>, vector<16x128xf32>
    %c0_53 = arith.constant 0 : index
    %c0_54 = arith.constant 0 : index
    %c0_55 = arith.constant 0 : index
    %114 = vector.load %arg9[%c0_53, %c0_54, %c0_55] : memref<2x128x128xf32, #tpu.memory_space<vmem>>, vector<1x128x128xf32>
    %115 = vector.shape_cast %114 : vector<1x128x128xf32> to vector<128x128xf32>
    %cst_56 = arith.constant dense<0.000000e+00> : vector<16x128xf32>
    %116 = tpu.matmul %113, %115, %cst_56 {dimension_numbers = #tpu.dot_dimension_numbers<[1], [0], [0], [1], [0, 0, 1, 1], [], []>} : vector<16x128xf32>, vector<128x128xf32>, vector<16x128xf32> -> vector<16x128xf32>
    %117 = arith.addf %8, %116 : vector<16x128xf32>
    %c0_57 = arith.constant 0 : index
    %c0_58 = arith.constant 0 : index
    %c0_59 = arith.constant 0 : index
    %118 = vector.load %arg10[%c0_57, %c0_58, %c0_59] : memref<2x1x128xf32, #tpu.memory_space<vmem>>, vector<1x1x128xf32>
    %119 = vector.shape_cast %118 : vector<1x1x128xf32> to vector<1x128xf32>
    %120 = vector.broadcast %119 : vector<1x128xf32> to vector<16x128xf32>
    %121 = arith.addf %117, %120 : vector<16x128xf32>
    %c0_60 = arith.constant 0 : index
    %c0_61 = arith.constant 0 : index
    %c0_62 = arith.constant 0 : index
    %122 = vector.load %arg11[%c0_60, %c0_61, %c0_62] : memref<2x1x128xf32, #tpu.memory_space<vmem>>, vector<1x1x128xf32>
    %123 = vector.shape_cast %122 : vector<1x1x128xf32> to vector<1x128xf32>
    %c0_63 = arith.constant 0 : index
    %c0_64 = arith.constant 0 : index
    %c0_65 = arith.constant 0 : index
    %124 = vector.load %arg12[%c0_63, %c0_64, %c0_65] : memref<2x1x128xf32, #tpu.memory_space<vmem>>, vector<1x1x128xf32>
    %125 = vector.shape_cast %124 : vector<1x1x128xf32> to vector<1x128xf32>
    %cst_66 = arith.constant dense<0.000000e+00> : vector<16xf32>
    %126 = vector.multi_reduction <add>, %121, %cst_66 [1] : vector<16x128xf32> to vector<16xf32>
    %127 = vector.shape_cast %126 : vector<16xf32> to vector<16x1xf32>
    %cst_67 = arith.constant 1.280000e+02 : f32
    %128 = vector.broadcast %cst_67 : f32 to vector<16x1xf32>
    %129 = arith.divf %127, %128 : vector<16x1xf32>
    %130 = vector.broadcast %129 : vector<16x1xf32> to vector<16x128xf32>
    %131 = arith.subf %121, %130 : vector<16x128xf32>
    %132 = arith.mulf %131, %131 : vector<16x128xf32>
    %cst_68 = arith.constant dense<0.000000e+00> : vector<16xf32>
    %133 = vector.multi_reduction <add>, %132, %cst_68 [1] : vector<16x128xf32> to vector<16xf32>
    %134 = vector.shape_cast %133 : vector<16xf32> to vector<16x1xf32>
    %cst_69 = arith.constant 1.280000e+02 : f32
    %135 = vector.broadcast %cst_69 : f32 to vector<16x1xf32>
    %136 = arith.divf %134, %135 : vector<16x1xf32>
    %137 = vector.broadcast %129 : vector<16x1xf32> to vector<16x128xf32>
    %138 = arith.subf %121, %137 : vector<16x128xf32>
    %cst_70 = arith.constant 9.99999974E-6 : f32
    %139 = vector.broadcast %cst_70 : f32 to vector<16x1xf32>
    %140 = arith.addf %136, %139 : vector<16x1xf32>
    %141 = math.rsqrt %140 : vector<16x1xf32>
    %142 = vector.broadcast %141 : vector<16x1xf32> to vector<16x128xf32>
    %143 = arith.mulf %138, %142 : vector<16x128xf32>
    %144 = vector.broadcast %123 : vector<1x128xf32> to vector<16x128xf32>
    %145 = arith.mulf %143, %144 : vector<16x128xf32>
    %146 = vector.broadcast %125 : vector<1x128xf32> to vector<16x128xf32>
    %147 = arith.addf %145, %146 : vector<16x128xf32>
    %c0_71 = arith.constant 0 : index
    %c0_72 = arith.constant 0 : index
    %c0_73 = arith.constant 0 : index
    %148 = vector.load %arg13[%c0_71, %c0_72, %c0_73] : memref<2x128x256xf32, #tpu.memory_space<vmem>>, vector<1x128x256xf32>
    %149 = vector.shape_cast %148 : vector<1x128x256xf32> to vector<128x256xf32>
    %cst_74 = arith.constant dense<0.000000e+00> : vector<16x256xf32>
    %150 = tpu.matmul %147, %149, %cst_74 {dimension_numbers = #tpu.dot_dimension_numbers<[1], [0], [0], [1], [0, 0, 1, 1], [], []>} : vector<16x128xf32>, vector<128x256xf32>, vector<16x256xf32> -> vector<16x256xf32>
    %c0_75 = arith.constant 0 : index
    %c0_76 = arith.constant 0 : index
    %c0_77 = arith.constant 0 : index
    %151 = vector.load %arg14[%c0_75, %c0_76, %c0_77] : memref<2x1x256xf32, #tpu.memory_space<vmem>>, vector<1x1x256xf32>
    %152 = vector.shape_cast %151 : vector<1x1x256xf32> to vector<1x256xf32>
    %153 = vector.broadcast %152 : vector<1x256xf32> to vector<16x256xf32>
    %154 = arith.addf %150, %153 : vector<16x256xf32>
    %155 = arith.mulf %154, %154 : vector<16x256xf32>
    %156 = arith.mulf %154, %155 : vector<16x256xf32>
    %cst_78 = arith.constant 4.471500e-02 : f32
    %157 = vector.broadcast %cst_78 : f32 to vector<16x256xf32>
    %158 = arith.mulf %157, %156 : vector<16x256xf32>
    %159 = arith.addf %154, %158 : vector<16x256xf32>
    %cst_79 = arith.constant 0.797884583 : f32
    %160 = vector.broadcast %cst_79 : f32 to vector<16x256xf32>
    %161 = arith.mulf %160, %159 : vector<16x256xf32>
    %162 = math.tanh %161 : vector<16x256xf32>
    %cst_80 = arith.constant 1.000000e+00 : f32
    %163 = vector.broadcast %cst_80 : f32 to vector<16x256xf32>
    %164 = arith.addf %163, %162 : vector<16x256xf32>
    %cst_81 = arith.constant 5.000000e-01 : f32
    %165 = vector.broadcast %cst_81 : f32 to vector<16x256xf32>
    %166 = arith.mulf %165, %164 : vector<16x256xf32>
    %167 = arith.mulf %154, %166 : vector<16x256xf32>
    %c0_82 = arith.constant 0 : index
    %c0_83 = arith.constant 0 : index
    %c0_84 = arith.constant 0 : index
    %168 = vector.load %arg15[%c0_82, %c0_83, %c0_84] : memref<2x256x128xf32, #tpu.memory_space<vmem>>, vector<1x256x128xf32>
    %169 = vector.shape_cast %168 : vector<1x256x128xf32> to vector<256x128xf32>
    %cst_85 = arith.constant dense<0.000000e+00> : vector<16x128xf32>
    %170 = tpu.matmul %167, %169, %cst_85 {dimension_numbers = #tpu.dot_dimension_numbers<[1], [0], [0], [1], [0, 0, 1, 1], [], []>} : vector<16x256xf32>, vector<256x128xf32>, vector<16x128xf32> -> vector<16x128xf32>
    %171 = arith.addf %121, %170 : vector<16x128xf32>
    %c0_86 = arith.constant 0 : index
    %c0_87 = arith.constant 0 : index
    %c0_88 = arith.constant 0 : index
    %172 = vector.load %arg16[%c0_86, %c0_87, %c0_88] : memref<2x1x128xf32, #tpu.memory_space<vmem>>, vector<1x1x128xf32>
    %173 = vector.shape_cast %172 : vector<1x1x128xf32> to vector<1x128xf32>
    %174 = vector.broadcast %173 : vector<1x128xf32> to vector<16x128xf32>
    %175 = arith.addf %171, %174 : vector<16x128xf32>
    %c1 = arith.constant 1 : index
    %c0_89 = arith.constant 0 : index
    %c0_90 = arith.constant 0 : index
    %176 = vector.load %arg5[%c1, %c0_89, %c0_90] : memref<2x1x128xf32, #tpu.memory_space<vmem>>, vector<1x1x128xf32>
    %177 = vector.shape_cast %176 : vector<1x1x128xf32> to vector<1x128xf32>
    %c1_91 = arith.constant 1 : index
    %c0_92 = arith.constant 0 : index
    %c0_93 = arith.constant 0 : index
    %178 = vector.load %arg6[%c1_91, %c0_92, %c0_93] : memref<2x1x128xf32, #tpu.memory_space<vmem>>, vector<1x1x128xf32>
    %179 = vector.shape_cast %178 : vector<1x1x128xf32> to vector<1x128xf32>
    %cst_94 = arith.constant dense<0.000000e+00> : vector<16xf32>
    %180 = vector.multi_reduction <add>, %175, %cst_94 [1] : vector<16x128xf32> to vector<16xf32>
    %181 = vector.shape_cast %180 : vector<16xf32> to vector<16x1xf32>
    %cst_95 = arith.constant 1.280000e+02 : f32
    %182 = vector.broadcast %cst_95 : f32 to vector<16x1xf32>
    %183 = arith.divf %181, %182 : vector<16x1xf32>
    %184 = vector.broadcast %183 : vector<16x1xf32> to vector<16x128xf32>
    %185 = arith.subf %175, %184 : vector<16x128xf32>
    %186 = arith.mulf %185, %185 : vector<16x128xf32>
    %cst_96 = arith.constant dense<0.000000e+00> : vector<16xf32>
    %187 = vector.multi_reduction <add>, %186, %cst_96 [1] : vector<16x128xf32> to vector<16xf32>
    %188 = vector.shape_cast %187 : vector<16xf32> to vector<16x1xf32>
    %cst_97 = arith.constant 1.280000e+02 : f32
    %189 = vector.broadcast %cst_97 : f32 to vector<16x1xf32>
    %190 = arith.divf %188, %189 : vector<16x1xf32>
    %191 = vector.broadcast %183 : vector<16x1xf32> to vector<16x128xf32>
    %192 = arith.subf %175, %191 : vector<16x128xf32>
    %cst_98 = arith.constant 9.99999974E-6 : f32
    %193 = vector.broadcast %cst_98 : f32 to vector<16x1xf32>
    %194 = arith.addf %190, %193 : vector<16x1xf32>
    %195 = math.rsqrt %194 : vector<16x1xf32>
    %196 = vector.broadcast %195 : vector<16x1xf32> to vector<16x128xf32>
    %197 = arith.mulf %192, %196 : vector<16x128xf32>
    %198 = vector.broadcast %177 : vector<1x128xf32> to vector<16x128xf32>
    %199 = arith.mulf %197, %198 : vector<16x128xf32>
    %200 = vector.broadcast %179 : vector<1x128xf32> to vector<16x128xf32>
    %201 = arith.addf %199, %200 : vector<16x128xf32>
    %c1_99 = arith.constant 1 : index
    %c0_100 = arith.constant 0 : index
    %c0_101 = arith.constant 0 : index
    %202 = vector.load %arg7[%c1_99, %c0_100, %c0_101] : memref<2x128x384xf32, #tpu.memory_space<vmem>>, vector<1x128x384xf32>
    %203 = vector.shape_cast %202 : vector<1x128x384xf32> to vector<128x384xf32>
    %cst_102 = arith.constant dense<0.000000e+00> : vector<16x384xf32>
    %204 = tpu.matmul %201, %203, %cst_102 {dimension_numbers = #tpu.dot_dimension_numbers<[1], [0], [0], [1], [0, 0, 1, 1], [], []>} : vector<16x128xf32>, vector<128x384xf32>, vector<16x384xf32> -> vector<16x384xf32>
    %c1_103 = arith.constant 1 : index
    %c0_104 = arith.constant 0 : index
    %c0_105 = arith.constant 0 : index
    %205 = vector.load %arg8[%c1_103, %c0_104, %c0_105] : memref<2x1x384xf32, #tpu.memory_space<vmem>>, vector<1x1x384xf32>
    %206 = vector.shape_cast %205 : vector<1x1x384xf32> to vector<1x384xf32>
    %207 = vector.broadcast %206 : vector<1x384xf32> to vector<16x384xf32>
    %208 = arith.addf %204, %207 : vector<16x384xf32>
    %209 = vector.extract_strided_slice %208 {offsets = [0, 0], sizes = [16, 128], strides = [1, 1]} : vector<16x384xf32> to vector<16x128xf32>
    %210 = vector.extract_strided_slice %208 {offsets = [0, 128], sizes = [16, 128], strides = [1, 1]} : vector<16x384xf32> to vector<16x128xf32>
    %211 = vector.extract_strided_slice %208 {offsets = [0, 256], sizes = [16, 128], strides = [1, 1]} : vector<16x384xf32> to vector<16x128xf32>
    %212 = vector.extract_strided_slice %209 {offsets = [0, 0], sizes = [16, 32], strides = [1, 1]} : vector<16x128xf32> to vector<16x32xf32>
    %cst_106 = arith.constant 0.176776692 : f32
    %213 = vector.broadcast %cst_106 : f32 to vector<16x32xf32>
    %214 = arith.mulf %212, %213 : vector<16x32xf32>
    %215 = vector.extract_strided_slice %210 {offsets = [0, 0], sizes = [16, 32], strides = [1, 1]} : vector<16x128xf32> to vector<16x32xf32>
    %cst_107 = arith.constant dense<0.000000e+00> : vector<16x16xf32>
    %216 = tpu.matmul %214, %215, %cst_107 {dimension_numbers = #tpu.dot_dimension_numbers<[1], [1], [0], [0], [0, 0, 1, 0], [], []>} : vector<16x32xf32>, vector<16x32xf32>, vector<16x16xf32> -> vector<16x16xf32>
    %cst_108 = arith.constant dense<0xFF800000> : vector<16xf32>
    %217 = vector.multi_reduction <maximumf>, %216, %cst_108 [1] : vector<16x16xf32> to vector<16xf32>
    %218 = vector.shape_cast %217 : vector<16xf32> to vector<16x1xf32>
    %219 = vector.broadcast %218 : vector<16x1xf32> to vector<16x16xf32>
    %220 = arith.subf %216, %219 : vector<16x16xf32>
    %221 = math.exp %220 : vector<16x16xf32>
    %cst_109 = arith.constant dense<0.000000e+00> : vector<16xf32>
    %222 = vector.multi_reduction <add>, %221, %cst_109 [1] : vector<16x16xf32> to vector<16xf32>
    %223 = vector.shape_cast %222 : vector<16xf32> to vector<16x1xf32>
    %224 = vector.broadcast %223 : vector<16x1xf32> to vector<16x16xf32>
    %225 = arith.divf %221, %224 : vector<16x16xf32>
    %226 = vector.extract_strided_slice %211 {offsets = [0, 0], sizes = [16, 32], strides = [1, 1]} : vector<16x128xf32> to vector<16x32xf32>
    %cst_110 = arith.constant dense<0.000000e+00> : vector<16x32xf32>
    %227 = tpu.matmul %225, %226, %cst_110 {dimension_numbers = #tpu.dot_dimension_numbers<[1], [0], [0], [1], [0, 0, 1, 1], [], []>} : vector<16x16xf32>, vector<16x32xf32>, vector<16x32xf32> -> vector<16x32xf32>
    %c0_111 = arith.constant 0 : index
    %c0_112 = arith.constant 0 : index
    %228 = vector.load %arg25[%c0_111, %c0_112] : memref<16x128xf32, #tpu.memory_space<vmem>>, vector<16x32xf32>
    tpu.vector_store %arg25[%c0_111, %c0_112], %227 {strides = array<i32>} : memref<16x128xf32, #tpu.memory_space<vmem>>, vector<16x32xf32>,
    %229 = vector.extract_strided_slice %209 {offsets = [0, 32], sizes = [16, 32], strides = [1, 1]} : vector<16x128xf32> to vector<16x32xf32>
    %cst_113 = arith.constant 0.176776692 : f32
    %230 = vector.broadcast %cst_113 : f32 to vector<16x32xf32>
    %231 = arith.mulf %229, %230 : vector<16x32xf32>
    %232 = vector.extract_strided_slice %210 {offsets = [0, 32], sizes = [16, 32], strides = [1, 1]} : vector<16x128xf32> to vector<16x32xf32>
    %cst_114 = arith.constant dense<0.000000e+00> : vector<16x16xf32>
    %233 = tpu.matmul %231, %232, %cst_114 {dimension_numbers = #tpu.dot_dimension_numbers<[1], [1], [0], [0], [0, 0, 1, 0], [], []>} : vector<16x32xf32>, vector<16x32xf32>, vector<16x16xf32> -> vector<16x16xf32>
    %cst_115 = arith.constant dense<0xFF800000> : vector<16xf32>
    %234 = vector.multi_reduction <maximumf>, %233, %cst_115 [1] : vector<16x16xf32> to vector<16xf32>
    %235 = vector.shape_cast %234 : vector<16xf32> to vector<16x1xf32>
    %236 = vector.broadcast %235 : vector<16x1xf32> to vector<16x16xf32>
    %237 = arith.subf %233, %236 : vector<16x16xf32>
    %238 = math.exp %237 : vector<16x16xf32>
    %cst_116 = arith.constant dense<0.000000e+00> : vector<16xf32>
    %239 = vector.multi_reduction <add>, %238, %cst_116 [1] : vector<16x16xf32> to vector<16xf32>
    %240 = vector.shape_cast %239 : vector<16xf32> to vector<16x1xf32>
    %241 = vector.broadcast %240 : vector<16x1xf32> to vector<16x16xf32>
    %242 = arith.divf %238, %241 : vector<16x16xf32>
    %243 = vector.extract_strided_slice %211 {offsets = [0, 32], sizes = [16, 32], strides = [1, 1]} : vector<16x128xf32> to vector<16x32xf32>
    %cst_117 = arith.constant dense<0.000000e+00> : vector<16x32xf32>
    %244 = tpu.matmul %242, %243, %cst_117 {dimension_numbers = #tpu.dot_dimension_numbers<[1], [0], [0], [1], [0, 0, 1, 1], [], []>} : vector<16x16xf32>, vector<16x32xf32>, vector<16x32xf32> -> vector<16x32xf32>
    %c0_118 = arith.constant 0 : index
    %c32_119 = arith.constant 32 : index
    %245 = vector.load %arg25[%c0_118, %c32_119] : memref<16x128xf32, #tpu.memory_space<vmem>>, vector<16x32xf32>
    tpu.vector_store %arg25[%c0_118, %c32_119], %244 {strides = array<i32>} : memref<16x128xf32, #tpu.memory_space<vmem>>, vector<16x32xf32>,
    %246 = vector.extract_strided_slice %209 {offsets = [0, 64], sizes = [16, 32], strides = [1, 1]} : vector<16x128xf32> to vector<16x32xf32>
    %cst_120 = arith.constant 0.176776692 : f32
    %247 = vector.broadcast %cst_120 : f32 to vector<16x32xf32>
    %248 = arith.mulf %246, %247 : vector<16x32xf32>
    %249 = vector.extract_strided_slice %210 {offsets = [0, 64], sizes = [16, 32], strides = [1, 1]} : vector<16x128xf32> to vector<16x32xf32>
    %cst_121 = arith.constant dense<0.000000e+00> : vector<16x16xf32>
    %250 = tpu.matmul %248, %249, %cst_121 {dimension_numbers = #tpu.dot_dimension_numbers<[1], [1], [0], [0], [0, 0, 1, 0], [], []>} : vector<16x32xf32>, vector<16x32xf32>, vector<16x16xf32> -> vector<16x16xf32>
    %cst_122 = arith.constant dense<0xFF800000> : vector<16xf32>
    %251 = vector.multi_reduction <maximumf>, %250, %cst_122 [1] : vector<16x16xf32> to vector<16xf32>
    %252 = vector.shape_cast %251 : vector<16xf32> to vector<16x1xf32>
    %253 = vector.broadcast %252 : vector<16x1xf32> to vector<16x16xf32>
    %254 = arith.subf %250, %253 : vector<16x16xf32>
    %255 = math.exp %254 : vector<16x16xf32>
    %cst_123 = arith.constant dense<0.000000e+00> : vector<16xf32>
    %256 = vector.multi_reduction <add>, %255, %cst_123 [1] : vector<16x16xf32> to vector<16xf32>
    %257 = vector.shape_cast %256 : vector<16xf32> to vector<16x1xf32>
    %258 = vector.broadcast %257 : vector<16x1xf32> to vector<16x16xf32>
    %259 = arith.divf %255, %258 : vector<16x16xf32>
    %260 = vector.extract_strided_slice %211 {offsets = [0, 64], sizes = [16, 32], strides = [1, 1]} : vector<16x128xf32> to vector<16x32xf32>
    %cst_124 = arith.constant dense<0.000000e+00> : vector<16x32xf32>
    %261 = tpu.matmul %259, %260, %cst_124 {dimension_numbers = #tpu.dot_dimension_numbers<[1], [0], [0], [1], [0, 0, 1, 1], [], []>} : vector<16x16xf32>, vector<16x32xf32>, vector<16x32xf32> -> vector<16x32xf32>
    %c0_125 = arith.constant 0 : index
    %c64_126 = arith.constant 64 : index
    %262 = vector.load %arg25[%c0_125, %c64_126] : memref<16x128xf32, #tpu.memory_space<vmem>>, vector<16x32xf32>
    tpu.vector_store %arg25[%c0_125, %c64_126], %261 {strides = array<i32>} : memref<16x128xf32, #tpu.memory_space<vmem>>, vector<16x32xf32>,
    %263 = vector.extract_strided_slice %209 {offsets = [0, 96], sizes = [16, 32], strides = [1, 1]} : vector<16x128xf32> to vector<16x32xf32>
    %cst_127 = arith.constant 0.176776692 : f32
    %264 = vector.broadcast %cst_127 : f32 to vector<16x32xf32>
    %265 = arith.mulf %263, %264 : vector<16x32xf32>
    %266 = vector.extract_strided_slice %210 {offsets = [0, 96], sizes = [16, 32], strides = [1, 1]} : vector<16x128xf32> to vector<16x32xf32>
    %cst_128 = arith.constant dense<0.000000e+00> : vector<16x16xf32>
    %267 = tpu.matmul %265, %266, %cst_128 {dimension_numbers = #tpu.dot_dimension_numbers<[1], [1], [0], [0], [0, 0, 1, 0], [], []>} : vector<16x32xf32>, vector<16x32xf32>, vector<16x16xf32> -> vector<16x16xf32>
    %cst_129 = arith.constant dense<0xFF800000> : vector<16xf32>
    %268 = vector.multi_reduction <maximumf>, %267, %cst_129 [1] : vector<16x16xf32> to vector<16xf32>
    %269 = vector.shape_cast %268 : vector<16xf32> to vector<16x1xf32>
    %270 = vector.broadcast %269 : vector<16x1xf32> to vector<16x16xf32>
    %271 = arith.subf %267, %270 : vector<16x16xf32>
    %272 = math.exp %271 : vector<16x16xf32>
    %cst_130 = arith.constant dense<0.000000e+00> : vector<16xf32>
    %273 = vector.multi_reduction <add>, %272, %cst_130 [1] : vector<16x16xf32> to vector<16xf32>
    %274 = vector.shape_cast %273 : vector<16xf32> to vector<16x1xf32>
    %275 = vector.broadcast %274 : vector<16x1xf32> to vector<16x16xf32>
    %276 = arith.divf %272, %275 : vector<16x16xf32>
    %277 = vector.extract_strided_slice %211 {offsets = [0, 96], sizes = [16, 32], strides = [1, 1]} : vector<16x128xf32> to vector<16x32xf32>
    %cst_131 = arith.constant dense<0.000000e+00> : vector<16x32xf32>
    %278 = tpu.matmul %276, %277, %cst_131 {dimension_numbers = #tpu.dot_dimension_numbers<[1], [0], [0], [1], [0, 0, 1, 1], [], []>} : vector<16x16xf32>, vector<16x32xf32>, vector<16x32xf32> -> vector<16x32xf32>
    %c0_132 = arith.constant 0 : index
    %c96_133 = arith.constant 96 : index
    %279 = vector.load %arg25[%c0_132, %c96_133] : memref<16x128xf32, #tpu.memory_space<vmem>>, vector<16x32xf32>
    tpu.vector_store %arg25[%c0_132, %c96_133], %278 {strides = array<i32>} : memref<16x128xf32, #tpu.memory_space<vmem>>, vector<16x32xf32>,
    %c0_134 = arith.constant 0 : index
    %c0_135 = arith.constant 0 : index
    %280 = vector.load %arg25[%c0_134, %c0_135] : memref<16x128xf32, #tpu.memory_space<vmem>>, vector<16x128xf32>
    %c1_136 = arith.constant 1 : index
    %c0_137 = arith.constant 0 : index
    %c0_138 = arith.constant 0 : index
    %281 = vector.load %arg9[%c1_136, %c0_137, %c0_138] : memref<2x128x128xf32, #tpu.memory_space<vmem>>, vector<1x128x128xf32>
    %282 = vector.shape_cast %281 : vector<1x128x128xf32> to vector<128x128xf32>
    %cst_139 = arith.constant dense<0.000000e+00> : vector<16x128xf32>
    %283 = tpu.matmul %280, %282, %cst_139 {dimension_numbers = #tpu.dot_dimension_numbers<[1], [0], [0], [1], [0, 0, 1, 1], [], []>} : vector<16x128xf32>, vector<128x128xf32>, vector<16x128xf32> -> vector<16x128xf32>
    %284 = arith.addf %175, %283 : vector<16x128xf32>
    %c1_140 = arith.constant 1 : index
    %c0_141 = arith.constant 0 : index
    %c0_142 = arith.constant 0 : index
    %285 = vector.load %arg10[%c1_140, %c0_141, %c0_142] : memref<2x1x128xf32, #tpu.memory_space<vmem>>, vector<1x1x128xf32>
    %286 = vector.shape_cast %285 : vector<1x1x128xf32> to vector<1x128xf32>
    %287 = vector.broadcast %286 : vector<1x128xf32> to vector<16x128xf32>
    %288 = arith.addf %284, %287 : vector<16x128xf32>
    %c1_143 = arith.constant 1 : index
    %c0_144 = arith.constant 0 : index
    %c0_145 = arith.constant 0 : index
    %289 = vector.load %arg11[%c1_143, %c0_144, %c0_145] : memref<2x1x128xf32, #tpu.memory_space<vmem>>, vector<1x1x128xf32>
    %290 = vector.shape_cast %289 : vector<1x1x128xf32> to vector<1x128xf32>
    %c1_146 = arith.constant 1 : index
    %c0_147 = arith.constant 0 : index
    %c0_148 = arith.constant 0 : index
    %291 = vector.load %arg12[%c1_146, %c0_147, %c0_148] : memref<2x1x128xf32, #tpu.memory_space<vmem>>, vector<1x1x128xf32>
    %292 = vector.shape_cast %291 : vector<1x1x128xf32> to vector<1x128xf32>
    %cst_149 = arith.constant dense<0.000000e+00> : vector<16xf32>
    %293 = vector.multi_reduction <add>, %288, %cst_149 [1] : vector<16x128xf32> to vector<16xf32>
    %294 = vector.shape_cast %293 : vector<16xf32> to vector<16x1xf32>
    %cst_150 = arith.constant 1.280000e+02 : f32
    %295 = vector.broadcast %cst_150 : f32 to vector<16x1xf32>
    %296 = arith.divf %294, %295 : vector<16x1xf32>
    %297 = vector.broadcast %296 : vector<16x1xf32> to vector<16x128xf32>
    %298 = arith.subf %288, %297 : vector<16x128xf32>
    %299 = arith.mulf %298, %298 : vector<16x128xf32>
    %cst_151 = arith.constant dense<0.000000e+00> : vector<16xf32>
    %300 = vector.multi_reduction <add>, %299, %cst_151 [1] : vector<16x128xf32> to vector<16xf32>
    %301 = vector.shape_cast %300 : vector<16xf32> to vector<16x1xf32>
    %cst_152 = arith.constant 1.280000e+02 : f32
    %302 = vector.broadcast %cst_152 : f32 to vector<16x1xf32>
    %303 = arith.divf %301, %302 : vector<16x1xf32>
    %304 = vector.broadcast %296 : vector<16x1xf32> to vector<16x128xf32>
    %305 = arith.subf %288, %304 : vector<16x128xf32>
    %cst_153 = arith.constant 9.99999974E-6 : f32
    %306 = vector.broadcast %cst_153 : f32 to vector<16x1xf32>
    %307 = arith.addf %303, %306 : vector<16x1xf32>
    %308 = math.rsqrt %307 : vector<16x1xf32>
    %309 = vector.broadcast %308 : vector<16x1xf32> to vector<16x128xf32>
    %310 = arith.mulf %305, %309 : vector<16x128xf32>
    %311 = vector.broadcast %290 : vector<1x128xf32> to vector<16x128xf32>
    %312 = arith.mulf %310, %311 : vector<16x128xf32>
    %313 = vector.broadcast %292 : vector<1x128xf32> to vector<16x128xf32>
    %314 = arith.addf %312, %313 : vector<16x128xf32>
    %c1_154 = arith.constant 1 : index
    %c0_155 = arith.constant 0 : index
    %c0_156 = arith.constant 0 : index
    %315 = vector.load %arg13[%c1_154, %c0_155, %c0_156] : memref<2x128x256xf32, #tpu.memory_space<vmem>>, vector<1x128x256xf32>
    %316 = vector.shape_cast %315 : vector<1x128x256xf32> to vector<128x256xf32>
    %cst_157 = arith.constant dense<0.000000e+00> : vector<16x256xf32>
    %317 = tpu.matmul %314, %316, %cst_157 {dimension_numbers = #tpu.dot_dimension_numbers<[1], [0], [0], [1], [0, 0, 1, 1], [], []>} : vector<16x128xf32>, vector<128x256xf32>, vector<16x256xf32> -> vector<16x256xf32>
    %c1_158 = arith.constant 1 : index
    %c0_159 = arith.constant 0 : index
    %c0_160 = arith.constant 0 : index
    %318 = vector.load %arg14[%c1_158, %c0_159, %c0_160] : memref<2x1x256xf32, #tpu.memory_space<vmem>>, vector<1x1x256xf32>
    %319 = vector.shape_cast %318 : vector<1x1x256xf32> to vector<1x256xf32>
    %320 = vector.broadcast %319 : vector<1x256xf32> to vector<16x256xf32>
    %321 = arith.addf %317, %320 : vector<16x256xf32>
    %322 = arith.mulf %321, %321 : vector<16x256xf32>
    %323 = arith.mulf %321, %322 : vector<16x256xf32>
    %cst_161 = arith.constant 4.471500e-02 : f32
    %324 = vector.broadcast %cst_161 : f32 to vector<16x256xf32>
    %325 = arith.mulf %324, %323 : vector<16x256xf32>
    %326 = arith.addf %321, %325 : vector<16x256xf32>
    %cst_162 = arith.constant 0.797884583 : f32
    %327 = vector.broadcast %cst_162 : f32 to vector<16x256xf32>
    %328 = arith.mulf %327, %326 : vector<16x256xf32>
    %329 = math.tanh %328 : vector<16x256xf32>
    %cst_163 = arith.constant 1.000000e+00 : f32
    %330 = vector.broadcast %cst_163 : f32 to vector<16x256xf32>
    %331 = arith.addf %330, %329 : vector<16x256xf32>
    %cst_164 = arith.constant 5.000000e-01 : f32
    %332 = vector.broadcast %cst_164 : f32 to vector<16x256xf32>
    %333 = arith.mulf %332, %331 : vector<16x256xf32>
    %334 = arith.mulf %321, %333 : vector<16x256xf32>
    %c1_165 = arith.constant 1 : index
    %c0_166 = arith.constant 0 : index
    %c0_167 = arith.constant 0 : index
    %335 = vector.load %arg15[%c1_165, %c0_166, %c0_167] : memref<2x256x128xf32, #tpu.memory_space<vmem>>, vector<1x256x128xf32>
    %336 = vector.shape_cast %335 : vector<1x256x128xf32> to vector<256x128xf32>
    %cst_168 = arith.constant dense<0.000000e+00> : vector<16x128xf32>
    %337 = tpu.matmul %334, %336, %cst_168 {dimension_numbers = #tpu.dot_dimension_numbers<[1], [0], [0], [1], [0, 0, 1, 1], [], []>} : vector<16x256xf32>, vector<256x128xf32>, vector<16x128xf32> -> vector<16x128xf32>
    %338 = arith.addf %288, %337 : vector<16x128xf32>
    %c1_169 = arith.constant 1 : index
    %c0_170 = arith.constant 0 : index
    %c0_171 = arith.constant 0 : index
    %339 = vector.load %arg16[%c1_169, %c0_170, %c0_171] : memref<2x1x128xf32, #tpu.memory_space<vmem>>, vector<1x1x128xf32>
    %340 = vector.shape_cast %339 : vector<1x1x128xf32> to vector<1x128xf32>
    %341 = vector.broadcast %340 : vector<1x128xf32> to vector<16x128xf32>
    %342 = arith.addf %338, %341 : vector<16x128xf32>
    %c0_172 = arith.constant 0 : index
    %c0_173 = arith.constant 0 : index
    %343 = vector.load %arg17[%c0_172, %c0_173] : memref<1x128xf32, #tpu.memory_space<vmem>>, vector<1x128xf32>
    %c0_174 = arith.constant 0 : index
    %c0_175 = arith.constant 0 : index
    %344 = vector.load %arg18[%c0_174, %c0_175] : memref<1x128xf32, #tpu.memory_space<vmem>>, vector<1x128xf32>
    %cst_176 = arith.constant dense<0.000000e+00> : vector<16xf32>
    %345 = vector.multi_reduction <add>, %342, %cst_176 [1] : vector<16x128xf32> to vector<16xf32>
    %346 = vector.shape_cast %345 : vector<16xf32> to vector<16x1xf32>
    %cst_177 = arith.constant 1.280000e+02 : f32
    %347 = vector.broadcast %cst_177 : f32 to vector<16x1xf32>
    %348 = arith.divf %346, %347 : vector<16x1xf32>
    %349 = vector.broadcast %348 : vector<16x1xf32> to vector<16x128xf32>
    %350 = arith.subf %342, %349 : vector<16x128xf32>
    %351 = arith.mulf %350, %350 : vector<16x128xf32>
    %cst_178 = arith.constant dense<0.000000e+00> : vector<16xf32>
    %352 = vector.multi_reduction <add>, %351, %cst_178 [1] : vector<16x128xf32> to vector<16xf32>
    %353 = vector.shape_cast %352 : vector<16xf32> to vector<16x1xf32>
    %cst_179 = arith.constant 1.280000e+02 : f32
    %354 = vector.broadcast %cst_179 : f32 to vector<16x1xf32>
    %355 = arith.divf %353, %354 : vector<16x1xf32>
    %356 = vector.broadcast %348 : vector<16x1xf32> to vector<16x128xf32>
    %357 = arith.subf %342, %356 : vector<16x128xf32>
    %cst_180 = arith.constant 9.99999974E-6 : f32
    %358 = vector.broadcast %cst_180 : f32 to vector<16x1xf32>
    %359 = arith.addf %355, %358 : vector<16x1xf32>
    %360 = math.rsqrt %359 : vector<16x1xf32>
    %361 = vector.broadcast %360 : vector<16x1xf32> to vector<16x128xf32>
    %362 = arith.mulf %357, %361 : vector<16x128xf32>
    %363 = vector.broadcast %343 : vector<1x128xf32> to vector<16x128xf32>
    %364 = arith.mulf %362, %363 : vector<16x128xf32>
    %365 = vector.broadcast %344 : vector<1x128xf32> to vector<16x128xf32>
    %366 = arith.addf %364, %365 : vector<16x128xf32>
    %c0_181 = arith.constant 0 : index
    %c0_182 = arith.constant 0 : index
    %367 = vector.load %arg19[%c0_181, %c0_182] : memref<128x128xf32, #tpu.memory_space<vmem>>, vector<128x128xf32>
    %cst_183 = arith.constant dense<0.000000e+00> : vector<16x128xf32>
    %368 = tpu.matmul %366, %367, %cst_183 {dimension_numbers = #tpu.dot_dimension_numbers<[1], [0], [0], [1], [0, 0, 1, 1], [], []>} : vector<16x128xf32>, vector<128x128xf32>, vector<16x128xf32> -> vector<16x128xf32>
    %c0_184 = arith.constant 0 : index
    %c0_185 = arith.constant 0 : index
    %369 = vector.load %arg20[%c0_184, %c0_185] : memref<1x128xf32, #tpu.memory_space<vmem>>, vector<1x128xf32>
    %370 = vector.broadcast %369 : vector<1x128xf32> to vector<16x128xf32>
    %371 = arith.addf %368, %370 : vector<16x128xf32>
    %c0_186 = arith.constant 0 : index
    %c0_187 = arith.constant 0 : index
    %372 = vector.load %arg21[%c0_186, %c0_187] : memref<128x128xf32, #tpu.memory_space<vmem>>, vector<128x128xf32>
    %cst_188 = arith.constant dense<0.000000e+00> : vector<16x128xf32>
    %373 = tpu.matmul %366, %372, %cst_188 {dimension_numbers = #tpu.dot_dimension_numbers<[1], [0], [0], [1], [0, 0, 1, 1], [], []>} : vector<16x128xf32>, vector<128x128xf32>, vector<16x128xf32> -> vector<16x128xf32>
    %c0_189 = arith.constant 0 : index
    %c0_190 = arith.constant 0 : index
    %374 = vector.load %arg22[%c0_189, %c0_190] : memref<1x128xf32, #tpu.memory_space<vmem>>, vector<1x128xf32>
    %375 = vector.broadcast %374 : vector<1x128xf32> to vector<16x128xf32>
    %376 = arith.addf %373, %375 : vector<16x128xf32>
    %cst_191 = arith.constant dense<0.000000e+00> : vector<16x16xf32>
    %377 = tpu.matmul %371, %376, %cst_191 {dimension_numbers = #tpu.dot_dimension_numbers<[1], [1], [0], [0], [0, 0, 1, 0], [], []>} : vector<16x128xf32>, vector<16x128xf32>, vector<16x16xf32> -> vector<16x16xf32>
    %cst_192 = arith.constant dense<0xFF800000> : vector<16xf32>
    %378 = vector.multi_reduction <maximumf>, %377, %cst_192 [1] : vector<16x16xf32> to vector<16xf32>
    %379 = vector.shape_cast %378 : vector<16xf32> to vector<16x1xf32>
    %380 = vector.broadcast %379 : vector<16x1xf32> to vector<16x16xf32>
    %381 = arith.subf %377, %380 : vector<16x16xf32>
    %382 = math.exp %381 : vector<16x16xf32>
    %cst_193 = arith.constant dense<0.000000e+00> : vector<16xf32>
    %383 = vector.multi_reduction <add>, %382, %cst_193 [1] : vector<16x16xf32> to vector<16xf32>
    %384 = vector.shape_cast %383 : vector<16xf32> to vector<16x1xf32>
    %385 = vector.broadcast %384 : vector<16x1xf32> to vector<16x16xf32>
    %386 = arith.divf %382, %385 : vector<16x16xf32>
    %c0_194 = arith.constant 0 : index
    %c0_195 = arith.constant 0 : index
    %c0_196 = arith.constant 0 : index
    %387 = vector.load %arg23[%c0_194, %c0_195, %c0_196] : memref<1x16x128xf32, #tpu.memory_space<vmem>>, vector<1x16x128xf32>
    %388 = vector.shape_cast %387 : vector<1x16x128xf32> to vector<16x128xf32>
    %389 = vector.shape_cast %371 : vector<16x128xf32> to vector<1x16x128xf32>
    tpu.vector_store %arg23[%c0_194, %c0_195, %c0_196], %389 {strides = array<i32>} : memref<1x16x128xf32, #tpu.memory_space<vmem>>, vector<1x16x128xf32>,
    %cst_197 = arith.constant 0.000000e+00 : f32
    %390 = vector.broadcast %cst_197 : f32 to vector<16x128xf32>
    %c0_198 = arith.constant 0 : index
    %c0_199 = arith.constant 0 : index
    %c0_200 = arith.constant 0 : index
    %391 = vector.load %arg24[%c0_198, %c0_199, %c0_200] : memref<1x16x128xf32, #tpu.memory_space<vmem>>, vector<1x16x128xf32>
    %392 = vector.shape_cast %391 : vector<1x16x128xf32> to vector<16x128xf32>
    %393 = vector.shape_cast %390 : vector<16x128xf32> to vector<1x16x128xf32>
    tpu.vector_store %arg24[%c0_198, %c0_199, %c0_200], %393 {strides = array<i32>} : memref<1x16x128xf32, #tpu.memory_space<vmem>>, vector<1x16x128xf32>,
    %c0_201 = arith.constant 0 : index
    %c0_202 = arith.constant 0 : index
    %c0_203 = arith.constant 0 : index
    %394 = vector.load %arg24[%c0_201, %c0_202, %c0_203] : memref<1x16x128xf32, #tpu.memory_space<vmem>>, vector<1x16x16xf32>
    %395 = vector.shape_cast %394 : vector<1x16x16xf32> to vector<16x16xf32>
    %396 = vector.shape_cast %386 : vector<16x16xf32> to vector<1x16x16xf32>
    tpu.vector_store %arg24[%c0_201, %c0_202, %c0_203], %396 {strides = array<i32>} : memref<1x16x128xf32, #tpu.memory_space<vmem>>, vector<1x16x16xf32>,
    return
  }
  func.func @transform_0(%arg0: i32) -> (i32, i32, i32) {
    %c0_i32 = arith.constant 0 : i32
    %c0_i32_0 = arith.constant 0 : i32
    %c0_i32_1 = arith.constant 0 : i32
    return %arg0, %c0_i32, %c0_i32_0 : i32, i32, i32
  }
  func.func @transform_1(%arg0: i32) -> (i32, i32) {
    %c0_i32 = arith.constant 0 : i32
    %c0_i32_0 = arith.constant 0 : i32
    %c0_i32_1 = arith.constant 0 : i32
    return %c0_i32, %c0_i32_0 : i32, i32
  }
  func.func @transform_2(%arg0: i32) -> (i32, i32) {
    %c0_i32 = arith.constant 0 : i32
    %c0_i32_0 = arith.constant 0 : i32
    %c0_i32_1 = arith.constant 0 : i32
    return %c0_i32, %c0_i32_0 : i32, i32
  }
  func.func @transform_3(%arg0: i32) -> (i32, i32) {
    %c0_i32 = arith.constant 0 : i32
    %c0_i32_0 = arith.constant 0 : i32
    %c0_i32_1 = arith.constant 0 : i32
    return %c0_i32, %c0_i32_0 : i32, i32
  }
  func.func @transform_4(%arg0: i32) -> (i32, i32, i32) {
    %c0_i32 = arith.constant 0 : i32
    %c0_i32_0 = arith.constant 0 : i32
    %c0_i32_1 = arith.constant 0 : i32
    %c0_i32_2 = arith.constant 0 : i32
    return %c0_i32, %c0_i32_0, %c0_i32_1 : i32, i32, i32
  }
  func.func @transform_5(%arg0: i32) -> (i32, i32, i32) {
    %c0_i32 = arith.constant 0 : i32
    %c0_i32_0 = arith.constant 0 : i32
    %c0_i32_1 = arith.constant 0 : i32
    %c0_i32_2 = arith.constant 0 : i32
    return %c0_i32, %c0_i32_0, %c0_i32_1 : i32, i32, i32
  }
  func.func @transform_6(%arg0: i32) -> (i32, i32, i32) {
    %c0_i32 = arith.constant 0 : i32
    %c0_i32_0 = arith.constant 0 : i32
    %c0_i32_1 = arith.constant 0 : i32
    %c0_i32_2 = arith.constant 0 : i32
    return %c0_i32, %c0_i32_0, %c0_i32_1 : i32, i32, i32
  }
  func.func @transform_7(%arg0: i32) -> (i32, i32, i32) {
    %c0_i32 = arith.constant 0 : i32
    %c0_i32_0 = arith.constant 0 : i32
    %c0_i32_1 = arith.constant 0 : i32
    %c0_i32_2 = arith.constant 0 : i32
    return %c0_i32, %c0_i32_0, %c0_i32_1 : i32, i32, i32
  }
  func.func @transform_8(%arg0: i32) -> (i32, i32, i32) {
    %c0_i32 = arith.constant 0 : i32
    %c0_i32_0 = arith.constant 0 : i32
    %c0_i32_1 = arith.constant 0 : i32
    %c0_i32_2 = arith.constant 0 : i32
    return %c0_i32, %c0_i32_0, %c0_i32_1 : i32, i32, i32
  }
  func.func @transform_9(%arg0: i32) -> (i32, i32, i32) {
    %c0_i32 = arith.constant 0 : i32
    %c0_i32_0 = arith.constant 0 : i32
    %c0_i32_1 = arith.constant 0 : i32
    %c0_i32_2 = arith.constant 0 : i32
    return %c0_i32, %c0_i32_0, %c0_i32_1 : i32, i32, i32
  }
  func.func @transform_10(%arg0: i32) -> (i32, i32, i32) {
    %c0_i32 = arith.constant 0 : i32
    %c0_i32_0 = arith.constant 0 : i32
    %c0_i32_1 = arith.constant 0 : i32
    %c0_i32_2 = arith.constant 0 : i32
    return %c0_i32, %c0_i32_0, %c0_i32_1 : i32, i32, i32
  }
  func.func @transform_11(%arg0: i32) -> (i32, i32, i32) {
    %c0_i32 = arith.constant 0 : i32
    %c0_i32_0 = arith.constant 0 : i32
    %c0_i32_1 = arith.constant 0 : i32
    %c0_i32_2 = arith.constant 0 : i32
    return %c0_i32, %c0_i32_0, %c0_i32_1 : i32, i32, i32
  }
  func.func @transform_12(%arg0: i32) -> (i32, i32, i32) {
    %c0_i32 = arith.constant 0 : i32
    %c0_i32_0 = arith.constant 0 : i32
    %c0_i32_1 = arith.constant 0 : i32
    %c0_i32_2 = arith.constant 0 : i32
    return %c0_i32, %c0_i32_0, %c0_i32_1 : i32, i32, i32
  }
  func.func @transform_13(%arg0: i32) -> (i32, i32, i32) {
    %c0_i32 = arith.constant 0 : i32
    %c0_i32_0 = arith.constant 0 : i32
    %c0_i32_1 = arith.constant 0 : i32
    %c0_i32_2 = arith.constant 0 : i32
    return %c0_i32, %c0_i32_0, %c0_i32_1 : i32, i32, i32
  }
  func.func @transform_14(%arg0: i32) -> (i32, i32, i32) {
    %c0_i32 = arith.constant 0 : i32
    %c0_i32_0 = arith.constant 0 : i32
    %c0_i32_1 = arith.constant 0 : i32
    %c0_i32_2 = arith.constant 0 : i32
    return %c0_i32, %c0_i32_0, %c0_i32_1 : i32, i32, i32
  }
  func.func @transform_15(%arg0: i32) -> (i32, i32, i32) {
    %c0_i32 = arith.constant 0 : i32
    %c0_i32_0 = arith.constant 0 : i32
    %c0_i32_1 = arith.constant 0 : i32
    %c0_i32_2 = arith.constant 0 : i32
    return %c0_i32, %c0_i32_0, %c0_i32_1 : i32, i32, i32
  }
  func.func @transform_16(%arg0: i32) -> (i32, i32) {
    %c0_i32 = arith.constant 0 : i32
    %c0_i32_0 = arith.constant 0 : i32
    %c0_i32_1 = arith.constant 0 : i32
    return %c0_i32, %c0_i32_0 : i32, i32
  }
  func.func @transform_17(%arg0: i32) -> (i32, i32) {
    %c0_i32 = arith.constant 0 : i32
    %c0_i32_0 = arith.constant 0 : i32
    %c0_i32_1 = arith.constant 0 : i32
    return %c0_i32, %c0_i32_0 : i32, i32
  }
  func.func @transform_18(%arg0: i32) -> (i32, i32) {
    %c0_i32 = arith.constant 0 : i32
    %c0_i32_0 = arith.constant 0 : i32
    %c0_i32_1 = arith.constant 0 : i32
    return %c0_i32, %c0_i32_0 : i32, i32
  }
  func.func @transform_19(%arg0: i32) -> (i32, i32) {
    %c0_i32 = arith.constant 0 : i32
    %c0_i32_0 = arith.constant 0 : i32
    %c0_i32_1 = arith.constant 0 : i32
    return %c0_i32, %c0_i32_0 : i32, i32
  }
  func.func @transform_20(%arg0: i32) -> (i32, i32) {
    %c0_i32 = arith.constant 0 : i32
    %c0_i32_0 = arith.constant 0 : i32
    %c0_i32_1 = arith.constant 0 : i32
    return %c0_i32, %c0_i32_0 : i32, i32
  }
  func.func @transform_21(%arg0: i32) -> (i32, i32) {
    %c0_i32 = arith.constant 0 : i32
    %c0_i32_0 = arith.constant 0 : i32
    %c0_i32_1 = arith.constant 0 : i32
    return %c0_i32, %c0_i32_0 : i32, i32
  }
  func.func @transform_22(%arg0: i32) -> (i32, i32, i32) {
    %c0_i32 = arith.constant 0 : i32
    %c0_i32_0 = arith.constant 0 : i32
    %c0_i32_1 = arith.constant 0 : i32
    return %arg0, %c0_i32, %c0_i32_0 : i32, i32, i32
  }
  func.func @transform_23(%arg0: i32) -> (i32, i32, i32) {
    %c0_i32 = arith.constant 0 : i32
    %c0_i32_0 = arith.constant 0 : i32
    %c0_i32_1 = arith.constant 0 : i32
    return %arg0, %c0_i32, %c0_i32_0 : i32, i32, i32
  }
}

</mosaic_0001>

<llo_original>
// kernel: scene_graph_vit_forward.1
$region0: #{scene_graph_vit_forward.1}
  #allocation0 [shape = 'u32[]', space=smem, size = 0x4, offset = 0x4, fixed_abs, tag = 'smem constant byte address 0x4 - core index']
  #allocation1 [shape = 'u32[144,128]{1,0:T(1,128)}', space=vmem, size = 0x12000, scoped, tag = 'internal scratch']
  #allocation2 [shape = 'f32[16,128]{1,0:T(8,128)}', space=vmem, size = 0x2000, scoped, tag = 'scratch operand']
  %s0 = inlined_call_operand.vmem [shape: f32[2,16,768], index: 0, kind: input, shape index: {}]
  %s1 = inlined_call_operand.vmem [shape: f32[768,128], index: 1, kind: input, shape index: {}]
  %s2 = inlined_call_operand.vmem [shape: f32[1,128], index: 2, kind: input, shape index: {}]
  %s3 = inlined_call_operand.vmem [shape: f32[16,128], index: 3, kind: input, shape index: {}]
  %s4 = inlined_call_operand.vmem [shape: f32[2,1,128], index: 4, kind: input, shape index: {}]
  %s5 = inlined_call_operand.vmem [shape: f32[2,1,128], index: 5, kind: input, shape index: {}]
  %s6 = inlined_call_operand.vmem [shape: f32[2,128,384], index: 6, kind: input, shape index: {}]
  %s7 = inlined_call_operand.vmem [shape: f32[2,1,384], index: 7, kind: input, shape index: {}]
  %s8 = inlined_call_operand.vmem [shape: f32[2,128,128], index: 8, kind: input, shape index: {}]
  %s9 = inlined_call_operand.vmem [shape: f32[2,1,128], index: 9, kind: input, shape index: {}]
  %s10 = inlined_call_operand.vmem [shape: f32[2,1,128], index: 10, kind: input, shape index: {}]
  %s11 = inlined_call_operand.vmem [shape: f32[2,1,128], index: 11, kind: input, shape index: {}]
  %s12 = inlined_call_operand.vmem [shape: f32[2,128,256], index: 12, kind: input, shape index: {}]
  %s13 = inlined_call_operand.vmem [shape: f32[2,1,256], index: 13, kind: input, shape index: {}]
  %s14 = inlined_call_operand.vmem [shape: f32[2,256,128], index: 14, kind: input, shape index: {}]
  %s15 = inlined_call_operand.vmem [shape: f32[2,1,128], index: 15, kind: input, shape index: {}]
  %s16 = inlined_call_operand.vmem [shape: f32[1,128], index: 16, kind: input, shape index: {}]
  %s17 = inlined_call_operand.vmem [shape: f32[1,128], index: 17, kind: input, shape index: {}]
  %s18 = inlined_call_operand.vmem [shape: f32[128,128], index: 18, kind: input, shape index: {}]
  %s19 = inlined_call_operand.vmem [shape: f32[1,128], index: 19, kind: input, shape index: {}]
  %s20 = inlined_call_operand.vmem [shape: f32[128,128], index: 20, kind: input, shape index: {}]
  %s21 = inlined_call_operand.vmem [shape: f32[1,128], index: 21, kind: input, shape index: {}]
  %s22 = inlined_call_operand.vmem [shape: f32[2,16,128], index: 22, kind: output, shape index: {0}]
  %s23 = inlined_call_operand.vmem [shape: f32[2,16,128], index: 23, kind: output, shape index: {1}]
  %24 = xla_tuple %s22, %s23
  %s25 = sld [smem:[#allocation0]]
  $region129: #{scene_graph_vit_forward.1} parent=0
    _
  %s27 = ssub.s32 1, %s25
  %s28 = scalar_select 0, %s27, %s25
  loop: start=0, step=1, limit=4
  $region2: #{scene_graph_vit_forward.1} parent=0 // loop_pre_header
    _
  $region3: #{scene_graph_vit_forward.1} parent=0 // loop_header
    %s30 = sphi 0, %s34
    %p31 = scmp.ge.s32.totalorder %s30, 4
    %s40 = sphi 0, %s42
    %s43 = sphi 0, %s40
    %s44 = sphi 0, %s43
    %s60 = sphi 0, %s44
    %s64 = sphi 0, %s64
    %s66 = sphi 0, %s64
    %s67 = sphi 0, %s66
    %s81 = sphi 0, %s67
    %s85 = sphi 0, %s85
    %s87 = sphi 0, %s85
    %s88 = sphi 0, %s87
    %s102 = sphi 0, %s88
    %s106 = sphi 0, %s106
    %s108 = sphi 0, %s106
    %s109 = sphi 0, %s108
    %s123 = sphi 0, %s109
    %s127 = sphi 0, %s127
    %s129 = sphi 0, %s127
    %s130 = sphi 0, %s129
    %s144 = sphi 0, %s130
    %s148 = sphi 0, %s148
    %s150 = sphi 0, %s148
    %s151 = sphi 0, %s150
    %s165 = sphi 0, %s151
    %s169 = sphi 0, %s169
    %s171 = sphi 0, %s169
    %s172 = sphi 0, %s171
    %s186 = sphi 0, %s172
    %s190 = sphi 0, %s190
    %s192 = sphi 0, %s190
    %s193 = sphi 0, %s192
    %s207 = sphi 0, %s193
    %s211 = sphi 0, %s211
    %s213 = sphi 0, %s211
    %s214 = sphi 0, %s213
    %s228 = sphi 0, %s214
    %s232 = sphi 0, %s232
    %s234 = sphi 0, %s232
    %s235 = sphi 0, %s234
    %s249 = sphi 0, %s235
    %s253 = sphi 0, %s253
    %s255 = sphi 0, %s253
    %s256 = sphi 0, %s255
    %s270 = sphi 0, %s256
    %s274 = sphi 0, %s274
    %s276 = sphi 0, %s274
    %s277 = sphi 0, %s276
    %s291 = sphi 0, %s277
    %s295 = sphi 0, %s295
    %s297 = sphi 0, %s295
    %s298 = sphi 0, %s297
    %s312 = sphi 0, %s298
    %s316 = sphi 0, %s316
    %s318 = sphi 0, %s316
    %s319 = sphi 0, %s318
    %s333 = sphi 0, %s319
    %s337 = sphi 0, %s337
    %s339 = sphi 0, %s337
    %s340 = sphi 0, %s339
    %s354 = sphi 0, %s340
    %s358 = sphi 0, %s358
    %s360 = sphi 0, %s358
    %s361 = sphi 0, %s360
    %s375 = sphi 0, %s361
    %s379 = sphi 0, %s379
    %s381 = sphi 0, %s379
    %s382 = sphi 0, %s381
    %s396 = sphi 0, %s382
    %s400 = sphi 0, %s400
    %s402 = sphi 0, %s400
    %s403 = sphi 0, %s402
    %s417 = sphi 0, %s403
    %s421 = sphi 0, %s421
    %s423 = sphi 0, %s421
    %s424 = sphi 0, %s423
    %s438 = sphi 0, %s424
    %s442 = sphi 0, %s442
    %s444 = sphi 0, %s442
    %s445 = sphi 0, %s444
    %s459 = sphi 0, %s445
    %s463 = sphi 0, %s463
    %s465 = sphi 0, %s463
    %s466 = sphi 0, %s465
    %s480 = sphi 0, %s466
    %s484 = sphi 0, %s484
    %s486 = sphi 0, %s484
    %s487 = sphi 0, %s486
    %s501 = sphi 0, %s487
    %s507 = sphi 0, %s509
    %s510 = sphi 0, %s507
    %s511 = sphi 0, %s510
    %s527 = sphi 0, %s511
    %s533 = sphi 0, %s535
    %s536 = sphi 0, %s533
    %s537 = sphi 0, %s536
    %s553 = sphi 0, %s537
  $region4: #{scene_graph_vit_forward.1} parent=0 // loop_header_branch
    %33 = sbr.rel (%p31) target = $region8
  $region5: #{scene_graph_vit_forward.1} parent=0 // loop_body
    %s35 = ssub.s32 %s30, 1
    %s36 = ssub.s32 %s30, 2
    %s37 = sadd.s32 %s30, 1
    %s38 = ssub.s32 %s30, %s37
    %p39 = scmp.eq.s32.totalorder %s38, 0
    %s41 = sadd.s32 %s40, 1
    %s42 = scalar_select %p39, %s40, %s41
    %p45 = pneg %p39
    %p46 = scmp.eq.s32.totalorder %s30, 1
    %p47 = por %p45, %p46
    %p48 = scmp.ne.s32.totalorder %s40, %s43
    %p49 = scmp.eq.s32.totalorder %s30, 0
    %p50 = por %p48, %p49
    %p51 = scmp.ne.s32.totalorder %s40, %s43
    %p52 = scmp.eq.s32.totalorder %s35, 1
    %p53 = por %p51, %p52
    %p54 = scmp.ne.s32.totalorder %s43, %s44
    %p55 = scmp.eq.s32.totalorder %s35, 0
    %p56 = por %p54, %p55
    %p57 = scmp.ne.s32.totalorder %s43, %s44
    %p58 = scmp.eq.s32.totalorder %s36, 1
    %p59 = por %p57, %p58
    %p61 = scmp.ne.s32.totalorder %s44, %s60
    %p62 = scmp.eq.s32.totalorder %s36, 0
    %p63 = por %p61, %p62
    %s65 = sadd.s32 %s64, 1
    %p68 = scmp.eq.s32.totalorder %s30, 1
    %p69 = scmp.ne.s32.totalorder %s64, %s66
    %p70 = scmp.eq.s32.totalorder %s30, 0
    %p71 = por %p69, %p70
    %p72 = scmp.ne.s32.totalorder %s64, %s66
    %p73 = scmp.eq.s32.totalorder %s35, 1
    %p74 = por %p72, %p73
    %p75 = scmp.ne.s32.totalorder %s66, %s67
    %p76 = scmp.eq.s32.totalorder %s35, 0
    %p77 = por %p75, %p76
    %p78 = scmp.ne.s32.totalorder %s66, %s67
    %p79 = scmp.eq.s32.totalorder %s36, 1
    %p80 = por %p78, %p79
    %p82 = scmp.ne.s32.totalorder %s67, %s81
    %p83 = scmp.eq.s32.totalorder %s36, 0
    %p84 = por %p82, %p83
    %s86 = sadd.s32 %s85, 1
    %p89 = scmp.eq.s32.totalorder %s30, 1
    %p90 = scmp.ne.s32.totalorder %s85, %s87
    %p91 = scmp.eq.s32.totalorder %s30, 0
    %p92 = por %p90, %p91
    %p93 = scmp.ne.s32.totalorder %s85, %s87
    %p94 = scmp.eq.s32.totalorder %s35, 1
    %p95 = por %p93, %p94
    %p96 = scmp.ne.s32.totalorder %s87, %s88
    %p97 = scmp.eq.s32.totalorder %s35, 0
    %p98 = por %p96, %p97
    %p99 = scmp.ne.s32.totalorder %s87, %s88
    %p100 = scmp.eq.s32.totalorder %s36, 1
    %p101 = por %p99, %p100
    %p103 = scmp.ne.s32.totalorder %s88, %s102
    %p104 = scmp.eq.s32.totalorder %s36, 0
    %p105 = por %p103, %p104
    %s107 = sadd.s32 %s106, 1
    %p110 = scmp.eq.s32.totalorder %s30, 1
    %p111 = scmp.ne.s32.totalorder %s106, %s108
    %p112 = scmp.eq.s32.totalorder %s30, 0
    %p113 = por %p111, %p112
    %p114 = scmp.ne.s32.totalorder %s106, %s108
    %p115 = scmp.eq.s32.totalorder %s35, 1
    %p116 = por %p114, %p115
    %p117 = scmp.ne.s32.totalorder %s108, %s109
    %p118 = scmp.eq.s32.totalorder %s35, 0
    %p119 = por %p117, %p118
    %p120 = scmp.ne.s32.totalorder %s108, %s109
    %p121 = scmp.eq.s32.totalorder %s36, 1
    %p122 = por %p120, %p121
    %p124 = scmp.ne.s32.totalorder %s109, %s123
    %p125 = scmp.eq.s32.totalorder %s36, 0
    %p126 = por %p124, %p125
    %s128 = sadd.s32 %s127, 1
    %p131 = scmp.eq.s32.totalorder %s30, 1
    %p132 = scmp.ne.s32.totalorder %s127, %s129
    %p133 = scmp.eq.s32.totalorder %s30, 0
    %p134 = por %p132, %p133
    %p135 = scmp.ne.s32.totalorder %s127, %s129
    %p136 = scmp.eq.s32.totalorder %s35, 1
    %p137 = por %p135, %p136
    %p138 = scmp.ne.s32.totalorder %s129, %s130
    %p139 = scmp.eq.s32.totalorder %s35, 0
    %p140 = por %p138, %p139
    %p141 = scmp.ne.s32.totalorder %s129, %s130
    %p142 = scmp.eq.s32.totalorder %s36, 1
    %p143 = por %p141, %p142
    %p145 = scmp.ne.s32.totalorder %s130, %s144
    %p146 = scmp.eq.s32.totalorder %s36, 0
    %p147 = por %p145, %p146
    %s149 = sadd.s32 %s148, 1
    %p152 = scmp.eq.s32.totalorder %s30, 1
    %p153 = scmp.ne.s32.totalorder %s148, %s150
    %p154 = scmp.eq.s32.totalorder %s30, 0
    %p155 = por %p153, %p154
    %p156 = scmp.ne.s32.totalorder %s148, %s150
    %p157 = scmp.eq.s32.totalorder %s35, 1
    %p158 = por %p156, %p157
    %p159 = scmp.ne.s32.totalorder %s150, %s151
    %p160 = scmp.eq.s32.totalorder %s35, 0
    %p161 = por %p159, %p160
    %p162 = scmp.ne.s32.totalorder %s150, %s151
    %p163 = scmp.eq.s32.totalorder %s36, 1
    %p164 = por %p162, %p163
    %p166 = scmp.ne.s32.totalorder %s151, %s165
    %p167 = scmp.eq.s32.totalorder %s36, 0
    %p168 = por %p166, %p167
    %s170 = sadd.s32 %s169, 1
    %p173 = scmp.eq.s32.totalorder %s30, 1
    %p174 = scmp.ne.s32.totalorder %s169, %s171
    %p175 = scmp.eq.s32.totalorder %s30, 0
    %p176 = por %p174, %p175
    %p177 = scmp.ne.s32.totalorder %s169, %s171
    %p178 = scmp.eq.s32.totalorder %s35, 1
    %p179 = por %p177, %p178
    %p180 = scmp.ne.s32.totalorder %s171, %s172
    %p181 = scmp.eq.s32.totalorder %s35, 0
    %p182 = por %p180, %p181
    %p183 = scmp.ne.s32.totalorder %s171, %s172
    %p184 = scmp.eq.s32.totalorder %s36, 1
    %p185 = por %p183, %p184
    %p187 = scmp.ne.s32.totalorder %s172, %s186
    %p188 = scmp.eq.s32.totalorder %s36, 0
    %p189 = por %p187, %p188
    %s191 = sadd.s32 %s190, 1
    %p194 = scmp.eq.s32.totalorder %s30, 1
    %p195 = scmp.ne.s32.totalorder %s190, %s192
    %p196 = scmp.eq.s32.totalorder %s30, 0
    %p197 = por %p195, %p196
    %p198 = scmp.ne.s32.totalorder %s190, %s192
    %p199 = scmp.eq.s32.totalorder %s35, 1
    %p200 = por %p198, %p199
    %p201 = scmp.ne.s32.totalorder %s192, %s193
    %p202 = scmp.eq.s32.totalorder %s35, 0
    %p203 = por %p201, %p202
    %p204 = scmp.ne.s32.totalorder %s192, %s193
    %p205 = scmp.eq.s32.totalorder %s36, 1
    %p206 = por %p204, %p205
    %p208 = scmp.ne.s32.totalorder %s193, %s207
    %p209 = scmp.eq.s32.totalorder %s36, 0
    %p210 = por %p208, %p209
    %s212 = sadd.s32 %s211, 1
    %p215 = scmp.eq.s32.totalorder %s30, 1
    %p216 = scmp.ne.s32.totalorder %s211, %s213
    %p217 = scmp.eq.s32.totalorder %s30, 0
    %p218 = por %p216, %p217
    %p219 = scmp.ne.s32.totalorder %s211, %s213
    %p220 = scmp.eq.s32.totalorder %s35, 1
    %p221 = por %p219, %p220
    %p222 = scmp.ne.s32.totalorder %s213, %s214
    %p223 = scmp.eq.s32.totalorder %s35, 0
    %p224 = por %p222, %p223
    %p225 = scmp.ne.s32.totalorder %s213, %s214
    %p226 = scmp.eq.s32.totalorder %s36, 1
    %p227 = por %p225, %p226
    %p229 = scmp.ne.s32.totalorder %s214, %s228
    %p230 = scmp.eq.s32.totalorder %s36, 0
    %p231 = por %p229, %p230
    %s233 = sadd.s32 %s232, 1
    %p236 = scmp.eq.s32.totalorder %s30, 1
    %p237 = scmp.ne.s32.totalorder %s232, %s234
    %p238 = scmp.eq.s32.totalorder %s30, 0
    %p239 = por %p237, %p238
    %p240 = scmp.ne.s32.totalorder %s232, %s234
    %p241 = scmp.eq.s32.totalorder %s35, 1
    %p242 = por %p240, %p241
    %p243 = scmp.ne.s32.totalorder %s234, %s235
    %p244 = scmp.eq.s32.totalorder %s35, 0
    %p245 = por %p243, %p244
    %p246 = scmp.ne.s32.totalorder %s234, %s235
    %p247 = scmp.eq.s32.totalorder %s36, 1
    %p248 = por %p246, %p247
    %p250 = scmp.ne.s32.totalorder %s235, %s249
    %p251 = scmp.eq.s32.totalorder %s36, 0
    %p252 = por %p250, %p251
    %s254 = sadd.s32 %s253, 1
    %p257 = scmp.eq.s32.totalorder %s30, 1
    %p258 = scmp.ne.s32.totalorder %s253, %s255
    %p259 = scmp.eq.s32.totalorder %s30, 0
    %p260 = por %p258, %p259
    %p261 = scmp.ne.s32.totalorder %s253, %s255
    %p262 = scmp.eq.s32.totalorder %s35, 1
    %p263 = por %p261, %p262
    %p264 = scmp.ne.s32.totalorder %s255, %s256
    %p265 = scmp.eq.s32.totalorder %s35, 0
    %p266 = por %p264, %p265
    %p267 = scmp.ne.s32.totalorder %s255, %s256
    %p268 = scmp.eq.s32.totalorder %s36, 1
    %p269 = por %p267, %p268
    %p271 = scmp.ne.s32.totalorder %s256, %s270
    %p272 = scmp.eq.s32.totalorder %s36, 0
    %p273 = por %p271, %p272
    %s275 = sadd.s32 %s274, 1
    %p278 = scmp.eq.s32.totalorder %s30, 1
    %p279 = scmp.ne.s32.totalorder %s274, %s276
    %p280 = scmp.eq.s32.totalorder %s30, 0
    %p281 = por %p279, %p280
    %p282 = scmp.ne.s32.totalorder %s274, %s276
    %p283 = scmp.eq.s32.totalorder %s35, 1
    %p284 = por %p282, %p283
    %p285 = scmp.ne.s32.totalorder %s276, %s277
    %p286 = scmp.eq.s32.totalorder %s35, 0
    %p287 = por %p285, %p286
    %p288 = scmp.ne.s32.totalorder %s276, %s277
    %p289 = scmp.eq.s32.totalorder %s36, 1
    %p290 = por %p288, %p289
    %p292 = scmp.ne.s32.totalorder %s277, %s291
    %p293 = scmp.eq.s32.totalorder %s36, 0
    %p294 = por %p292, %p293
    %s296 = sadd.s32 %s295, 1
    %p299 = scmp.eq.s32.totalorder %s30, 1
    %p300 = scmp.ne.s32.totalorder %s295, %s297
    %p301 = scmp.eq.s32.totalorder %s30, 0
    %p302 = por %p300, %p301
    %p303 = scmp.ne.s32.totalorder %s295, %s297
    %p304 = scmp.eq.s32.totalorder %s35, 1
    %p305 = por %p303, %p304
    %p306 = scmp.ne.s32.totalorder %s297, %s298
    %p307 = scmp.eq.s32.totalorder %s35, 0
    %p308 = por %p306, %p307
    %p309 = scmp.ne.s32.totalorder %s297, %s298
    %p310 = scmp.eq.s32.totalorder %s36, 1
    %p311 = por %p309, %p310
    %p313 = scmp.ne.s32.totalorder %s298, %s312
    %p314 = scmp.eq.s32.totalorder %s36, 0
    %p315 = por %p313, %p314
    %s317 = sadd.s32 %s316, 1
    %p320 = scmp.eq.s32.totalorder %s30, 1
    %p321 = scmp.ne.s32.totalorder %s316, %s318
    %p322 = scmp.eq.s32.totalorder %s30, 0
    %p323 = por %p321, %p322
    %p324 = scmp.ne.s32.totalorder %s316, %s318
    %p325 = scmp.eq.s32.totalorder %s35, 1
    %p326 = por %p324, %p325
    %p327 = scmp.ne.s32.totalorder %s318, %s319
    %p328 = scmp.eq.s32.totalorder %s35, 0
    %p329 = por %p327, %p328
    %p330 = scmp.ne.s32.totalorder %s318, %s319
    %p331 = scmp.eq.s32.totalorder %s36, 1
    %p332 = por %p330, %p331
    %p334 = scmp.ne.s32.totalorder %s319, %s333
    %p335 = scmp.eq.s32.totalorder %s36, 0
    %p336 = por %p334, %p335
    %s338 = sadd.s32 %s337, 1
    %p341 = scmp.eq.s32.totalorder %s30, 1
    %p342 = scmp.ne.s32.totalorder %s337, %s339
    %p343 = scmp.eq.s32.totalorder %s30, 0
    %p344 = por %p342, %p343
    %p345 = scmp.ne.s32.totalorder %s337, %s339
    %p346 = scmp.eq.s32.totalorder %s35, 1
    %p347 = por %p345, %p346
    %p348 = scmp.ne.s32.totalorder %s339, %s340
    %p349 = scmp.eq.s32.totalorder %s35, 0
    %p350 = por %p348, %p349
    %p351 = scmp.ne.s32.totalorder %s339, %s340
    %p352 = scmp.eq.s32.totalorder %s36, 1
    %p353 = por %p351, %p352
    %p355 = scmp.ne.s32.totalorder %s340, %s354
    %p356 = scmp.eq.s32.totalorder %s36, 0
    %p357 = por %p355, %p356
    %s359 = sadd.s32 %s358, 1
    %p362 = scmp.eq.s32.totalorder %s30, 1
    %p363 = scmp.ne.s32.totalorder %s358, %s360
    %p364 = scmp.eq.s32.totalorder %s30, 0
    %p365 = por %p363, %p364
    %p366 = scmp.ne.s32.totalorder %s358, %s360
    %p367 = scmp.eq.s32.totalorder %s35, 1
    %p368 = por %p366, %p367
    %p369 = scmp.ne.s32.totalorder %s360, %s361
    %p370 = scmp.eq.s32.totalorder %s35, 0
    %p371 = por %p369, %p370
    %p372 = scmp.ne.s32.totalorder %s360, %s361
    %p373 = scmp.eq.s32.totalorder %s36, 1
    %p374 = por %p372, %p373
    %p376 = scmp.ne.s32.totalorder %s361, %s375
    %p377 = scmp.eq.s32.totalorder %s36, 0
    %p378 = por %p376, %p377
    %s380 = sadd.s32 %s379, 1
    %p383 = scmp.eq.s32.totalorder %s30, 1
    %p384 = scmp.ne.s32.totalorder %s379, %s381
    %p385 = scmp.eq.s32.totalorder %s30, 0
    %p386 = por %p384, %p385
    %p387 = scmp.ne.s32.totalorder %s379, %s381
    %p388 = scmp.eq.s32.totalorder %s35, 1
    %p389 = por %p387, %p388
    %p390 = scmp.ne.s32.totalorder %s381, %s382
    %p391 = scmp.eq.s32.totalorder %s35, 0
    %p392 = por %p390, %p391
    %p393 = scmp.ne.s32.totalorder %s381, %s382
    %p394 = scmp.eq.s32.totalorder %s36, 1
    %p395 = por %p393, %p394
    %p397 = scmp.ne.s32.totalorder %s382, %s396
    %p398 = scmp.eq.s32.totalorder %s36, 0
    %p399 = por %p397, %p398
    %s401 = sadd.s32 %s400, 1
    %p404 = scmp.eq.s32.totalorder %s30, 1
    %p405 = scmp.ne.s32.totalorder %s400, %s402
    %p406 = scmp.eq.s32.totalorder %s30, 0
    %p407 = por %p405, %p406
    %p408 = scmp.ne.s32.totalorder %s400, %s402
    %p409 = scmp.eq.s32.totalorder %s35, 1
    %p410 = por %p408, %p409
    %p411 = scmp.ne.s32.totalorder %s402, %s403
    %p412 = scmp.eq.s32.totalorder %s35, 0
    %p413 = por %p411, %p412
    %p414 = scmp.ne.s32.totalorder %s402, %s403
    %p415 = scmp.eq.s32.totalorder %s36, 1
    %p416 = por %p414, %p415
    %p418 = scmp.ne.s32.totalorder %s403, %s417
    %p419 = scmp.eq.s32.totalorder %s36, 0
    %p420 = por %p418, %p419
    %s422 = sadd.s32 %s421, 1
    %p425 = scmp.eq.s32.totalorder %s30, 1
    %p426 = scmp.ne.s32.totalorder %s421, %s423
    %p427 = scmp.eq.s32.totalorder %s30, 0
    %p428 = por %p426, %p427
    %p429 = scmp.ne.s32.totalorder %s421, %s423
    %p430 = scmp.eq.s32.totalorder %s35, 1
    %p431 = por %p429, %p430
    %p432 = scmp.ne.s32.totalorder %s423, %s424
    %p433 = scmp.eq.s32.totalorder %s35, 0
    %p434 = por %p432, %p433
    %p435 = scmp.ne.s32.totalorder %s423, %s424
    %p436 = scmp.eq.s32.totalorder %s36, 1
    %p437 = por %p435, %p436
    %p439 = scmp.ne.s32.totalorder %s424, %s438
    %p440 = scmp.eq.s32.totalorder %s36, 0
    %p441 = por %p439, %p440
    %s443 = sadd.s32 %s442, 1
    %p446 = scmp.eq.s32.totalorder %s30, 1
    %p447 = scmp.ne.s32.totalorder %s442, %s444
    %p448 = scmp.eq.s32.totalorder %s30, 0
    %p449 = por %p447, %p448
    %p450 = scmp.ne.s32.totalorder %s442, %s444
    %p451 = scmp.eq.s32.totalorder %s35, 1
    %p452 = por %p450, %p451
    %p453 = scmp.ne.s32.totalorder %s444, %s445
    %p454 = scmp.eq.s32.totalorder %s35, 0
    %p455 = por %p453, %p454
    %p456 = scmp.ne.s32.totalorder %s444, %s445
    %p457 = scmp.eq.s32.totalorder %s36, 1
    %p458 = por %p456, %p457
    %p460 = scmp.ne.s32.totalorder %s445, %s459
    %p461 = scmp.eq.s32.totalorder %s36, 0
    %p462 = por %p460, %p461
    %s464 = sadd.s32 %s463, 1
    %p467 = scmp.eq.s32.totalorder %s30, 1
    %p468 = scmp.ne.s32.totalorder %s463, %s465
    %p469 = scmp.eq.s32.totalorder %s30, 0
    %p470 = por %p468, %p469
    %p471 = scmp.ne.s32.totalorder %s463, %s465
    %p472 = scmp.eq.s32.totalorder %s35, 1
    %p473 = por %p471, %p472
    %p474 = scmp.ne.s32.totalorder %s465, %s466
    %p475 = scmp.eq.s32.totalorder %s35, 0
    %p476 = por %p474, %p475
    %p477 = scmp.ne.s32.totalorder %s465, %s466
    %p478 = scmp.eq.s32.totalorder %s36, 1
    %p479 = por %p477, %p478
    %p481 = scmp.ne.s32.totalorder %s466, %s480
    %p482 = scmp.eq.s32.totalorder %s36, 0
    %p483 = por %p481, %p482
    %s485 = sadd.s32 %s484, 1
    %p488 = scmp.eq.s32.totalorder %s30, 1
    %p489 = scmp.ne.s32.totalorder %s484, %s486
    %p490 = scmp.eq.s32.totalorder %s30, 0
    %p491 = por %p489, %p490
    %p492 = scmp.ne.s32.totalorder %s484, %s486
    %p493 = scmp.eq.s32.totalorder %s35, 1
    %p494 = por %p492, %p493
    %p495 = scmp.ne.s32.totalorder %s486, %s487
    %p496 = scmp.eq.s32.totalorder %s35, 0
    %p497 = por %p495, %p496
    %p498 = scmp.ne.s32.totalorder %s486, %s487
    %p499 = scmp.eq.s32.totalorder %s36, 1
    %p500 = por %p498, %p499
    %p502 = scmp.ne.s32.totalorder %s487, %s501
    %p503 = scmp.eq.s32.totalorder %s36, 0
    %p504 = por %p502, %p503
    %s505 = ssub.s32 %s30, %s37
    %p506 = scmp.eq.s32.totalorder %s505, 0
    %s508 = sadd.s32 %s507, 1
    %s509 = scalar_select %p506, %s507, %s508
    %p512 = pneg %p506
    %p513 = scmp.eq.s32.totalorder %s30, 1
    %p514 = por %p512, %p513
    %p515 = scmp.ne.s32.totalorder %s507, %s510
    %p516 = scmp.eq.s32.totalorder %s30, 0
    %p517 = por %p515, %p516
    %p518 = scmp.ne.s32.totalorder %s507, %s510
    %p519 = scmp.eq.s32.totalorder %s35, 1
    %p520 = por %p518, %p519
    %p521 = scmp.ne.s32.totalorder %s510, %s511
    %p522 = scmp.eq.s32.totalorder %s35, 0
    %p523 = por %p521, %p522
    %p524 = scmp.ne.s32.totalorder %s510, %s511
    %p525 = scmp.eq.s32.totalorder %s36, 1
    %p526 = por %p524, %p525
    %p528 = scmp.ne.s32.totalorder %s511, %s527
    %p529 = scmp.eq.s32.totalorder %s36, 0
    %p530 = por %p528, %p529
    %s531 = ssub.s32 %s30, %s37
    %p532 = scmp.eq.s32.totalorder %s531, 0
    %s534 = sadd.s32 %s533, 1
    %s535 = scalar_select %p532, %s533, %s534
    %p538 = pneg %p532
    %p539 = scmp.eq.s32.totalorder %s30, 1
    %p540 = por %p538, %p539
    %p541 = scmp.ne.s32.totalorder %s533, %s536
    %p542 = scmp.eq.s32.totalorder %s30, 0
    %p543 = por %p541, %p542
    %p544 = scmp.ne.s32.totalorder %s533, %s536
    %p545 = scmp.eq.s32.totalorder %s35, 1
    %p546 = por %p544, %p545
    %p547 = scmp.ne.s32.totalorder %s536, %s537
    %p548 = scmp.eq.s32.totalorder %s35, 0
    %p549 = por %p547, %p548
    %p550 = scmp.ne.s32.totalorder %s536, %s537
    %p551 = scmp.eq.s32.totalorder %s36, 1
    %p552 = por %p550, %p551
    %p554 = scmp.ne.s32.totalorder %s537, %s553
    %p555 = scmp.eq.s32.totalorder %s36, 0
    %p556 = por %p554, %p555
    %p557 = scmp.le.s32.totalorder 1, %s30
    %p558 = scmp.lt.s32.totalorder %s30, 3
    %p559 = pnand %p557, %p558
    %p560 = pneg %p559
    // Predicated region
    $region9: #{scene_graph_vit_forward.1} parent=5 // pred_check
      _
    $region10: #{scene_graph_vit_forward.1} parent=5 // pred_check_branch
      %562 = sbr.rel (%p559) target = $region12
    $region11: #{scene_graph_vit_forward.1} parent=5 // pred_region
      %s563 = ssub.s32 %s30, 1
      // Predicated region
      $region13: #{scene_graph_vit_forward.1} parent=11 // pred_check
        %p564 = pneg %p77
      $region14: #{scene_graph_vit_forward.1} parent=11 // pred_check_branch
        %566 = sbr.rel (%p564) target = $region16
      $region15: #{scene_graph_vit_forward.1} parent=11 // pred_region
        _
      $region16: #{scene_graph_vit_forward.1} parent=11 // pred_fallthru
        _
      // Predicated region
      $region17: #{scene_graph_vit_forward.1} parent=11 // pred_check
        %p567 = pneg %p98
      $region18: #{scene_graph_vit_forward.1} parent=11 // pred_check_branch
        %569 = sbr.rel (%p567) target = $region20
      $region19: #{scene_graph_vit_forward.1} parent=11 // pred_region
        _
      $region20: #{scene_graph_vit_forward.1} parent=11 // pred_fallthru
        _
      // Predicated region
      $region21: #{scene_graph_vit_forward.1} parent=11 // pred_check
        %p570 = pneg %p119
      $region22: #{scene_graph_vit_forward.1} parent=11 // pred_check_branch
        %572 = sbr.rel (%p570) target = $region24
      $region23: #{scene_graph_vit_forward.1} parent=11 // pred_region
        _
      $region24: #{scene_graph_vit_forward.1} parent=11 // pred_fallthru
        _
      // Predicated region
      $region25: #{scene_graph_vit_forward.1} parent=11 // pred_check
        %p573 = pneg %p140
      $region26: #{scene_graph_vit_forward.1} parent=11 // pred_check_branch
        %575 = sbr.rel (%p573) target = $region28
      $region27: #{scene_graph_vit_forward.1} parent=11 // pred_region
        _
      $region28: #{scene_graph_vit_forward.1} parent=11 // pred_fallthru
        _
      // Predicated region
      $region29: #{scene_graph_vit_forward.1} parent=11 // pred_check
        %p576 = pneg %p161
      $region30: #{scene_graph_vit_forward.1} parent=11 // pred_check_branch
        %578 = sbr.rel (%p576) target = $region32
      $region31: #{scene_graph_vit_forward.1} parent=11 // pred_region
        _
      $region32: #{scene_graph_vit_forward.1} parent=11 // pred_fallthru
        _
      // Predicated region
      $region33: #{scene_graph_vit_forward.1} parent=11 // pred_check
        %p579 = pneg %p182
      $region34: #{scene_graph_vit_forward.1} parent=11 // pred_check_branch
        %581 = sbr.rel (%p579) target = $region36
      $region35: #{scene_graph_vit_forward.1} parent=11 // pred_region
        _
      $region36: #{scene_graph_vit_forward.1} parent=11 // pred_fallthru
        _
      // Predicated region
      $region37: #{scene_graph_vit_forward.1} parent=11 // pred_check
        %p582 = pneg %p203
      $region38: #{scene_graph_vit_forward.1} parent=11 // pred_check_branch
        %584 = sbr.rel (%p582) target = $region40
      $region39: #{scene_graph_vit_forward.1} parent=11 // pred_region
        _
      $region40: #{scene_graph_vit_forward.1} parent=11 // pred_fallthru
        _
      // Predicated region
      $region41: #{scene_graph_vit_forward.1} parent=11 // pred_check
        %p585 = pneg %p224
      $region42: #{scene_graph_vit_forward.1} parent=11 // pred_check_branch
        %587 = sbr.rel (%p585) target = $region44
      $region43: #{scene_graph_vit_forward.1} parent=11 // pred_region
        _
      $region44: #{scene_graph_vit_forward.1} parent=11 // pred_fallthru
        _
      // Predicated region
      $region45: #{scene_graph_vit_forward.1} parent=11 // pred_check
        %p588 = pneg %p245
      $region46: #{scene_graph_vit_forward.1} parent=11 // pred_check_branch
        %590 = sbr.rel (%p588) target = $region48
      $region47: #{scene_graph_vit_forward.1} parent=11 // pred_region
        _
      $region48: #{scene_graph_vit_forward.1} parent=11 // pred_fallthru
        _
      // Predicated region
      $region49: #{scene_graph_vit_forward.1} parent=11 // pred_check
        %p591 = pneg %p266
      $region50: #{scene_graph_vit_forward.1} parent=11 // pred_check_branch
        %593 = sbr.rel (%p591) target = $region52
      $region51: #{scene_graph_vit_forward.1} parent=11 // pred_region
        _
      $region52: #{scene_graph_vit_forward.1} parent=11 // pred_fallthru
        _
      // Predicated region
      $region53: #{scene_graph_vit_forward.1} parent=11 // pred_check
        %p594 = pneg %p287
      $region54: #{scene_graph_vit_forward.1} parent=11 // pred_check_branch
        %596 = sbr.rel (%p594) target = $region56
      $region55: #{scene_graph_vit_forward.1} parent=11 // pred_region
        _
      $region56: #{scene_graph_vit_forward.1} parent=11 // pred_fallthru
        _
      // Predicated region
      $region57: #{scene_graph_vit_forward.1} parent=11 // pred_check
        %p597 = pneg %p308
      $region58: #{scene_graph_vit_forward.1} parent=11 // pred_check_branch
        %599 = sbr.rel (%p597) target = $region60
      $region59: #{scene_graph_vit_forward.1} parent=11 // pred_region
        _
      $region60: #{scene_graph_vit_forward.1} parent=11 // pred_fallthru
        _
      // Predicated region
      $region61: #{scene_graph_vit_forward.1} parent=11 // pred_check
        %p600 = pneg %p329
      $region62: #{scene_graph_vit_forward.1} parent=11 // pred_check_branch
        %602 = sbr.rel (%p600) target = $region64
      $region63: #{scene_graph_vit_forward.1} parent=11 // pred_region
        _
      $region64: #{scene_graph_vit_forward.1} parent=11 // pred_fallthru
        _
      // Predicated region
      $region65: #{scene_graph_vit_forward.1} parent=11 // pred_check
        %p603 = pneg %p350
      $region66: #{scene_graph_vit_forward.1} parent=11 // pred_check_branch
        %605 = sbr.rel (%p603) target = $region68
      $region67: #{scene_graph_vit_forward.1} parent=11 // pred_region
        _
      $region68: #{scene_graph_vit_forward.1} parent=11 // pred_fallthru
        _
      // Predicated region
      $region69: #{scene_graph_vit_forward.1} parent=11 // pred_check
        %p606 = pneg %p371
      $region70: #{scene_graph_vit_forward.1} parent=11 // pred_check_branch
        %608 = sbr.rel (%p606) target = $region72
      $region71: #{scene_graph_vit_forward.1} parent=11 // pred_region
        _
      $region72: #{scene_graph_vit_forward.1} parent=11 // pred_fallthru
        _
      // Predicated region
      $region73: #{scene_graph_vit_forward.1} parent=11 // pred_check
        %p609 = pneg %p392
      $region74: #{scene_graph_vit_forward.1} parent=11 // pred_check_branch
        %611 = sbr.rel (%p609) target = $region76
      $region75: #{scene_graph_vit_forward.1} parent=11 // pred_region
        _
      $region76: #{scene_graph_vit_forward.1} parent=11 // pred_fallthru
        _
      // Predicated region
      $region77: #{scene_graph_vit_forward.1} parent=11 // pred_check
        %p612 = pneg %p413
      $region78: #{scene_graph_vit_forward.1} parent=11 // pred_check_branch
        %614 = sbr.rel (%p612) target = $region80
      $region79: #{scene_graph_vit_forward.1} parent=11 // pred_region
        _
      $region80: #{scene_graph_vit_forward.1} parent=11 // pred_fallthru
        _
      // Predicated region
      $region81: #{scene_graph_vit_forward.1} parent=11 // pred_check
        %p615 = pneg %p434
      $region82: #{scene_graph_vit_forward.1} parent=11 // pred_check_branch
        %617 = sbr.rel (%p615) target = $region84
      $region83: #{scene_graph_vit_forward.1} parent=11 // pred_region
        _
      $region84: #{scene_graph_vit_forward.1} parent=11 // pred_fallthru
        _
      // Predicated region
      $region85: #{scene_graph_vit_forward.1} parent=11 // pred_check
        %p618 = pneg %p455
      $region86: #{scene_graph_vit_forward.1} parent=11 // pred_check_branch
        %620 = sbr.rel (%p618) target = $region88
      $region87: #{scene_graph_vit_forward.1} parent=11 // pred_region
        _
      $region88: #{scene_graph_vit_forward.1} parent=11 // pred_fallthru
        _
      // Predicated region
      $region89: #{scene_graph_vit_forward.1} parent=11 // pred_check
        %p621 = pneg %p476
      $region90: #{scene_graph_vit_forward.1} parent=11 // pred_check_branch
        %623 = sbr.rel (%p621) target = $region92
      $region91: #{scene_graph_vit_forward.1} parent=11 // pred_region
        _
      $region92: #{scene_graph_vit_forward.1} parent=11 // pred_fallthru
        _
      // Predicated region
      $region93: #{scene_graph_vit_forward.1} parent=11 // pred_check
        %p624 = pneg %p497
      $region94: #{scene_graph_vit_forward.1} parent=11 // pred_check_branch
        %626 = sbr.rel (%p624) target = $region96
      $region95: #{scene_graph_vit_forward.1} parent=11 // pred_region
        _
      $region96: #{scene_graph_vit_forward.1} parent=11 // pred_fallthru
        _
    $region12: #{scene_graph_vit_forward.1} parent=5 // pred_fallthru
      _
    %p627 = scmp.lt.s32.totalorder %s30, 2
    // Predicated region
    $region97: #{scene_graph_vit_forward.1} parent=5 // pred_check
      %p628 = pneg %p627
    $region98: #{scene_graph_vit_forward.1} parent=5 // pred_check_branch
      %630 = sbr.rel (%p628) target = $region100
    $region99: #{scene_graph_vit_forward.1} parent=5 // pred_region
      // Predicated region
      $region101: #{scene_graph_vit_forward.1} parent=99 // pred_check
        %p631 = pneg %p50
      $region102: #{scene_graph_vit_forward.1} parent=99 // pred_check_branch
        %633 = sbr.rel (%p631) target = $region104
      $region103: #{scene_graph_vit_forward.1} parent=99 // pred_region
        %p634 = scmp.lt.s32.totalorder %s30, 1
        %s635 = scalar_select %p634, %s30, 1
        %s636 = smul.addr %s635, 12
        %s637 = smul.addr %s636, 8
        %s638 = scalar_lea.vmem %s0, %s637
      $region104: #{scene_graph_vit_forward.1} parent=99 // pred_fallthru
        _
    $region100: #{scene_graph_vit_forward.1} parent=5 // pred_fallthru
      _
    %p639 = scmp.le.s32.totalorder 1, %s30
    %p640 = scmp.lt.s32.totalorder %s30, 3
    %p641 = pnand %p639, %p640
    %p642 = pneg %p641
    // Predicated region
    $region105: #{scene_graph_vit_forward.1} parent=5 // pred_check
      _
    $region106: #{scene_graph_vit_forward.1} parent=5 // pred_check_branch
      %644 = sbr.rel (%p641) target = $region108
    $region107: #{scene_graph_vit_forward.1} parent=5 // pred_region
      %s645 = ssub.s32 %s30, 1
      %p646 = scmp.lt.s32.totalorder %s35, 1
      %s647 = scalar_select %p646, %s35, 1
      %s648 = smul.addr %s647, 12
      %s649 = smul.addr %s648, 8
      %s650 = scalar_lea.vmem %s0, %s649
      %p651 = pneg %p56
      %p652 = pneg %p53
      %p653 = pneg %p77
      %p654 = pneg %p74
      %p655 = pneg %p98
      %p656 = pneg %p95
      %p657 = pneg %p119
      %p658 = pneg %p116
      %p659 = pneg %p140
      %p660 = pneg %p137
      %p661 = pneg %p161
      %p662 = pneg %p158
      %p663 = pneg %p182
      %p664 = pneg %p179
      %p665 = pneg %p203
      %p666 = pneg %p200
      %p667 = pneg %p224
      %p668 = pneg %p221
      %p669 = pneg %p245
      %p670 = pneg %p242
      %p671 = pneg %p266
      %p672 = pneg %p263
      %p673 = pneg %p287
      %p674 = pneg %p284
      %p675 = pneg %p308
      %p676 = pneg %p305
      %p677 = pneg %p329
      %p678 = pneg %p326
      %p679 = pneg %p350
      %p680 = pneg %p347
      %p681 = pneg %p371
      %p682 = pneg %p368
      %p683 = pneg %p392
      %p684 = pneg %p389
      %p685 = pneg %p413
      %p686 = pneg %p410
      %p687 = pneg %p434
      %p688 = pneg %p431
      %p689 = pneg %p455
      %p690 = pneg %p452
      %p691 = pneg %p476
      %p692 = pneg %p473
      %p693 = pneg %p497
      %p694 = pneg %p494
      %p695 = pneg %p523
      %p696 = pneg %p520
      %p697 = scmp.lt.s32.totalorder %s35, 1
      %s698 = scalar_select %p697, %s35, 1
      %s699 = smul.addr %s698, 2
      %s700 = smul.addr %s699, 8
      %s701 = scalar_lea.vmem %s22, %s700
      %p702 = pneg %p549
      %p703 = pneg %p546
      %p704 = scmp.lt.s32.totalorder %s35, 1
      %s705 = scalar_select %p704, %s35, 1
      %s706 = smul.addr %s705, 2
      %s707 = smul.addr %s706, 8
      %s708 = scalar_lea.vmem %s23, %s707
      %p709 = scmp.lt.s32.totalorder %s35, 1
      %s710 = scalar_select %p709, %s35, 1
      %s711 = smul.addr %s710, 12
      %s712 = smul.addr %s711, 8
      %s713 = scalar_lea.vmem %s0, %s712
      %p714 = scmp.lt.s32.totalorder %s35, 1
      %s715 = scalar_select %p714, %s35, 1
      %s716 = smul.addr %s715, 2
      %s717 = smul.addr %s716, 8
      %s718 = scalar_lea.vmem %s22, %s717
      %p719 = scmp.lt.s32.totalorder %s35, 1
      %s720 = scalar_select %p719, %s35, 1
      %s721 = smul.addr %s720, 2
      %s722 = smul.addr %s721, 8
      %s723 = scalar_lea.vmem %s23, %s722
      %v724 = vld [vmem:[%s713] sm:$0xff]
      %v725 = vld [vmem:[%s713 + $0x8] sm:$0xff]
      %v726 = vld [vmem:[%s713 + $0x10] sm:$0xff]
      %v727 = vld [vmem:[%s713 + $0x18] sm:$0xff]
      %v728 = vld [vmem:[%s713 + $0x20] sm:$0xff]
      %v729 = vld [vmem:[%s713 + $0x28] sm:$0xff]
      %v730 = vld [vmem:[%s713 + $0x30] sm:$0xff]
      %v731 = vld [vmem:[%s713 + $0x38] sm:$0xff]
      %v732 = vld [vmem:[%s713 + $0x40] sm:$0xff]
      %v733 = vld [vmem:[%s713 + $0x48] sm:$0xff]
      %v734 = vld [vmem:[%s713 + $0x50] sm:$0xff]
      %v735 = vld [vmem:[%s713 + $0x58] sm:$0xff]
      %v736 = vld [vmem:[%s1] sm:$0xff]
      %v737 = vld [vmem:[%s1 + $0x8] sm:$0xff]
      %v738 = vld [vmem:[%s1 + $0x10] sm:$0xff]
      %v739 = vld [vmem:[%s1 + $0x18] sm:$0xff]
      %v740 = vld [vmem:[%s1 + $0x20] sm:$0xff]
      %v741 = vld [vmem:[%s1 + $0x28] sm:$0xff]
      %v742 = vld [vmem:[%s1 + $0x30] sm:$0xff]
      %v743 = vld [vmem:[%s1 + $0x38] sm:$0xff]
      %v744 = vld [vmem:[%s1 + $0x40] sm:$0xff]
      %v745 = vld [vmem:[%s1 + $0x48] sm:$0xff]
      %v746 = vld [vmem:[%s1 + $0x50] sm:$0xff]
      %v747 = vld [vmem:[%s1 + $0x58] sm:$0xff]
      %v748 = vld [vmem:[%s1 + $0x60] sm:$0xff]
      %v749 = vld [vmem:[%s1 + $0x68] sm:$0xff]
      %v750 = vld [vmem:[%s1 + $0x70] sm:$0xff]
      %v751 = vld [vmem:[%s1 + $0x78] sm:$0xff]
      %v752 = vld [vmem:[%s1 + $0x80] sm:$0xff]
      %v753 = vld [vmem:[%s1 + $0x88] sm:$0xff]
      %v754 = vld [vmem:[%s1 + $0x90] sm:$0xff]
      %v755 = vld [vmem:[%s1 + $0x98] sm:$0xff]
      %v756 = vld [vmem:[%s1 + $0xa0] sm:$0xff]
      %v757 = vld [vmem:[%s1 + $0xa8] sm:$0xff]
      %v758 = vld [vmem:[%s1 + $0xb0] sm:$0xff]
      %v759 = vld [vmem:[%s1 + $0xb8] sm:$0xff]
      %v760 = vld [vmem:[%s1 + $0xc0] sm:$0xff]
      %v761 = vld [vmem:[%s1 + $0xc8] sm:$0xff]
      %v762 = vld [vmem:[%s1 + $0xd0] sm:$0xff]
      %v763 = vld [vmem:[%s1 + $0xd8] sm:$0xff]
      %v764 = vld [vmem:[%s1 + $0xe0] sm:$0xff]
      %v765 = vld [vmem:[%s1 + $0xe8] sm:$0xff]
      %v766 = vld [vmem:[%s1 + $0xf0] sm:$0xff]
      %v767 = vld [vmem:[%s1 + $0xf8] sm:$0xff]
      %v768 = vld [vmem:[%s1 + $0x100] sm:$0xff]
      %v769 = vld [vmem:[%s1 + $0x108] sm:$0xff]
      %v770 = vld [vmem:[%s1 + $0x110] sm:$0xff]
      %v771 = vld [vmem:[%s1 + $0x118] sm:$0xff]
      %v772 = vld [vmem:[%s1 + $0x120] sm:$0xff]
      %v773 = vld [vmem:[%s1 + $0x128] sm:$0xff]
      %v774 = vld [vmem:[%s1 + $0x130] sm:$0xff]
      %v775 = vld [vmem:[%s1 + $0x138] sm:$0xff]
      %v776 = vld [vmem:[%s1 + $0x140] sm:$0xff]
      %v777 = vld [vmem:[%s1 + $0x148] sm:$0xff]
      %v778 = vld [vmem:[%s1 + $0x150] sm:$0xff]
      %v779 = vld [vmem:[%s1 + $0x158] sm:$0xff]
      %v780 = vld [vmem:[%s1 + $0x160] sm:$0xff]
      %v781 = vld [vmem:[%s1 + $0x168] sm:$0xff]
      %v782 = vld [vmem:[%s1 + $0x170] sm:$0xff]
      %v783 = vld [vmem:[%s1 + $0x178] sm:$0xff]
      %v784 = vld [vmem:[%s1 + $0x180] sm:$0xff]
      %v785 = vld [vmem:[%s1 + $0x188] sm:$0xff]
      %v786 = vld [vmem:[%s1 + $0x190] sm:$0xff]
      %v787 = vld [vmem:[%s1 + $0x198] sm:$0xff]
      %v788 = vld [vmem:[%s1 + $0x1a0] sm:$0xff]
      %v789 = vld [vmem:[%s1 + $0x1a8] sm:$0xff]
      %v790 = vld [vmem:[%s1 + $0x1b0] sm:$0xff]
      %v791 = vld [vmem:[%s1 + $0x1b8] sm:$0xff]
      %v792 = vld [vmem:[%s1 + $0x1c0] sm:$0xff]
      %v793 = vld [vmem:[%s1 + $0x1c8] sm:$0xff]
      %v794 = vld [vmem:[%s1 + $0x1d0] sm:$0xff]
      %v795 = vld [vmem:[%s1 + $0x1d8] sm:$0xff]
      %v796 = vld [vmem:[%s1 + $0x1e0] sm:$0xff]
      %v797 = vld [vmem:[%s1 + $0x1e8] sm:$0xff]
      %v798 = vld [vmem:[%s1 + $0x1f0] sm:$0xff]
      %v799 = vld [vmem:[%s1 + $0x1f8] sm:$0xff]
      %v800 = vld [vmem:[%s1 + $0x200] sm:$0xff]
      %v801 = vld [vmem:[%s1 + $0x208] sm:$0xff]
      %v802 = vld [vmem:[%s1 + $0x210] sm:$0xff]
      %v803 = vld [vmem:[%s1 + $0x218] sm:$0xff]
      %v804 = vld [vmem:[%s1 + $0x220] sm:$0xff]
      %v805 = vld [vmem:[%s1 + $0x228] sm:$0xff]
      %v806 = vld [vmem:[%s1 + $0x230] sm:$0xff]
      %v807 = vld [vmem:[%s1 + $0x238] sm:$0xff]
      %v808 = vld [vmem:[%s1 + $0x240] sm:$0xff]
      %v809 = vld [vmem:[%s1 + $0x248] sm:$0xff]
      %v810 = vld [vmem:[%s1 + $0x250] sm:$0xff]
      %v811 = vld [vmem:[%s1 + $0x258] sm:$0xff]
      %v812 = vld [vmem:[%s1 + $0x260] sm:$0xff]
      %v813 = vld [vmem:[%s1 + $0x268] sm:$0xff]
      %v814 = vld [vmem:[%s1 + $0x270] sm:$0xff]
      %v815 = vld [vmem:[%s1 + $0x278] sm:$0xff]
      %v816 = vld [vmem:[%s1 + $0x280] sm:$0xff]
      %v817 = vld [vmem:[%s1 + $0x288] sm:$0xff]
      %v818 = vld [vmem:[%s1 + $0x290] sm:$0xff]
      %v819 = vld [vmem:[%s1 + $0x298] sm:$0xff]
      %v820 = vld [vmem:[%s1 + $0x2a0] sm:$0xff]
      %v821 = vld [vmem:[%s1 + $0x2a8] sm:$0xff]
      %v822 = vld [vmem:[%s1 + $0x2b0] sm:$0xff]
      %v823 = vld [vmem:[%s1 + $0x2b8] sm:$0xff]
      %v824 = vld [vmem:[%s1 + $0x2c0] sm:$0xff]
      %v825 = vld [vmem:[%s1 + $0x2c8] sm:$0xff]
      %v826 = vld [vmem:[%s1 + $0x2d0] sm:$0xff]
      %v827 = vld [vmem:[%s1 + $0x2d8] sm:$0xff]
      %v828 = vld [vmem:[%s1 + $0x2e0] sm:$0xff]
      %v829 = vld [vmem:[%s1 + $0x2e8] sm:$0xff]
      %v830 = vld [vmem:[%s1 + $0x2f0] sm:$0xff]
      %v831 = vld [vmem:[%s1 + $0x2f8] sm:$0xff]
      %v832 = vld [vmem:[%s2] sm:$0x1]
      %v834 = vlaneseq
      %v835 = vshrl.u32 %v834, 7
      %v836 = vsub.s32 0, %v835
      %v837 = vrot.slane %v832, %v836
      %839 = vmatprep.subr.mxu0 0.0
      %840 = vmatpush1.msra.mxu0 %v736
      %841 = vmatprep.subr.mxu0 0.0
      %842 = vmatpush1.msra.mxu0 %v737
      %843 = vmatprep.subr.mxu0 0.0
      %844 = vmatpush1.msra.mxu0 %v738
      %845 = vmatprep.subr.mxu0 0.0
      %846 = vmatpush1.msra.mxu0 %v739
      %847 = vmatprep.subr.mxu0 0.0
      %848 = vmatpush1.msra.mxu0 %v740
      %849 = vmatprep.subr.mxu0 0.0
      %850 = vmatpush1.msra.mxu0 %v741
      %851 = vmatprep.subr.mxu0 0.0
      %852 = vmatpush1.msra.mxu0 %v742
      %853 = vmatprep.subr.mxu0 0.0
      %854 = vmatpush1.msra.mxu0 %v743
      %855 = vmatprep.subr.mxu0 0.0
      %856 = vmatpush1.msra.mxu0 %v744
      %857 = vmatprep.subr.mxu0 0.0
      %858 = vmatpush1.msra.mxu0 %v745
      %859 = vmatprep.subr.mxu0 0.0
      %860 = vmatpush1.msra.mxu0 %v746
      %861 = vmatprep.subr.mxu0 0.0
      %862 = vmatpush1.msra.mxu0 %v747
      %863 = vmatprep.subr.mxu0 0.0
      %864 = vmatpush1.msra.mxu0 %v748
      %865 = vmatprep.subr.mxu0 0.0
      %866 = vmatpush1.msra.mxu0 %v749
      %867 = vmatprep.subr.mxu0 0.0
      %868 = vmatpush1.msra.mxu0 %v750
      %869 = vmatprep.subr.mxu0 0.0
      %870 = vmatpush1.msra.mxu0 %v751
      %871 = vmatprep.subr.mxu0 0.0
      %872 = vmatpush1.msra.mxu0 %v752
      %873 = vmatprep.subr.mxu0 0.0
      %874 = vmatpush1.msra.mxu0 %v753
      %875 = vmatprep.subr.mxu0 0.0
      %876 = vmatpush1.msra.mxu0 %v754
      %877 = vmatprep.subr.mxu0 0.0
      %878 = vmatpush1.msra.mxu0 %v755
      %879 = vmatprep.subr.mxu0 0.0
      %880 = vmatpush1.msra.mxu0 %v756
      %881 = vmatprep.subr.mxu0 0.0
      %882 = vmatpush1.msra.mxu0 %v757
      %883 = vmatprep.subr.mxu0 0.0
      %884 = vmatpush1.msra.mxu0 %v758
      %885 = vmatprep.subr.mxu0 0.0
      %886 = vmatpush1.msra.mxu0 %v759
      %887 = vmatprep.subr.mxu0 0.0
      %888 = vmatpush1.msra.mxu0 %v760
      %889 = vmatprep.subr.mxu0 0.0
      %890 = vmatpush1.msra.mxu0 %v761
      %891 = vmatprep.subr.mxu0 0.0
      %892 = vmatpush1.msra.mxu0 %v762
      %893 = vmatprep.subr.mxu0 0.0
      %894 = vmatpush1.msra.mxu0 %v763
      %895 = vmatprep.subr.mxu0 0.0
      %896 = vmatpush1.msra.mxu0 %v764
      %897 = vmatprep.subr.mxu0 0.0
      %898 = vmatpush1.msra.mxu0 %v765
      %899 = vmatprep.subr.mxu0 0.0
      %900 = vmatpush1.msra.mxu0 %v766
      %901 = vmatprep.subr.mxu0 0.0
      %902 = vmatpush1.msra.mxu0 %v767
      %903 = vmatprep.mubr.f32.mxu0 %v725
      %904 = vmatmul.mubr.f32.gmra.mrb[0].mxu0 %v724
      %v905 = vpop.f32.mrb[0].mxu0
      %v906 = vadd.f32 %v837, %v905
      %v907 = vpop.f32.mrb[0].mxu0
      %908 = vmatprep.mubr.f32.mxu0 %v731
      %909 = vmatmul.mubr.f32.gmra.mrb[0].mxu0 %v730
      %v910 = vpop.f32.mrb[0].mxu0
      %v911 = vadd.f32 %v837, %v910
      %v912 = vpop.f32.mrb[0].mxu0
      %913 = vdwg.mxu0
      %914 = vmatprep.subr.mxu0 0.0
      %915 = vmatpush1.msra.mxu0 %v768
      %916 = vmatprep.subr.mxu0 0.0
      %917 = vmatpush1.msra.mxu0 %v769
      %918 = vmatprep.subr.mxu0 0.0
      %919 = vmatpush1.msra.mxu0 %v770
      %920 = vmatprep.subr.mxu0 0.0
      %921 = vmatpush1.msra.mxu0 %v771
      %922 = vmatprep.subr.mxu0 0.0
      %923 = vmatpush1.msra.mxu0 %v772
      %924 = vmatprep.subr.mxu0 0.0
      %925 = vmatpush1.msra.mxu0 %v773
      %926 = vmatprep.subr.mxu0 0.0
      %927 = vmatpush1.msra.mxu0 %v774
      %928 = vmatprep.subr.mxu0 0.0
      %929 = vmatpush1.msra.mxu0 %v775
      %930 = vmatprep.subr.mxu0 0.0
      %931 = vmatpush1.msra.mxu0 %v776
      %932 = vmatprep.subr.mxu0 0.0
      %933 = vmatpush1.msra.mxu0 %v777
      %934 = vmatprep.subr.mxu0 0.0
      %935 = vmatpush1.msra.mxu0 %v778
      %936 = vmatprep.subr.mxu0 0.0
      %937 = vmatpush1.msra.mxu0 %v779
      %938 = vmatprep.subr.mxu0 0.0
      %939 = vmatpush1.msra.mxu0 %v780
      %940 = vmatprep.subr.mxu0 0.0
      %941 = vmatpush1.msra.mxu0 %v781
      %942 = vmatprep.subr.mxu0 0.0
      %943 = vmatpush1.msra.mxu0 %v782
      %944 = vmatprep.subr.mxu0 0.0
      %945 = vmatpush1.msra.mxu0 %v783
      %946 = vmatprep.subr.mxu0 0.0
      %947 = vmatpush1.msra.mxu0 %v784
      %948 = vmatprep.subr.mxu0 0.0
      %949 = vmatpush1.msra.mxu0 %v785
      %950 = vmatprep.subr.mxu0 0.0
      %951 = vmatpush1.msra.mxu0 %v786
      %952 = vmatprep.subr.mxu0 0.0
      %953 = vmatpush1.msra.mxu0 %v787
      %954 = vmatprep.subr.mxu0 0.0
      %955 = vmatpush1.msra.mxu0 %v788
      %956 = vmatprep.subr.mxu0 0.0
      %957 = vmatpush1.msra.mxu0 %v789
      %958 = vmatprep.subr.mxu0 0.0
      %959 = vmatpush1.msra.mxu0 %v790
      %960 = vmatprep.subr.mxu0 0.0
      %961 = vmatpush1.msra.mxu0 %v791
      %962 = vmatprep.subr.mxu0 0.0
      %963 = vmatpush1.msra.mxu0 %v792
      %964 = vmatprep.subr.mxu0 0.0
      %965 = vmatpush1.msra.mxu0 %v793
      %966 = vmatprep.subr.mxu0 0.0
      %967 = vmatpush1.msra.mxu0 %v794
      %968 = vmatprep.subr.mxu0 0.0
      %969 = vmatpush1.msra.mxu0 %v795
      %970 = vmatprep.subr.mxu0 0.0
      %971 = vmatpush1.msra.mxu0 %v796
      %972 = vmatprep.subr.mxu0 0.0
      %973 = vmatpush1.msra.mxu0 %v797
      %974 = vmatprep.subr.mxu0 0.0
      %975 = vmatpush1.msra.mxu0 %v798
      %976 = vmatprep.subr.mxu0 0.0
      %977 = vmatpush1.msra.mxu0 %v799
      %978 = vmatprep.mubr.f32.mxu0 %v727
      %979 = vmatmul.mubr.f32.gmra.mrb[0].mxu0 %v726
      %v980 = vpop.f32.mrb[0].mxu0
      %v981 = vadd.f32 %v906, %v980
      %v982 = vpop.f32.mrb[0].mxu0
      %983 = vmatprep.mubr.f32.mxu0 %v733
      %984 = vmatmul.mubr.f32.gmra.mrb[0].mxu0 %v732
      %v985 = vpop.f32.mrb[0].mxu0
      %v986 = vadd.f32 %v911, %v985
      %v987 = vpop.f32.mrb[0].mxu0
      %988 = vdwg.mxu0
      %989 = vmatprep.subr.mxu0 0.0
      %990 = vmatpush1.msra.mxu0 %v800
      %991 = vmatprep.subr.mxu0 0.0
      %992 = vmatpush1.msra.mxu0 %v801
      %993 = vmatprep.subr.mxu0 0.0
      %994 = vmatpush1.msra.mxu0 %v802
      %995 = vmatprep.subr.mxu0 0.0
      %996 = vmatpush1.msra.mxu0 %v803
      %997 = vmatprep.subr.mxu0 0.0
      %998 = vmatpush1.msra.mxu0 %v804
      %999 = vmatprep.subr.mxu0 0.0
      %1000 = vmatpush1.msra.mxu0 %v805
      %1001 = vmatprep.subr.mxu0 0.0
      %1002 = vmatpush1.msra.mxu0 %v806
      %1003 = vmatprep.subr.mxu0 0.0
      %1004 = vmatpush1.msra.mxu0 %v807
      %1005 = vmatprep.subr.mxu0 0.0
      %1006 = vmatpush1.msra.mxu0 %v808
      %1007 = vmatprep.subr.mxu0 0.0
      %1008 = vmatpush1.msra.mxu0 %v809
      %1009 = vmatprep.subr.mxu0 0.0
      %1010 = vmatpush1.msra.mxu0 %v810
      %1011 = vmatprep.subr.mxu0 0.0
      %1012 = vmatpush1.msra.mxu0 %v811
      %1013 = vmatprep.subr.mxu0 0.0
      %1014 = vmatpush1.msra.mxu0 %v812
      %1015 = vmatprep.subr.mxu0 0.0
      %1016 = vmatpush1.msra.mxu0 %v813
      %1017 = vmatprep.subr.mxu0 0.0
      %1018 = vmatpush1.msra.mxu0 %v814
      %1019 = vmatprep.subr.mxu0 0.0
      %1020 = vmatpush1.msra.mxu0 %v815
      %1021 = vmatprep.subr.mxu0 0.0
      %1022 = vmatpush1.msra.mxu0 %v816
      %1023 = vmatprep.subr.mxu0 0.0
      %1024 = vmatpush1.msra.mxu0 %v817
      %1025 = vmatprep.subr.mxu0 0.0
      %1026 = vmatpush1.msra.mxu0 %v818
      %1027 = vmatprep.subr.mxu0 0.0
      %1028 = vmatpush1.msra.mxu0 %v819
      %1029 = vmatprep.subr.mxu0 0.0
      %1030 = vmatpush1.msra.mxu0 %v820
      %1031 = vmatprep.subr.mxu0 0.0
      %1032 = vmatpush1.msra.mxu0 %v821
      %1033 = vmatprep.subr.mxu0 0.0
      %1034 = vmatpush1.msra.mxu0 %v822
      %1035 = vmatprep.subr.mxu0 0.0
      %1036 = vmatpush1.msra.mxu0 %v823
      %1037 = vmatprep.subr.mxu0 0.0
      %1038 = vmatpush1.msra.mxu0 %v824
      %1039 = vmatprep.subr.mxu0 0.0
      %1040 = vmatpush1.msra.mxu0 %v825
      %1041 = vmatprep.subr.mxu0 0.0
      %1042 = vmatpush1.msra.mxu0 %v826
      %1043 = vmatprep.subr.mxu0 0.0
      %1044 = vmatpush1.msra.mxu0 %v827
      %1045 = vmatprep.subr.mxu0 0.0
      %1046 = vmatpush1.msra.mxu0 %v828
      %1047 = vmatprep.subr.mxu0 0.0
      %1048 = vmatpush1.msra.mxu0 %v829
      %1049 = vmatprep.subr.mxu0 0.0
      %1050 = vmatpush1.msra.mxu0 %v830
      %1051 = vmatprep.subr.mxu0 0.0
      %1052 = vmatpush1.msra.mxu0 %v831
      %1053 = vmatprep.mubr.f32.mxu0 %v729
      %1054 = vmatmul.mubr.f32.gmra.mrb[0].mxu0 %v728
      %v1055 = vpop.f32.mrb[0].mxu0
      %v1056 = vadd.f32 %v981, %v1055
      %v1057 = vpop.f32.mrb[0].mxu0
      %1058 = vmatprep.mubr.f32.mxu0 %v735
      %1059 = vmatmul.mubr.f32.gmra.mrb[0].mxu0 %v734
      %v1060 = vpop.f32.mrb[0].mxu0
      %v1061 = vadd.f32 %v986, %v1060
      %v1062 = vpop.f32.mrb[0].mxu0
      %1063 = vdwg.mxu0
      %v1064 = vld [vmem:[%s3] sm:$0xff]
      %v1065 = vld [vmem:[%s3 + $0x8] sm:$0xff]
      %v1066 = vadd.f32 %v1056, %v1064
      %v1067 = vadd.f32 %v1061, %v1065
      %v1068 = vld [vmem:[%s4] sm:$0x1]
      %v1069 = vld [vmem:[%s5] sm:$0x1]
      %1070 = vadd.xlane.f32.xlu0 %v1066
      %v1071 = vpop.xlane.xlu0 %1070
      %1072 = vadd.xlane.f32.xlu0 %v1067
      %v1073 = vpop.xlane.xlu0 %1072
      %v1074 = vrcp.pop 128.0
      %v1075 = vmul.f32 %v1071, %v1074
      %v1076 = vmul.f32 %v1073, %v1074
      %v1077 = vsub.f32 %v1066, %v1075
      %v1078 = vsub.f32 %v1067, %v1076
      %v1079 = vmul.f32 %v1077, %v1077
      %v1080 = vmul.f32 %v1078, %v1078
      %1081 = vadd.xlane.f32.xlu0 %v1079
      %v1082 = vpop.xlane.xlu0 %1081
      %1083 = vadd.xlane.f32.xlu0 %v1080
      %v1084 = vpop.xlane.xlu0 %1083
      %v1085 = vmul.f32 %v1082, %v1074
      %v1086 = vmul.f32 %v1084, %v1074
      %v1087 = vadd.f32 %v1085, 1e-05
      %v1088 = vadd.f32 %v1086, 1e-05
      %v1089 = vrsqrt.pop %v1087
      %v1090 = vrsqrt.pop %v1088
      %v1091 = vmul.f32 %v1077, %v1089
      %v1092 = vmul.f32 %v1078, %v1090
      %v1094 = vlaneseq
      %v1095 = vshrl.u32 %v1094, 7
      %v1096 = vsub.s32 0, %v1095
      %v1097 = vrot.slane %v1068, %v1096
      %v1099 = vmul.f32 %v1091, %v1097
      %v1100 = vmul.f32 %v1092, %v1097
      %v1102 = vlaneseq
      %v1103 = vshrl.u32 %v1102, 7
      %v1104 = vsub.s32 0, %v1103
      %v1105 = vrot.slane %v1069, %v1104
      %v1107 = vadd.f32 %v1099, %v1105
      %v1108 = vadd.f32 %v1100, %v1105
      %v1109 = vld [vmem:[%s6] sm:$0xff]
      %v1110 = vld [vmem:[%s6 + $0x8] sm:$0xff]
      %v1111 = vld [vmem:[%s6 + $0x10] sm:$0xff]
      %v1112 = vld [vmem:[%s6 + $0x18] sm:$0xff]
      %v1113 = vld [vmem:[%s6 + $0x20] sm:$0xff]
      %v1114 = vld [vmem:[%s6 + $0x28] sm:$0xff]
      %v1115 = vld [vmem:[%s6 + $0x30] sm:$0xff]
      %v1116 = vld [vmem:[%s6 + $0x38] sm:$0xff]
      %v1117 = vld [vmem:[%s6 + $0x40] sm:$0xff]
      %v1118 = vld [vmem:[%s6 + $0x48] sm:$0xff]
      %v1119 = vld [vmem:[%s6 + $0x50] sm:$0xff]
      %v1120 = vld [vmem:[%s6 + $0x58] sm:$0xff]
      %v1121 = vld [vmem:[%s6 + $0x60] sm:$0xff]
      %v1122 = vld [vmem:[%s6 + $0x68] sm:$0xff]
      %v1123 = vld [vmem:[%s6 + $0x70] sm:$0xff]
      %v1124 = vld [vmem:[%s6 + $0x78] sm:$0xff]
      %v1125 = vld [vmem:[%s6 + $0x80] sm:$0xff]
      %v1126 = vld [vmem:[%s6 + $0x88] sm:$0xff]
      %v1127 = vld [vmem:[%s6 + $0x90] sm:$0xff]
      %v1128 = vld [vmem:[%s6 + $0x98] sm:$0xff]
      %v1129 = vld [vmem:[%s6 + $0xa0] sm:$0xff]
      %v1130 = vld [vmem:[%s6 + $0xa8] sm:$0xff]
      %v1131 = vld [vmem:[%s6 + $0xb0] sm:$0xff]
      %v1132 = vld [vmem:[%s6 + $0xb8] sm:$0xff]
      %v1133 = vld [vmem:[%s6 + $0xc0] sm:$0xff]
      %v1134 = vld [vmem:[%s6 + $0xc8] sm:$0xff]
      %v1135 = vld [vmem:[%s6 + $0xd0] sm:$0xff]
      %v1136 = vld [vmem:[%s6 + $0xd8] sm:$0xff]
      %v1137 = vld [vmem:[%s6 + $0xe0] sm:$0xff]
      %v1138 = vld [vmem:[%s6 + $0xe8] sm:$0xff]
      %v1139 = vld [vmem:[%s6 + $0xf0] sm:$0xff]
      %v1140 = vld [vmem:[%s6 + $0xf8] sm:$0xff]
      %v1141 = vld [vmem:[%s6 + $0x100] sm:$0xff]
      %v1142 = vld [vmem:[%s6 + $0x108] sm:$0xff]
      %v1143 = vld [vmem:[%s6 + $0x110] sm:$0xff]
      %v1144 = vld [vmem:[%s6 + $0x118] sm:$0xff]
      %v1145 = vld [vmem:[%s6 + $0x120] sm:$0xff]
      %v1146 = vld [vmem:[%s6 + $0x128] sm:$0xff]
      %v1147 = vld [vmem:[%s6 + $0x130] sm:$0xff]
      %v1148 = vld [vmem:[%s6 + $0x138] sm:$0xff]
      %v1149 = vld [vmem:[%s6 + $0x140] sm:$0xff]
      %v1150 = vld [vmem:[%s6 + $0x148] sm:$0xff]
      %v1151 = vld [vmem:[%s6 + $0x150] sm:$0xff]
      %v1152 = vld [vmem:[%s6 + $0x158] sm:$0xff]
      %v1153 = vld [vmem:[%s6 + $0x160] sm:$0xff]
      %v1154 = vld [vmem:[%s6 + $0x168] sm:$0xff]
      %v1155 = vld [vmem:[%s6 + $0x170] sm:$0xff]
      %v1156 = vld [vmem:[%s6 + $0x178] sm:$0xff]
      %v1157 = vld [vmem:[%s7] sm:$0x7]
      %v1159 = vlaneseq
      %v1160 = vshrl.u32 %v1159, 7
      %v1161 = vsub.s32 0, %v1160
      %v1162 = vrot.slane %v1157, %v1161
      %v1163 = vlaneseq
      %v1164 = vshrl.u32 %v1163, 7
      %v1165 = vsub.s32 1, %v1164
      %v1166 = vrot.slane %v1157, %v1165
      %v1167 = vlaneseq
      %v1168 = vshrl.u32 %v1167, 7
      %v1169 = vsub.s32 2, %v1168
      %v1170 = vrot.slane %v1157, %v1169
      %1174 = vmatprep.subr.mxu0 %v1110
      %1175 = vmatpush1.msra.mxu0 %v1109
      %1176 = vmatprep.subr.mxu0 %v1113
      %1177 = vmatpush1.msra.mxu0 %v1112
      %1178 = vmatprep.subr.mxu0 %v1116
      %1179 = vmatpush1.msra.mxu0 %v1115
      %1180 = vmatprep.subr.mxu0 %v1119
      %1181 = vmatpush1.msra.mxu0 %v1118
      %1182 = vmatprep.subr.mxu0 %v1122
      %1183 = vmatpush1.msra.mxu0 %v1121
      %1184 = vmatprep.subr.mxu0 %v1125
      %1185 = vmatpush1.msra.mxu0 %v1124
      %1186 = vmatprep.subr.mxu0 %v1128
      %1187 = vmatpush1.msra.mxu0 %v1127
      %1188 = vmatprep.subr.mxu0 %v1131
      %1189 = vmatpush1.msra.mxu0 %v1130
      %1190 = vmatprep.subr.mxu0 %v1134
      %1191 = vmatpush1.msra.mxu0 %v1133
      %1192 = vmatprep.subr.mxu0 %v1137
      %1193 = vmatpush1.msra.mxu0 %v1136
      %1194 = vmatprep.subr.mxu0 %v1140
      %1195 = vmatpush1.msra.mxu0 %v1139
      %1196 = vmatprep.subr.mxu0 %v1143
      %1197 = vmatpush1.msra.mxu0 %v1142
      %1198 = vmatprep.subr.mxu0 %v1146
      %1199 = vmatpush1.msra.mxu0 %v1145
      %1200 = vmatprep.subr.mxu0 %v1149
      %1201 = vmatpush1.msra.mxu0 %v1148
      %1202 = vmatprep.subr.mxu0 %v1152
      %1203 = vmatpush1.msra.mxu0 %v1151
      %1204 = vmatprep.subr.mxu0 %v1155
      %1205 = vmatpush1.msra.mxu0 %v1154
      %1206 = vmatprep.subr.mxu0 0.0
      %1207 = vmatpush1.msra.mxu0 0.0
      %1208 = vmatprep.subr.mxu0 0.0
      %1209 = vmatpush1.msra.mxu0 0.0
      %1210 = vmatprep.subr.mxu0 0.0
      %1211 = vmatpush1.msra.mxu0 0.0
      %1212 = vmatprep.subr.mxu0 0.0
      %1213 = vmatpush1.msra.mxu0 0.0
      %1214 = vmatprep.subr.mxu0 0.0
      %1215 = vmatpush1.msra.mxu0 0.0
      %1216 = vmatprep.subr.mxu0 0.0
      %1217 = vmatpush1.msra.mxu0 0.0
      %1218 = vmatprep.subr.mxu0 0.0
      %1219 = vmatpush1.msra.mxu0 0.0
      %1220 = vmatprep.subr.mxu0 0.0
      %1221 = vmatpush1.msra.mxu0 0.0
      %1222 = vmatprep.subr.mxu0 0.0
      %1223 = vmatpush1.msra.mxu0 0.0
      %1224 = vmatprep.subr.mxu0 0.0
      %1225 = vmatpush1.msra.mxu0 0.0
      %1226 = vmatprep.subr.mxu0 0.0
      %1227 = vmatpush1.msra.mxu0 0.0
      %1228 = vmatprep.subr.mxu0 0.0
      %1229 = vmatpush1.msra.mxu0 0.0
      %1230 = vmatprep.subr.mxu0 0.0
      %1231 = vmatpush1.msra.mxu0 0.0
      %1232 = vmatprep.subr.mxu0 0.0
      %1233 = vmatpush1.msra.mxu0 0.0
      %1234 = vmatprep.subr.mxu0 0.0
      %1235 = vmatpush1.msra.mxu0 0.0
      %1236 = vmatprep.subr.mxu0 0.0
      %1237 = vmatpush1.msra.mxu0 0.0
      %1238 = vmatprep.mubr.f32.mxu0 0.0
      %1239 = vmatmul.mubr.f32.gmra.mrb[0].mxu0 %v1107
      %v1240 = vpop.f32.mrb[0].mxu0
      %v1241 = vadd.f32 %v1162, %v1240
      %v1242 = vpop.f32.mrb[0].mxu0
      %v1243 = vadd.f32 %v1166, %v1242
      %1244 = vmatprep.mubr.f32.mxu0 0.0
      %1245 = vmatmul.mubr.f32.gmra.mrb[0].mxu0 %v1108
      %v1246 = vpop.f32.mrb[0].mxu0
      %v1247 = vadd.f32 %v1162, %v1246
      %v1248 = vpop.f32.mrb[0].mxu0
      %v1249 = vadd.f32 %v1166, %v1248
      %1250 = vdwg.mxu0
      %1251 = vmatprep.subr.mxu0 0.0
      %1252 = vmatpush1.msra.mxu0 %v1111
      %1253 = vmatprep.subr.mxu0 0.0
      %1254 = vmatpush1.msra.mxu0 %v1114
      %1255 = vmatprep.subr.mxu0 0.0
      %1256 = vmatpush1.msra.mxu0 %v1117
      %1257 = vmatprep.subr.mxu0 0.0
      %1258 = vmatpush1.msra.mxu0 %v1120
      %1259 = vmatprep.subr.mxu0 0.0
      %1260 = vmatpush1.msra.mxu0 %v1123
      %1261 = vmatprep.subr.mxu0 0.0
      %1262 = vmatpush1.msra.mxu0 %v1126
      %1263 = vmatprep.subr.mxu0 0.0
      %1264 = vmatpush1.msra.mxu0 %v1129
      %1265 = vmatprep.subr.mxu0 0.0
      %1266 = vmatpush1.msra.mxu0 %v1132
      %1267 = vmatprep.subr.mxu0 0.0
      %1268 = vmatpush1.msra.mxu0 %v1135
      %1269 = vmatprep.subr.mxu0 0.0
      %1270 = vmatpush1.msra.mxu0 %v1138
      %1271 = vmatprep.subr.mxu0 0.0
      %1272 = vmatpush1.msra.mxu0 %v1141
      %1273 = vmatprep.subr.mxu0 0.0
      %1274 = vmatpush1.msra.mxu0 %v1144
      %1275 = vmatprep.subr.mxu0 0.0
      %1276 = vmatpush1.msra.mxu0 %v1147
      %1277 = vmatprep.subr.mxu0 0.0
      %1278 = vmatpush1.msra.mxu0 %v1150
      %1279 = vmatprep.subr.mxu0 0.0
      %1280 = vmatpush1.msra.mxu0 %v1153
      %1281 = vmatprep.subr.mxu0 0.0
      %1282 = vmatpush1.msra.mxu0 %v1156
      %1283 = vmatprep.subr.mxu0 0.0
      %1284 = vmatpush1.msra.mxu0 0.0
      %1285 = vmatprep.subr.mxu0 0.0
      %1286 = vmatpush1.msra.mxu0 0.0
      %1287 = vmatprep.subr.mxu0 0.0
      %1288 = vmatpush1.msra.mxu0 0.0
      %1289 = vmatprep.subr.mxu0 0.0
      %1290 = vmatpush1.msra.mxu0 0.0
      %1291 = vmatprep.subr.mxu0 0.0
      %1292 = vmatpush1.msra.mxu0 0.0
      %1293 = vmatprep.subr.mxu0 0.0
      %1294 = vmatpush1.msra.mxu0 0.0
      %1295 = vmatprep.subr.mxu0 0.0
      %1296 = vmatpush1.msra.mxu0 0.0
      %1297 = vmatprep.subr.mxu0 0.0
      %1298 = vmatpush1.msra.mxu0 0.0
      %1299 = vmatprep.subr.mxu0 0.0
      %1300 = vmatpush1.msra.mxu0 0.0
      %1301 = vmatprep.subr.mxu0 0.0
      %1302 = vmatpush1.msra.mxu0 0.0
      %1303 = vmatprep.subr.mxu0 0.0
      %1304 = vmatpush1.msra.mxu0 0.0
      %1305 = vmatprep.subr.mxu0 0.0
      %1306 = vmatpush1.msra.mxu0 0.0
      %1307 = vmatprep.subr.mxu0 0.0
      %1308 = vmatpush1.msra.mxu0 0.0
      %1309 = vmatprep.subr.mxu0 0.0
      %1310 = vmatpush1.msra.mxu0 0.0
      %1311 = vmatprep.subr.mxu0 0.0
      %1312 = vmatpush1.msra.mxu0 0.0
      %1313 = vmatprep.subr.mxu0 0.0
      %1314 = vmatpush1.msra.mxu0 0.0
      %1315 = vmatprep.mubr.f32.mxu0 0.0
      %1316 = vmatmul.mubr.f32.gmra.mrb[0].mxu0 %v1107
      %v1317 = vpop.f32.mrb[0].mxu0
      %v1318 = vadd.f32 %v1170, %v1317
      %v1319 = vpop.f32.mrb[0].mxu0
      %1320 = vmatprep.mubr.f32.mxu0 0.0
      %1321 = vmatmul.mubr.f32.gmra.mrb[0].mxu0 %v1108
      %v1322 = vpop.f32.mrb[0].mxu0
      %v1323 = vadd.f32 %v1170, %v1322
      %v1324 = vpop.f32.mrb[0].mxu0
      %1325 = vdwg.mxu0
      %v1326 = vmul.f32 %v1241, 0.17677669
      %v1327 = vmul.f32 %v1247, 0.17677669
      %vm1328 = vcmask 261120
      %v1330 = vsel %vm1328, %v1326, 0
      %v1333 = vsel %vm1328, %v1327, 0
      %v1336 = vsel %vm1328, %v1243, 0
      %v1339 = vsel %vm1328, %v1249, 0
      %1341 = vmatprep.subr.mxu0 0.0
      %1342 = vmatpush1.xpose.msra.mxu0 %v1336
      %1343 = vmatprep.subr.mxu0 0.0
      %1344 = vmatpush1.xpose.msra.mxu0 %v1339
      %1345 = vmatprep.subr.mxu0 0.0
      %1346 = vmatpush1.xpose.msra.mxu0 0.0
      %1347 = vmatprep.subr.mxu0 0.0
      %1348 = vmatpush1.xpose.msra.mxu0 0.0
      %1349 = vmatprep.subr.mxu0 0.0
      %1350 = vmatpush1.xpose.msra.mxu0 0.0
      %1351 = vmatprep.subr.mxu0 0.0
      %1352 = vmatpush1.xpose.msra.mxu0 0.0
      %1353 = vmatprep.subr.mxu0 0.0
      %1354 = vmatpush1.xpose.msra.mxu0 0.0
      %1355 = vmatprep.subr.mxu0 0.0
      %1356 = vmatpush1.xpose.msra.mxu0 0.0
      %1357 = vmatprep.subr.mxu0 0.0
      %1358 = vmatpush1.xpose.msra.mxu0 0.0
      %1359 = vmatprep.subr.mxu0 0.0
      %1360 = vmatpush1.xpose.msra.mxu0 0.0
      %1361 = vmatprep.subr.mxu0 0.0
      %1362 = vmatpush1.xpose.msra.mxu0 0.0
      %1363 = vmatprep.subr.mxu0 0.0
      %1364 = vmatpush1.xpose.msra.mxu0 0.0
      %1365 = vmatprep.subr.mxu0 0.0
      %1366 = vmatpush1.xpose.msra.mxu0 0.0
      %1367 = vmatprep.subr.mxu0 0.0
      %1368 = vmatpush1.xpose.msra.mxu0 0.0
      %1369 = vmatprep.subr.mxu0 0.0
      %1370 = vmatpush1.xpose.msra.mxu0 0.0
      %1371 = vmatprep.subr.mxu0 0.0
      %1372 = vmatpush1.xpose.msra.mxu0 0.0
      %1373 = vmatprep.subr.mxu0 0.0
      %1374 = vmatpush1.xpose.msra.mxu0 0.0
      %1375 = vmatprep.subr.mxu0 0.0
      %1376 = vmatpush1.xpose.msra.mxu0 0.0
      %1377 = vmatprep.subr.mxu0 0.0
      %1378 = vmatpush1.xpose.msra.mxu0 0.0
      %1379 = vmatprep.subr.mxu0 0.0
      %1380 = vmatpush1.xpose.msra.mxu0 0.0
      %1381 = vmatprep.subr.mxu0 0.0
      %1382 = vmatpush1.xpose.msra.mxu0 0.0
      %1383 = vmatprep.subr.mxu0 0.0
      %1384 = vmatpush1.xpose.msra.mxu0 0.0
      %1385 = vmatprep.subr.mxu0 0.0
      %1386 = vmatpush1.xpose.msra.mxu0 0.0
      %1387 = vmatprep.subr.mxu0 0.0
      %1388 = vmatpush1.xpose.msra.mxu0 0.0
      %1389 = vmatprep.subr.mxu0 0.0
      %1390 = vmatpush1.xpose.msra.mxu0 0.0
      %1391 = vmatprep.subr.mxu0 0.0
      %1392 = vmatpush1.xpose.msra.mxu0 0.0
      %1393 = vmatprep.subr.mxu0 0.0
      %1394 = vmatpush1.xpose.msra.mxu0 0.0
      %1395 = vmatprep.subr.mxu0 0.0
      %1396 = vmatpush1.xpose.msra.mxu0 0.0
      %1397 = vmatprep.subr.mxu0 0.0
      %1398 = vmatpush1.xpose.msra.mxu0 0.0
      %1399 = vmatprep.subr.mxu0 0.0
      %1400 = vmatpush1.xpose.msra.mxu0 0.0
      %1401 = vmatprep.subr.mxu0 0.0
      %1402 = vmatpush1.xpose.msra.mxu0 0.0
      %1403 = vmatprep.subr.mxu0 0.0
      %1404 = vmatpush1.xpose.msra.mxu0 0.0
      %1405 = vmatprep.mubr.f32.mxu0 0.0
      %1406 = vmatmul.mubr.f32.gmra.mrb[0].mxu0 %v1330
      %v1407 = vpop.f32.mrb[0].mxu0
      %v1408 = vadd.f32 0.0, %v1407
      %v1409 = vpop.f32.mrb[0].mxu0
      %1410 = vmatprep.mubr.f32.mxu0 0.0
      %1411 = vmatmul.mubr.f32.gmra.mrb[0].mxu0 %v1333
      %v1412 = vpop.f32.mrb[0].mxu0
      %v1413 = vadd.f32 0.0, %v1412
      %v1414 = vpop.f32.mrb[0].mxu0
      %1415 = vdwg.mxu0
      %vm1416 = vcmask 130048
      %v1417 = vsel %vm1416, %v1408, -inf
      %1418 = vmax.xlane.f32.xlu0 %v1417
      %v1419 = vpop.xlane.xlu0 %1418
      %v1420 = vsel %vm1416, %v1413, -inf
      %1421 = vmax.xlane.f32.xlu0 %v1420
      %v1422 = vpop.xlane.xlu0 %1421
      %v1423 = vsub.f32 %v1408, %v1419
      %v1424 = vsub.f32 %v1413, %v1422
      %v1425 = vmul.f32 %v1423, 1.442695
      %v1426 = vpow.pop %v1425
      %v1427 = vmul.f32 %v1424, 1.442695
      %v1428 = vpow.pop %v1427
      %v1429 = vsel %vm1416, %v1426, 0.0
      %1430 = vadd.xlane.f32.xlu0 %v1429
      %v1431 = vpop.xlane.xlu0 %1430
      %v1432 = vsel %vm1416, %v1428, 0.0
      %1433 = vadd.xlane.f32.xlu0 %v1432
      %v1434 = vpop.xlane.xlu0 %1433
      %v1435 = vrcp.pop %v1431
      %v1436 = vmul.f32 %v1426, %v1435
      %v1437 = vrcp.pop %v1434
      %v1438 = vmul.f32 %v1428, %v1437
      %v1440 = vsel %vm1416, %v1436, 0
      %v1443 = vsel %vm1416, %v1438, 0
      %1445 = vmatprep.subr.mxu0 0.0
      %1446 = vmatpush1.msra.mxu0 %v1318
      %1447 = vmatprep.subr.mxu0 0.0
      %1448 = vmatpush1.msra.mxu0 %v1323
      %1449 = vmatprep.subr.mxu0 0.0
      %1450 = vmatpush1.msra.mxu0 0.0
      %1451 = vmatprep.subr.mxu0 0.0
      %1452 = vmatpush1.msra.mxu0 0.0
      %1453 = vmatprep.subr.mxu0 0.0
      %1454 = vmatpush1.msra.mxu0 0.0
      %1455 = vmatprep.subr.mxu0 0.0
      %1456 = vmatpush1.msra.mxu0 0.0
      %1457 = vmatprep.subr.mxu0 0.0
      %1458 = vmatpush1.msra.mxu0 0.0
      %1459 = vmatprep.subr.mxu0 0.0
      %1460 = vmatpush1.msra.mxu0 0.0
      %1461 = vmatprep.subr.mxu0 0.0
      %1462 = vmatpush1.msra.mxu0 0.0
      %1463 = vmatprep.subr.mxu0 0.0
      %1464 = vmatpush1.msra.mxu0 0.0
      %1465 = vmatprep.subr.mxu0 0.0
      %1466 = vmatpush1.msra.mxu0 0.0
      %1467 = vmatprep.subr.mxu0 0.0
      %1468 = vmatpush1.msra.mxu0 0.0
      %1469 = vmatprep.subr.mxu0 0.0
      %1470 = vmatpush1.msra.mxu0 0.0
      %1471 = vmatprep.subr.mxu0 0.0
      %1472 = vmatpush1.msra.mxu0 0.0
      %1473 = vmatprep.subr.mxu0 0.0
      %1474 = vmatpush1.msra.mxu0 0.0
      %1475 = vmatprep.subr.mxu0 0.0
      %1476 = vmatpush1.msra.mxu0 0.0
      %1477 = vmatprep.subr.mxu0 0.0
      %1478 = vmatpush1.msra.mxu0 0.0
      %1479 = vmatprep.subr.mxu0 0.0
      %1480 = vmatpush1.msra.mxu0 0.0
      %1481 = vmatprep.subr.mxu0 0.0
      %1482 = vmatpush1.msra.mxu0 0.0
      %1483 = vmatprep.subr.mxu0 0.0
      %1484 = vmatpush1.msra.mxu0 0.0
      %1485 = vmatprep.subr.mxu0 0.0
      %1486 = vmatpush1.msra.mxu0 0.0
      %1487 = vmatprep.subr.mxu0 0.0
      %1488 = vmatpush1.msra.mxu0 0.0
      %1489 = vmatprep.subr.mxu0 0.0
      %1490 = vmatpush1.msra.mxu0 0.0
      %1491 = vmatprep.subr.mxu0 0.0
      %1492 = vmatpush1.msra.mxu0 0.0
      %1493 = vmatprep.subr.mxu0 0.0
      %1494 = vmatpush1.msra.mxu0 0.0
      %1495 = vmatprep.subr.mxu0 0.0
      %1496 = vmatpush1.msra.mxu0 0.0
      %1497 = vmatprep.subr.mxu0 0.0
      %1498 = vmatpush1.msra.mxu0 0.0
      %1499 = vmatprep.subr.mxu0 0.0
      %1500 = vmatpush1.msra.mxu0 0.0
      %1501 = vmatprep.subr.mxu0 0.0
      %1502 = vmatpush1.msra.mxu0 0.0
      %1503 = vmatprep.subr.mxu0 0.0
      %1504 = vmatpush1.msra.mxu0 0.0
      %1505 = vmatprep.subr.mxu0 0.0
      %1506 = vmatpush1.msra.mxu0 0.0
      %1507 = vmatprep.subr.mxu0 0.0
      %1508 = vmatpush1.msra.mxu0 0.0
      %1509 = vmatprep.mubr.f32.mxu0 0.0
      %1510 = vmatmul.mubr.f32.gmra.mrb[0].mxu0 %v1440
      %v1511 = vpop.f32.mrb[0].mxu0
      %v1512 = vadd.f32 0.0, %v1511
      %v1513 = vpop.f32.mrb[0].mxu0
      %1514 = vmatprep.mubr.f32.mxu0 0.0
      %1515 = vmatmul.mubr.f32.gmra.mrb[0].mxu0 %v1443
      %v1516 = vpop.f32.mrb[0].mxu0
      %v1517 = vadd.f32 0.0, %v1516
      %v1518 = vpop.f32.mrb[0].mxu0
      %1519 = vdwg.mxu0
      %1520 = vst.msk [vmem:[#allocation2] sm:$0xff] %vm1328, %v1512
      %1521 = vst.msk [vmem:[#allocation2 + $0x8] sm:$0xff] %vm1328, %v1517
      %1522 = vrot.lane.b32.xlu0 %v1326, 96
      %v1523 = vpop.permute.xlu0 %1522
      %1524 = vrot.lane.b32.xlu0 %v1327, 96
      %v1525 = vpop.permute.xlu0 %1524
      %1526 = vrot.lane.b32.xlu0 %v1243, 96
      %v1527 = vpop.permute.xlu0 %1526
      %1528 = vrot.lane.b32.xlu0 %v1249, 96
      %v1529 = vpop.permute.xlu0 %1528
      %v1530 = vsel %vm1328, %v1523, 0
      %v1532 = vsel %vm1328, %v1525, 0
      %v1534 = vsel %vm1328, %v1527, 0
      %v1536 = vsel %vm1328, %v1529, 0
      %1538 = vmatprep.subr.mxu0 0.0
      %1539 = vmatpush1.xpose.msra.mxu0 %v1534
      %1540 = vmatprep.subr.mxu0 0.0
      %1541 = vmatpush1.xpose.msra.mxu0 %v1536
      %1542 = vmatprep.subr.mxu0 0.0
      %1543 = vmatpush1.xpose.msra.mxu0 0.0
      %1544 = vmatprep.subr.mxu0 0.0
      %1545 = vmatpush1.xpose.msra.mxu0 0.0
      %1546 = vmatprep.subr.mxu0 0.0
      %1547 = vmatpush1.xpose.msra.mxu0 0.0
      %1548 = vmatprep.subr.mxu0 0.0
      %1549 = vmatpush1.xpose.msra.mxu0 0.0
      %1550 = vmatprep.subr.mxu0 0.0
      %1551 = vmatpush1.xpose.msra.mxu0 0.0
      %1552 = vmatprep.subr.mxu0 0.0
      %1553 = vmatpush1.xpose.msra.mxu0 0.0
      %1554 = vmatprep.subr.mxu0 0.0
      %1555 = vmatpush1.xpose.msra.mxu0 0.0
      %1556 = vmatprep.subr.mxu0 0.0
      %1557 = vmatpush1.xpose.msra.mxu0 0.0
      %1558 = vmatprep.subr.mxu0 0.0
      %1559 = vmatpush1.xpose.msra.mxu0 0.0
      %1560 = vmatprep.subr.mxu0 0.0
      %1561 = vmatpush1.xpose.msra.mxu0 0.0
      %1562 = vmatprep.subr.mxu0 0.0
      %1563 = vmatpush1.xpose.msra.mxu0 0.0
      %1564 = vmatprep.subr.mxu0 0.0
      %1565 = vmatpush1.xpose.msra.mxu0 0.0
      %1566 = vmatprep.subr.mxu0 0.0
      %1567 = vmatpush1.xpose.msra.mxu0 0.0
      %1568 = vmatprep.subr.mxu0 0.0
      %1569 = vmatpush1.xpose.msra.mxu0 0.0
      %1570 = vmatprep.subr.mxu0 0.0
      %1571 = vmatpush1.xpose.msra.mxu0 0.0
      %1572 = vmatprep.subr.mxu0 0.0
      %1573 = vmatpush1.xpose.msra.mxu0 0.0
      %1574 = vmatprep.subr.mxu0 0.0
      %1575 = vmatpush1.xpose.msra.mxu0 0.0
      %1576 = vmatprep.subr.mxu0 0.0
      %1577 = vmatpush1.xpose.msra.mxu0 0.0
      %1578 = vmatprep.subr.mxu0 0.0
      %1579 = vmatpush1.xpose.msra.mxu0 0.0
      %1580 = vmatprep.subr.mxu0 0.0
      %1581 = vmatpush1.xpose.msra.mxu0 0.0
      %1582 = vmatprep.subr.mxu0 0.0
      %1583 = vmatpush1.xpose.msra.mxu0 0.0
      %1584 = vmatprep.subr.mxu0 0.0
      %1585 = vmatpush1.xpose.msra.mxu0 0.0
      %1586 = vmatprep.subr.mxu0 0.0
      %1587 = vmatpush1.xpose.msra.mxu0 0.0
      %1588 = vmatprep.subr.mxu0 0.0
      %1589 = vmatpush1.xpose.msra.mxu0 0.0
      %1590 = vmatprep.subr.mxu0 0.0
      %1591 = vmatpush1.xpose.msra.mxu0 0.0
      %1592 = vmatprep.subr.mxu0 0.0
      %1593 = vmatpush1.xpose.msra.mxu0 0.0
      %1594 = vmatprep.subr.mxu0 0.0
      %1595 = vmatpush1.xpose.msra.mxu0 0.0
      %1596 = vmatprep.subr.mxu0 0.0
      %1597 = vmatpush1.xpose.msra.mxu0 0.0
      %1598 = vmatprep.subr.mxu0 0.0
      %1599 = vmatpush1.xpose.msra.mxu0 0.0
      %1600 = vmatprep.subr.mxu0 0.0
      %1601 = vmatpush1.xpose.msra.mxu0 0.0
      %1602 = vmatprep.mubr.f32.mxu0 0.0
      %1603 = vmatmul.mubr.f32.gmra.mrb[0].mxu0 %v1530
      %v1604 = vpop.f32.mrb[0].mxu0
      %v1605 = vadd.f32 0.0, %v1604
      %v1606 = vpop.f32.mrb[0].mxu0
      %1607 = vmatprep.mubr.f32.mxu0 0.0
      %1608 = vmatmul.mubr.f32.gmra.mrb[0].mxu0 %v1532
      %v1609 = vpop.f32.mrb[0].mxu0
      %v1610 = vadd.f32 0.0, %v1609
      %v1611 = vpop.f32.mrb[0].mxu0
      %1612 = vdwg.mxu0
      %v1613 = vsel %vm1416, %v1605, -inf
      %1614 = vmax.xlane.f32.xlu0 %v1613
      %v1615 = vpop.xlane.xlu0 %1614
      %v1616 = vsel %vm1416, %v1610, -inf
      %1617 = vmax.xlane.f32.xlu0 %v1616
      %v1618 = vpop.xlane.xlu0 %1617
      %v1619 = vsub.f32 %v1605, %v1615
      %v1620 = vsub.f32 %v1610, %v1618
      %v1621 = vmul.f32 %v1619, 1.442695
      %v1622 = vpow.pop %v1621
      %v1623 = vmul.f32 %v1620, 1.442695
      %v1624 = vpow.pop %v1623
      %v1625 = vsel %vm1416, %v1622, 0.0
      %1626 = vadd.xlane.f32.xlu0 %v1625
      %v1627 = vpop.xlane.xlu0 %1626
      %v1628 = vsel %vm1416, %v1624, 0.0
      %1629 = vadd.xlane.f32.xlu0 %v1628
      %v1630 = vpop.xlane.xlu0 %1629
      %v1631 = vrcp.pop %v1627
      %v1632 = vmul.f32 %v1622, %v1631
      %v1633 = vrcp.pop %v1630
      %v1634 = vmul.f32 %v1624, %v1633
      %1637 = vrot.lane.b32.xlu0 %v1318, 96
      %v1638 = vpop.permute.xlu0 %1637
      %1639 = vrot.lane.b32.xlu0 %v1323, 96
      %v1640 = vpop.permute.xlu0 %1639
      %v1644 = vsel %vm1416, %v1632, 0
      %v1647 = vsel %vm1416, %v1634, 0
      %1649 = vmatprep.subr.mxu0 0.0
      %1650 = vmatpush1.msra.mxu0 %v1638
      %1651 = vmatprep.subr.mxu0 0.0
      %1652 = vmatpush1.msra.mxu0 %v1640
      %1653 = vmatprep.subr.mxu0 0.0
      %1654 = vmatpush1.msra.mxu0 0.0
      %1655 = vmatprep.subr.mxu0 0.0
      %1656 = vmatpush1.msra.mxu0 0.0
      %1657 = vmatprep.subr.mxu0 0.0
      %1658 = vmatpush1.msra.mxu0 0.0
      %1659 = vmatprep.subr.mxu0 0.0
      %1660 = vmatpush1.msra.mxu0 0.0
      %1661 = vmatprep.subr.mxu0 0.0
      %1662 = vmatpush1.msra.mxu0 0.0
      %1663 = vmatprep.subr.mxu0 0.0
      %1664 = vmatpush1.msra.mxu0 0.0
      %1665 = vmatprep.subr.mxu0 0.0
      %1666 = vmatpush1.msra.mxu0 0.0
      %1667 = vmatprep.subr.mxu0 0.0
      %1668 = vmatpush1.msra.mxu0 0.0
      %1669 = vmatprep.subr.mxu0 0.0
      %1670 = vmatpush1.msra.mxu0 0.0
      %1671 = vmatprep.subr.mxu0 0.0
      %1672 = vmatpush1.msra.mxu0 0.0
      %1673 = vmatprep.subr.mxu0 0.0
      %1674 = vmatpush1.msra.mxu0 0.0
      %1675 = vmatprep.subr.mxu0 0.0
      %1676 = vmatpush1.msra.mxu0 0.0
      %1677 = vmatprep.subr.mxu0 0.0
      %1678 = vmatpush1.msra.mxu0 0.0
      %1679 = vmatprep.subr.mxu0 0.0
      %1680 = vmatpush1.msra.mxu0 0.0
      %1681 = vmatprep.subr.mxu0 0.0
      %1682 = vmatpush1.msra.mxu0 0.0
      %1683 = vmatprep.subr.mxu0 0.0
      %1684 = vmatpush1.msra.mxu0 0.0
      %1685 = vmatprep.subr.mxu0 0.0
      %1686 = vmatpush1.msra.mxu0 0.0
      %1687 = vmatprep.subr.mxu0 0.0
      %1688 = vmatpush1.msra.mxu0 0.0
      %1689 = vmatprep.subr.mxu0 0.0
      %1690 = vmatpush1.msra.mxu0 0.0
      %1691 = vmatprep.subr.mxu0 0.0
      %1692 = vmatpush1.msra.mxu0 0.0
      %1693 = vmatprep.subr.mxu0 0.0
      %1694 = vmatpush1.msra.mxu0 0.0
      %1695 = vmatprep.subr.mxu0 0.0
      %1696 = vmatpush1.msra.mxu0 0.0
      %1697 = vmatprep.subr.mxu0 0.0
      %1698 = vmatpush1.msra.mxu0 0.0
      %1699 = vmatprep.subr.mxu0 0.0
      %1700 = vmatpush1.msra.mxu0 0.0
      %1701 = vmatprep.subr.mxu0 0.0
      %1702 = vmatpush1.msra.mxu0 0.0
      %1703 = vmatprep.subr.mxu0 0.0
      %1704 = vmatpush1.msra.mxu0 0.0
      %1705 = vmatprep.subr.mxu0 0.0
      %1706 = vmatpush1.msra.mxu0 0.0
      %1707 = vmatprep.subr.mxu0 0.0
      %1708 = vmatpush1.msra.mxu0 0.0
      %1709 = vmatprep.subr.mxu0 0.0
      %1710 = vmatpush1.msra.mxu0 0.0
      %1711 = vmatprep.subr.mxu0 0.0
      %1712 = vmatpush1.msra.mxu0 0.0
      %1713 = vmatprep.mubr.f32.mxu0 0.0
      %1714 = vmatmul.mubr.f32.gmra.mrb[0].mxu0 %v1644
      %v1715 = vpop.f32.mrb[0].mxu0
      %v1716 = vadd.f32 0.0, %v1715
      %v1717 = vpop.f32.mrb[0].mxu0
      %1718 = vmatprep.mubr.f32.mxu0 0.0
      %1719 = vmatmul.mubr.f32.gmra.mrb[0].mxu0 %v1647
      %v1720 = vpop.f32.mrb[0].mxu0
      %v1721 = vadd.f32 0.0, %v1720
      %v1722 = vpop.f32.mrb[0].mxu0
      %1723 = vdwg.mxu0
      %1726 = vrot.lane.b32.xlu0 %v1716, 32
      %v1727 = vpop.permute.xlu0 %1726
      %1728 = vrot.lane.b32.xlu0 %v1721, 32
      %v1729 = vpop.permute.xlu0 %1728
      %vm1732 = vcmask 523520
      %1733 = vst.msk [vmem:[#allocation2] sm:$0xff] %vm1732, %v1727
      %1734 = vst.msk [vmem:[#allocation2 + $0x8] sm:$0xff] %vm1732, %v1729
      %1735 = vrot.lane.b32.xlu0 %v1326, 64
      %v1736 = vpop.permute.xlu0 %1735
      %1737 = vrot.lane.b32.xlu0 %v1327, 64
      %v1738 = vpop.permute.xlu0 %1737
      %1739 = vrot.lane.b32.xlu0 %v1243, 64
      %v1740 = vpop.permute.xlu0 %1739
      %1741 = vrot.lane.b32.xlu0 %v1249, 64
      %v1742 = vpop.permute.xlu0 %1741
      %v1743 = vsel %vm1328, %v1736, 0
      %v1745 = vsel %vm1328, %v1738, 0
      %v1747 = vsel %vm1328, %v1740, 0
      %v1749 = vsel %vm1328, %v1742, 0
      %1751 = vmatprep.subr.mxu0 0.0
      %1752 = vmatpush1.xpose.msra.mxu0 %v1747
      %1753 = vmatprep.subr.mxu0 0.0
      %1754 = vmatpush1.xpose.msra.mxu0 %v1749
      %1755 = vmatprep.subr.mxu0 0.0
      %1756 = vmatpush1.xpose.msra.mxu0 0.0
      %1757 = vmatprep.subr.mxu0 0.0
      %1758 = vmatpush1.xpose.msra.mxu0 0.0
      %1759 = vmatprep.subr.mxu0 0.0
      %1760 = vmatpush1.xpose.msra.mxu0 0.0
      %1761 = vmatprep.subr.mxu0 0.0
      %1762 = vmatpush1.xpose.msra.mxu0 0.0
      %1763 = vmatprep.subr.mxu0 0.0
      %1764 = vmatpush1.xpose.msra.mxu0 0.0
      %1765 = vmatprep.subr.mxu0 0.0
      %1766 = vmatpush1.xpose.msra.mxu0 0.0
      %1767 = vmatprep.subr.mxu0 0.0
      %1768 = vmatpush1.xpose.msra.mxu0 0.0
      %1769 = vmatprep.subr.mxu0 0.0
      %1770 = vmatpush1.xpose.msra.mxu0 0.0
      %1771 = vmatprep.subr.mxu0 0.0
      %1772 = vmatpush1.xpose.msra.mxu0 0.0
      %1773 = vmatprep.subr.mxu0 0.0
      %1774 = vmatpush1.xpose.msra.mxu0 0.0
      %1775 = vmatprep.subr.mxu0 0.0
      %1776 = vmatpush1.xpose.msra.mxu0 0.0
      %1777 = vmatprep.subr.mxu0 0.0
      %1778 = vmatpush1.xpose.msra.mxu0 0.0
      %1779 = vmatprep.subr.mxu0 0.0
      %1780 = vmatpush1.xpose.msra.mxu0 0.0
      %1781 = vmatprep.subr.mxu0 0.0
      %1782 = vmatpush1.xpose.msra.mxu0 0.0
      %1783 = vmatprep.subr.mxu0 0.0
      %1784 = vmatpush1.xpose.msra.mxu0 0.0
      %1785 = vmatprep.subr.mxu0 0.0
      %1786 = vmatpush1.xpose.msra.mxu0 0.0
      %1787 = vmatprep.subr.mxu0 0.0
      %1788 = vmatpush1.xpose.msra.mxu0 0.0
      %1789 = vmatprep.subr.mxu0 0.0
      %1790 = vmatpush1.xpose.msra.mxu0 0.0
      %1791 = vmatprep.subr.mxu0 0.0
      %1792 = vmatpush1.xpose.msra.mxu0 0.0
      %1793 = vmatprep.subr.mxu0 0.0
      %1794 = vmatpush1.xpose.msra.mxu0 0.0
      %1795 = vmatprep.subr.mxu0 0.0
      %1796 = vmatpush1.xpose.msra.mxu0 0.0
      %1797 = vmatprep.subr.mxu0 0.0
      %1798 = vmatpush1.xpose.msra.mxu0 0.0
      %1799 = vmatprep.subr.mxu0 0.0
      %1800 = vmatpush1.xpose.msra.mxu0 0.0
      %1801 = vmatprep.subr.mxu0 0.0
      %1802 = vmatpush1.xpose.msra.mxu0 0.0
      %1803 = vmatprep.subr.mxu0 0.0
      %1804 = vmatpush1.xpose.msra.mxu0 0.0
      %1805 = vmatprep.subr.mxu0 0.0
      %1806 = vmatpush1.xpose.msra.mxu0 0.0
      %1807 = vmatprep.subr.mxu0 0.0
      %1808 = vmatpush1.xpose.msra.mxu0 0.0
      %1809 = vmatprep.subr.mxu0 0.0
      %1810 = vmatpush1.xpose.msra.mxu0 0.0
      %1811 = vmatprep.subr.mxu0 0.0
      %1812 = vmatpush1.xpose.msra.mxu0 0.0
      %1813 = vmatprep.subr.mxu0 0.0
      %1814 = vmatpush1.xpose.msra.mxu0 0.0
      %1815 = vmatprep.mubr.f32.mxu0 0.0
      %1816 = vmatmul.mubr.f32.gmra.mrb[0].mxu0 %v1743
      %v1817 = vpop.f32.mrb[0].mxu0
      %v1818 = vadd.f32 0.0, %v1817
      %v1819 = vpop.f32.mrb[0].mxu0
      %1820 = vmatprep.mubr.f32.mxu0 0.0
      %1821 = vmatmul.mubr.f32.gmra.mrb[0].mxu0 %v1745
      %v1822 = vpop.f32.mrb[0].mxu0
      %v1823 = vadd.f32 0.0, %v1822
      %v1824 = vpop.f32.mrb[0].mxu0
      %1825 = vdwg.mxu0
      %v1826 = vsel %vm1416, %v1818, -inf
      %1827 = vmax.xlane.f32.xlu0 %v1826
      %v1828 = vpop.xlane.xlu0 %1827
      %v1829 = vsel %vm1416, %v1823, -inf
      %1830 = vmax.xlane.f32.xlu0 %v1829
      %v1831 = vpop.xlane.xlu0 %1830
      %v1832 = vsub.f32 %v1818, %v1828
      %v1833 = vsub.f32 %v1823, %v1831
      %v1834 = vmul.f32 %v1832, 1.442695
      %v1835 = vpow.pop %v1834
      %v1836 = vmul.f32 %v1833, 1.442695
      %v1837 = vpow.pop %v1836
      %v1838 = vsel %vm1416, %v1835, 0.0
      %1839 = vadd.xlane.f32.xlu0 %v1838
      %v1840 = vpop.xlane.xlu0 %1839
      %v1841 = vsel %vm1416, %v1837, 0.0
      %1842 = vadd.xlane.f32.xlu0 %v1841
      %v1843 = vpop.xlane.xlu0 %1842
      %v1844 = vrcp.pop %v1840
      %v1845 = vmul.f32 %v1835, %v1844
      %v1846 = vrcp.pop %v1843
      %v1847 = vmul.f32 %v1837, %v1846
      %1848 = vrot.lane.b32.xlu0 %v1318, 64
      %v1849 = vpop.permute.xlu0 %1848
      %1850 = vrot.lane.b32.xlu0 %v1323, 64
      %v1851 = vpop.permute.xlu0 %1850
      %v1855 = vsel %vm1416, %v1845, 0
      %v1858 = vsel %vm1416, %v1847, 0
      %1860 = vmatprep.subr.mxu0 0.0
      %1861 = vmatpush1.msra.mxu0 %v1849
      %1862 = vmatprep.subr.mxu0 0.0
      %1863 = vmatpush1.msra.mxu0 %v1851
      %1864 = vmatprep.subr.mxu0 0.0
      %1865 = vmatpush1.msra.mxu0 0.0
      %1866 = vmatprep.subr.mxu0 0.0
      %1867 = vmatpush1.msra.mxu0 0.0
      %1868 = vmatprep.subr.mxu0 0.0
      %1869 = vmatpush1.msra.mxu0 0.0
      %1870 = vmatprep.subr.mxu0 0.0
      %1871 = vmatpush1.msra.mxu0 0.0
      %1872 = vmatprep.subr.mxu0 0.0
      %1873 = vmatpush1.msra.mxu0 0.0
      %1874 = vmatprep.subr.mxu0 0.0
      %1875 = vmatpush1.msra.mxu0 0.0
      %1876 = vmatprep.subr.mxu0 0.0
      %1877 = vmatpush1.msra.mxu0 0.0
      %1878 = vmatprep.subr.mxu0 0.0
      %1879 = vmatpush1.msra.mxu0 0.0
      %1880 = vmatprep.subr.mxu0 0.0
      %1881 = vmatpush1.msra.mxu0 0.0
      %1882 = vmatprep.subr.mxu0 0.0
      %1883 = vmatpush1.msra.mxu0 0.0
      %1884 = vmatprep.subr.mxu0 0.0
      %1885 = vmatpush1.msra.mxu0 0.0
      %1886 = vmatprep.subr.mxu0 0.0
      %1887 = vmatpush1.msra.mxu0 0.0
      %1888 = vmatprep.subr.mxu0 0.0
      %1889 = vmatpush1.msra.mxu0 0.0
      %1890 = vmatprep.subr.mxu0 0.0
      %1891 = vmatpush1.msra.mxu0 0.0
      %1892 = vmatprep.subr.mxu0 0.0
      %1893 = vmatpush1.msra.mxu0 0.0
      %1894 = vmatprep.subr.mxu0 0.0
      %1895 = vmatpush1.msra.mxu0 0.0
      %1896 = vmatprep.subr.mxu0 0.0
      %1897 = vmatpush1.msra.mxu0 0.0
      %1898 = vmatprep.subr.mxu0 0.0
      %1899 = vmatpush1.msra.mxu0 0.0
      %1900 = vmatprep.subr.mxu0 0.0
      %1901 = vmatpush1.msra.mxu0 0.0
      %1902 = vmatprep.subr.mxu0 0.0
      %1903 = vmatpush1.msra.mxu0 0.0
      %1904 = vmatprep.subr.mxu0 0.0
      %1905 = vmatpush1.msra.mxu0 0.0
      %1906 = vmatprep.subr.mxu0 0.0
      %1907 = vmatpush1.msra.mxu0 0.0
      %1908 = vmatprep.subr.mxu0 0.0
      %1909 = vmatpush1.msra.mxu0 0.0
      %1910 = vmatprep.subr.mxu0 0.0
      %1911 = vmatpush1.msra.mxu0 0.0
      %1912 = vmatprep.subr.mxu0 0.0
      %1913 = vmatpush1.msra.mxu0 0.0
      %1914 = vmatprep.subr.mxu0 0.0
      %1915 = vmatpush1.msra.mxu0 0.0
      %1916 = vmatprep.subr.mxu0 0.0
      %1917 = vmatpush1.msra.mxu0 0.0
      %1918 = vmatprep.subr.mxu0 0.0
      %1919 = vmatpush1.msra.mxu0 0.0
      %1920 = vmatprep.subr.mxu0 0.0
      %1921 = vmatpush1.msra.mxu0 0.0
      %1922 = vmatprep.subr.mxu0 0.0
      %1923 = vmatpush1.msra.mxu0 0.0
      %1924 = vmatprep.mubr.f32.mxu0 0.0
      %1925 = vmatmul.mubr.f32.gmra.mrb[0].mxu0 %v1855
      %v1926 = vpop.f32.mrb[0].mxu0
      %v1927 = vadd.f32 0.0, %v1926
      %v1928 = vpop.f32.mrb[0].mxu0
      %1929 = vmatprep.mubr.f32.mxu0 0.0
      %1930 = vmatmul.mubr.f32.gmra.mrb[0].mxu0 %v1858
      %v1931 = vpop.f32.mrb[0].mxu0
      %v1932 = vadd.f32 0.0, %v1931
      %v1933 = vpop.f32.mrb[0].mxu0
      %1934 = vdwg.mxu0
      %1937 = vrot.lane.b32.xlu0 %v1927, 64
      %v1938 = vpop.permute.xlu0 %1937
      %1939 = vrot.lane.b32.xlu0 %v1932, 64
      %v1940 = vpop.permute.xlu0 %1939
      %vm1943 = vcmask 785920
      %1944 = vst.msk [vmem:[#allocation2] sm:$0xff] %vm1943, %v1938
      %1945 = vst.msk [vmem:[#allocation2 + $0x8] sm:$0xff] %vm1943, %v1940
      %1946 = vrot.lane.b32.xlu0 %v1326, 32
      %v1947 = vpop.permute.xlu0 %1946
      %1948 = vrot.lane.b32.xlu0 %v1327, 32
      %v1949 = vpop.permute.xlu0 %1948
      %1950 = vrot.lane.b32.xlu0 %v1243, 32
      %v1951 = vpop.permute.xlu0 %1950
      %1952 = vrot.lane.b32.xlu0 %v1249, 32
      %v1953 = vpop.permute.xlu0 %1952
      %v1954 = vsel %vm1328, %v1947, 0
      %v1956 = vsel %vm1328, %v1949, 0
      %v1958 = vsel %vm1328, %v1951, 0
      %v1960 = vsel %vm1328, %v1953, 0
      %1962 = vmatprep.subr.mxu0 0.0
      %1963 = vmatpush1.xpose.msra.mxu0 %v1958
      %1964 = vmatprep.subr.mxu0 0.0
      %1965 = vmatpush1.xpose.msra.mxu0 %v1960
      %1966 = vmatprep.subr.mxu0 0.0
      %1967 = vmatpush1.xpose.msra.mxu0 0.0
      %1968 = vmatprep.subr.mxu0 0.0
      %1969 = vmatpush1.xpose.msra.mxu0 0.0
      %1970 = vmatprep.subr.mxu0 0.0
      %1971 = vmatpush1.xpose.msra.mxu0 0.0
      %1972 = vmatprep.subr.mxu0 0.0
      %1973 = vmatpush1.xpose.msra.mxu0 0.0
      %1974 = vmatprep.subr.mxu0 0.0
      %1975 = vmatpush1.xpose.msra.mxu0 0.0
      %1976 = vmatprep.subr.mxu0 0.0
      %1977 = vmatpush1.xpose.msra.mxu0 0.0
      %1978 = vmatprep.subr.mxu0 0.0
      %1979 = vmatpush1.xpose.msra.mxu0 0.0
      %1980 = vmatprep.subr.mxu0 0.0
      %1981 = vmatpush1.xpose.msra.mxu0 0.0
      %1982 = vmatprep.subr.mxu0 0.0
      %1983 = vmatpush1.xpose.msra.mxu0 0.0
      %1984 = vmatprep.subr.mxu0 0.0
      %1985 = vmatpush1.xpose.msra.mxu0 0.0
      %1986 = vmatprep.subr.mxu0 0.0
      %1987 = vmatpush1.xpose.msra.mxu0 0.0
      %1988 = vmatprep.subr.mxu0 0.0
      %1989 = vmatpush1.xpose.msra.mxu0 0.0
      %1990 = vmatprep.subr.mxu0 0.0
      %1991 = vmatpush1.xpose.msra.mxu0 0.0
      %1992 = vmatprep.subr.mxu0 0.0
      %1993 = vmatpush1.xpose.msra.mxu0 0.0
      %1994 = vmatprep.subr.mxu0 0.0
      %1995 = vmatpush1.xpose.msra.mxu0 0.0
      %1996 = vmatprep.subr.mxu0 0.0
      %1997 = vmatpush1.xpose.msra.mxu0 0.0
      %1998 = vmatprep.subr.mxu0 0.0
      %1999 = vmatpush1.xpose.msra.mxu0 0.0
      %2000 = vmatprep.subr.mxu0 0.0
      %2001 = vmatpush1.xpose.msra.mxu0 0.0
      %2002 = vmatprep.subr.mxu0 0.0
      %2003 = vmatpush1.xpose.msra.mxu0 0.0
      %2004 = vmatprep.subr.mxu0 0.0
      %2005 = vmatpush1.xpose.msra.mxu0 0.0
      %2006 = vmatprep.subr.mxu0 0.0
      %2007 = vmatpush1.xpose.msra.mxu0 0.0
      %2008 = vmatprep.subr.mxu0 0.0
      %2009 = vmatpush1.xpose.msra.mxu0 0.0
      %2010 = vmatprep.subr.mxu0 0.0
      %2011 = vmatpush1.xpose.msra.mxu0 0.0
      %2012 = vmatprep.subr.mxu0 0.0
      %2013 = vmatpush1.xpose.msra.mxu0 0.0
      %2014 = vmatprep.subr.mxu0 0.0
      %2015 = vmatpush1.xpose.msra.mxu0 0.0
      %2016 = vmatprep.subr.mxu0 0.0
      %2017 = vmatpush1.xpose.msra.mxu0 0.0
      %2018 = vmatprep.subr.mxu0 0.0
      %2019 = vmatpush1.xpose.msra.mxu0 0.0
      %2020 = vmatprep.subr.mxu0 0.0
      %2021 = vmatpush1.xpose.msra.mxu0 0.0
      %2022 = vmatprep.subr.mxu0 0.0
      %2023 = vmatpush1.xpose.msra.mxu0 0.0
      %2024 = vmatprep.subr.mxu0 0.0
      %2025 = vmatpush1.xpose.msra.mxu0 0.0
      %2026 = vmatprep.mubr.f32.mxu0 0.0
      %2027 = vmatmul.mubr.f32.gmra.mrb[0].mxu0 %v1954
      %v2028 = vpop.f32.mrb[0].mxu0
      %v2029 = vadd.f32 0.0, %v2028
      %v2030 = vpop.f32.mrb[0].mxu0
      %2031 = vmatprep.mubr.f32.mxu0 0.0
      %2032 = vmatmul.mubr.f32.gmra.mrb[0].mxu0 %v1956
      %v2033 = vpop.f32.mrb[0].mxu0
      %v2034 = vadd.f32 0.0, %v2033
      %v2035 = vpop.f32.mrb[0].mxu0
      %2036 = vdwg.mxu0
      %v2037 = vsel %vm1416, %v2029, -inf
      %2038 = vmax.xlane.f32.xlu0 %v2037
      %v2039 = vpop.xlane.xlu0 %2038
      %v2040 = vsel %vm1416, %v2034, -inf
      %2041 = vmax.xlane.f32.xlu0 %v2040
      %v2042 = vpop.xlane.xlu0 %2041
      %v2043 = vsub.f32 %v2029, %v2039
      %v2044 = vsub.f32 %v2034, %v2042
      %v2045 = vmul.f32 %v2043, 1.442695
      %v2046 = vpow.pop %v2045
      %v2047 = vmul.f32 %v2044, 1.442695
      %v2048 = vpow.pop %v2047
      %v2049 = vsel %vm1416, %v2046, 0.0
      %2050 = vadd.xlane.f32.xlu0 %v2049
      %v2051 = vpop.xlane.xlu0 %2050
      %v2052 = vsel %vm1416, %v2048, 0.0
      %2053 = vadd.xlane.f32.xlu0 %v2052
      %v2054 = vpop.xlane.xlu0 %2053
      %v2055 = vrcp.pop %v2051
      %v2056 = vmul.f32 %v2046, %v2055
      %v2057 = vrcp.pop %v2054
      %v2058 = vmul.f32 %v2048, %v2057
      %2059 = vrot.lane.b32.xlu0 %v1318, 32
      %v2060 = vpop.permute.xlu0 %2059
      %2061 = vrot.lane.b32.xlu0 %v1323, 32
      %v2062 = vpop.permute.xlu0 %2061
      %v2066 = vsel %vm1416, %v2056, 0
      %v2069 = vsel %vm1416, %v2058, 0
      %2071 = vmatprep.subr.mxu0 0.0
      %2072 = vmatpush1.msra.mxu0 %v2060
      %2073 = vmatprep.subr.mxu0 0.0
      %2074 = vmatpush1.msra.mxu0 %v2062
      %2075 = vmatprep.subr.mxu0 0.0
      %2076 = vmatpush1.msra.mxu0 0.0
      %2077 = vmatprep.subr.mxu0 0.0
      %2078 = vmatpush1.msra.mxu0 0.0
      %2079 = vmatprep.subr.mxu0 0.0
      %2080 = vmatpush1.msra.mxu0 0.0
      %2081 = vmatprep.subr.mxu0 0.0
      %2082 = vmatpush1.msra.mxu0 0.0
      %2083 = vmatprep.subr.mxu0 0.0
      %2084 = vmatpush1.msra.mxu0 0.0
      %2085 = vmatprep.subr.mxu0 0.0
      %2086 = vmatpush1.msra.mxu0 0.0
      %2087 = vmatprep.subr.mxu0 0.0
      %2088 = vmatpush1.msra.mxu0 0.0
      %2089 = vmatprep.subr.mxu0 0.0
      %2090 = vmatpush1.msra.mxu0 0.0
      %2091 = vmatprep.subr.mxu0 0.0
      %2092 = vmatpush1.msra.mxu0 0.0
      %2093 = vmatprep.subr.mxu0 0.0
      %2094 = vmatpush1.msra.mxu0 0.0
      %2095 = vmatprep.subr.mxu0 0.0
      %2096 = vmatpush1.msra.mxu0 0.0
      %2097 = vmatprep.subr.mxu0 0.0
      %2098 = vmatpush1.msra.mxu0 0.0
      %2099 = vmatprep.subr.mxu0 0.0
      %2100 = vmatpush1.msra.mxu0 0.0
      %2101 = vmatprep.subr.mxu0 0.0
      %2102 = vmatpush1.msra.mxu0 0.0
      %2103 = vmatprep.subr.mxu0 0.0
      %2104 = vmatpush1.msra.mxu0 0.0
      %2105 = vmatprep.subr.mxu0 0.0
      %2106 = vmatpush1.msra.mxu0 0.0
      %2107 = vmatprep.subr.mxu0 0.0
      %2108 = vmatpush1.msra.mxu0 0.0
      %2109 = vmatprep.subr.mxu0 0.0
      %2110 = vmatpush1.msra.mxu0 0.0
      %2111 = vmatprep.subr.mxu0 0.0
      %2112 = vmatpush1.msra.mxu0 0.0
      %2113 = vmatprep.subr.mxu0 0.0
      %2114 = vmatpush1.msra.mxu0 0.0
      %2115 = vmatprep.subr.mxu0 0.0
      %2116 = vmatpush1.msra.mxu0 0.0
      %2117 = vmatprep.subr.mxu0 0.0
      %2118 = vmatpush1.msra.mxu0 0.0
      %2119 = vmatprep.subr.mxu0 0.0
      %2120 = vmatpush1.msra.mxu0 0.0
      %2121 = vmatprep.subr.mxu0 0.0
      %2122 = vmatpush1.msra.mxu0 0.0
      %2123 = vmatprep.subr.mxu0 0.0
      %2124 = vmatpush1.msra.mxu0 0.0
      %2125 = vmatprep.subr.mxu0 0.0
      %2126 = vmatpush1.msra.mxu0 0.0
      %2127 = vmatprep.subr.mxu0 0.0
      %2128 = vmatpush1.msra.mxu0 0.0
      %2129 = vmatprep.subr.mxu0 0.0
      %2130 = vmatpush1.msra.mxu0 0.0
      %2131 = vmatprep.subr.mxu0 0.0
      %2132 = vmatpush1.msra.mxu0 0.0
      %2133 = vmatprep.subr.mxu0 0.0
      %2134 = vmatpush1.msra.mxu0 0.0
      %2135 = vmatprep.mubr.f32.mxu0 0.0
      %2136 = vmatmul.mubr.f32.gmra.mrb[0].mxu0 %v2066
      %v2137 = vpop.f32.mrb[0].mxu0
      %v2138 = vadd.f32 0.0, %v2137
      %v2139 = vpop.f32.mrb[0].mxu0
      %2140 = vmatprep.mubr.f32.mxu0 0.0
      %2141 = vmatmul.mubr.f32.gmra.mrb[0].mxu0 %v2069
      %v2142 = vpop.f32.mrb[0].mxu0
      %v2143 = vadd.f32 0.0, %v2142
      %v2144 = vpop.f32.mrb[0].mxu0
      %2145 = vdwg.mxu0
      %2148 = vrot.lane.b32.xlu0 %v2138, 96
      %v2149 = vpop.permute.xlu0 %2148
      %2150 = vrot.lane.b32.xlu0 %v2143, 96
      %v2151 = vpop.permute.xlu0 %2150
      %vm2154 = vcmask 1048320
      %2155 = vst.msk [vmem:[#allocation2] sm:$0xff] %vm2154, %v2149
      %2156 = vst.msk [vmem:[#allocation2 + $0x8] sm:$0xff] %vm2154, %v2151
      %v2157 = vld [vmem:[#allocation2] sm:$0xff]
      %v2158 = vld [vmem:[#allocation2 + $0x8] sm:$0xff]
      %v2159 = vld [vmem:[%s8] sm:$0xff]
      %v2160 = vld [vmem:[%s8 + $0x8] sm:$0xff]
      %v2161 = vld [vmem:[%s8 + $0x10] sm:$0xff]
      %v2162 = vld [vmem:[%s8 + $0x18] sm:$0xff]
      %v2163 = vld [vmem:[%s8 + $0x20] sm:$0xff]
      %v2164 = vld [vmem:[%s8 + $0x28] sm:$0xff]
      %v2165 = vld [vmem:[%s8 + $0x30] sm:$0xff]
      %v2166 = vld [vmem:[%s8 + $0x38] sm:$0xff]
      %v2167 = vld [vmem:[%s8 + $0x40] sm:$0xff]
      %v2168 = vld [vmem:[%s8 + $0x48] sm:$0xff]
      %v2169 = vld [vmem:[%s8 + $0x50] sm:$0xff]
      %v2170 = vld [vmem:[%s8 + $0x58] sm:$0xff]
      %v2171 = vld [vmem:[%s8 + $0x60] sm:$0xff]
      %v2172 = vld [vmem:[%s8 + $0x68] sm:$0xff]
      %v2173 = vld [vmem:[%s8 + $0x70] sm:$0xff]
      %v2174 = vld [vmem:[%s8 + $0x78] sm:$0xff]
      %2175 = vmatprep.subr.mxu0 0.0
      %2176 = vmatpush1.msra.mxu0 %v2159
      %2177 = vmatprep.subr.mxu0 0.0
      %2178 = vmatpush1.msra.mxu0 %v2160
      %2179 = vmatprep.subr.mxu0 0.0
      %2180 = vmatpush1.msra.mxu0 %v2161
      %2181 = vmatprep.subr.mxu0 0.0
      %2182 = vmatpush1.msra.mxu0 %v2162
      %2183 = vmatprep.subr.mxu0 0.0
      %2184 = vmatpush1.msra.mxu0 %v2163
      %2185 = vmatprep.subr.mxu0 0.0
      %2186 = vmatpush1.msra.mxu0 %v2164
      %2187 = vmatprep.subr.mxu0 0.0
      %2188 = vmatpush1.msra.mxu0 %v2165
      %2189 = vmatprep.subr.mxu0 0.0
      %2190 = vmatpush1.msra.mxu0 %v2166
      %2191 = vmatprep.subr.mxu0 0.0
      %2192 = vmatpush1.msra.mxu0 %v2167
      %2193 = vmatprep.subr.mxu0 0.0
      %2194 = vmatpush1.msra.mxu0 %v2168
      %2195 = vmatprep.subr.mxu0 0.0
      %2196 = vmatpush1.msra.mxu0 %v2169
      %2197 = vmatprep.subr.mxu0 0.0
      %2198 = vmatpush1.msra.mxu0 %v2170
      %2199 = vmatprep.subr.mxu0 0.0
      %2200 = vmatpush1.msra.mxu0 %v2171
      %2201 = vmatprep.subr.mxu0 0.0
      %2202 = vmatpush1.msra.mxu0 %v2172
      %2203 = vmatprep.subr.mxu0 0.0
      %2204 = vmatpush1.msra.mxu0 %v2173
      %2205 = vmatprep.subr.mxu0 0.0
      %2206 = vmatpush1.msra.mxu0 %v2174
      %2207 = vmatprep.subr.mxu0 0.0
      %2208 = vmatpush1.msra.mxu0 0.0
      %2209 = vmatprep.subr.mxu0 0.0
      %2210 = vmatpush1.msra.mxu0 0.0
      %2211 = vmatprep.subr.mxu0 0.0
      %2212 = vmatpush1.msra.mxu0 0.0
      %2213 = vmatprep.subr.mxu0 0.0
      %2214 = vmatpush1.msra.mxu0 0.0
      %2215 = vmatprep.subr.mxu0 0.0
      %2216 = vmatpush1.msra.mxu0 0.0
      %2217 = vmatprep.subr.mxu0 0.0
      %2218 = vmatpush1.msra.mxu0 0.0
      %2219 = vmatprep.subr.mxu0 0.0
      %2220 = vmatpush1.msra.mxu0 0.0
      %2221 = vmatprep.subr.mxu0 0.0
      %2222 = vmatpush1.msra.mxu0 0.0
      %2223 = vmatprep.subr.mxu0 0.0
      %2224 = vmatpush1.msra.mxu0 0.0
      %2225 = vmatprep.subr.mxu0 0.0
      %2226 = vmatpush1.msra.mxu0 0.0
      %2227 = vmatprep.subr.mxu0 0.0
      %2228 = vmatpush1.msra.mxu0 0.0
      %2229 = vmatprep.subr.mxu0 0.0
      %2230 = vmatpush1.msra.mxu0 0.0
      %2231 = vmatprep.subr.mxu0 0.0
      %2232 = vmatpush1.msra.mxu0 0.0
      %2233 = vmatprep.subr.mxu0 0.0
      %2234 = vmatpush1.msra.mxu0 0.0
      %2235 = vmatprep.subr.mxu0 0.0
      %2236 = vmatpush1.msra.mxu0 0.0
      %2237 = vmatprep.subr.mxu0 0.0
      %2238 = vmatpush1.msra.mxu0 0.0
      %2239 = vmatprep.mubr.f32.mxu0 0.0
      %2240 = vmatmul.mubr.f32.gmra.mrb[0].mxu0 %v2157
      %v2241 = vpop.f32.mrb[0].mxu0
      %v2242 = vadd.f32 0.0, %v2241
      %v2243 = vpop.f32.mrb[0].mxu0
      %2244 = vmatprep.mubr.f32.mxu0 0.0
      %2245 = vmatmul.mubr.f32.gmra.mrb[0].mxu0 %v2158
      %v2246 = vpop.f32.mrb[0].mxu0
      %v2247 = vadd.f32 0.0, %v2246
      %v2248 = vpop.f32.mrb[0].mxu0
      %2249 = vdwg.mxu0
      %v2250 = vadd.f32 %v1066, %v2242
      %v2251 = vadd.f32 %v1067, %v2247
      %v2252 = vld [vmem:[%s9] sm:$0x1]
      %v2254 = vlaneseq
      %v2255 = vshrl.u32 %v2254, 7
      %v2256 = vsub.s32 0, %v2255
      %v2257 = vrot.slane %v2252, %v2256
      %v2259 = vadd.f32 %v2250, %v2257
      %v2260 = vadd.f32 %v2251, %v2257
      %v2261 = vld [vmem:[%s10] sm:$0x1]
      %v2262 = vld [vmem:[%s11] sm:$0x1]
      %2263 = vadd.xlane.f32.xlu0 %v2259
      %v2264 = vpop.xlane.xlu0 %2263
      %2265 = vadd.xlane.f32.xlu0 %v2260
      %v2266 = vpop.xlane.xlu0 %2265
      %v2267 = vmul.f32 %v2264, %v1074
      %v2268 = vmul.f32 %v2266, %v1074
      %v2269 = vsub.f32 %v2259, %v2267
      %v2270 = vsub.f32 %v2260, %v2268
      %v2271 = vmul.f32 %v2269, %v2269
      %v2272 = vmul.f32 %v2270, %v2270
      %2273 = vadd.xlane.f32.xlu0 %v2271
      %v2274 = vpop.xlane.xlu0 %2273
      %2275 = vadd.xlane.f32.xlu0 %v2272
      %v2276 = vpop.xlane.xlu0 %2275
      %v2277 = vmul.f32 %v2274, %v1074
      %v2278 = vmul.f32 %v2276, %v1074
      %v2279 = vadd.f32 %v2277, 1e-05
      %v2280 = vadd.f32 %v2278, 1e-05
      %v2281 = vrsqrt.pop %v2279
      %v2282 = vrsqrt.pop %v2280
      %v2283 = vmul.f32 %v2269, %v2281
      %v2284 = vmul.f32 %v2270, %v2282
      %v2286 = vlaneseq
      %v2287 = vshrl.u32 %v2286, 7
      %v2288 = vsub.s32 0, %v2287
      %v2289 = vrot.slane %v2261, %v2288
      %v2291 = vmul.f32 %v2283, %v2289
      %v2292 = vmul.f32 %v2284, %v2289
      %v2294 = vlaneseq
      %v2295 = vshrl.u32 %v2294, 7
      %v2296 = vsub.s32 0, %v2295
      %v2297 = vrot.slane %v2262, %v2296
      %v2299 = vadd.f32 %v2291, %v2297
      %v2300 = vadd.f32 %v2292, %v2297
      %v2301 = vld [vmem:[%s12] sm:$0xff]
      %v2302 = vld [vmem:[%s12 + $0x8] sm:$0xff]
      %v2303 = vld [vmem:[%s12 + $0x10] sm:$0xff]
      %v2304 = vld [vmem:[%s12 + $0x18] sm:$0xff]
      %v2305 = vld [vmem:[%s12 + $0x20] sm:$0xff]
      %v2306 = vld [vmem:[%s12 + $0x28] sm:$0xff]
      %v2307 = vld [vmem:[%s12 + $0x30] sm:$0xff]
      %v2308 = vld [vmem:[%s12 + $0x38] sm:$0xff]
      %v2309 = vld [vmem:[%s12 + $0x40] sm:$0xff]
      %v2310 = vld [vmem:[%s12 + $0x48] sm:$0xff]
      %v2311 = vld [vmem:[%s12 + $0x50] sm:$0xff]
      %v2312 = vld [vmem:[%s12 + $0x58] sm:$0xff]
      %v2313 = vld [vmem:[%s12 + $0x60] sm:$0xff]
      %v2314 = vld [vmem:[%s12 + $0x68] sm:$0xff]
      %v2315 = vld [vmem:[%s12 + $0x70] sm:$0xff]
      %v2316 = vld [vmem:[%s12 + $0x78] sm:$0xff]
      %v2317 = vld [vmem:[%s12 + $0x80] sm:$0xff]
      %v2318 = vld [vmem:[%s12 + $0x88] sm:$0xff]
      %v2319 = vld [vmem:[%s12 + $0x90] sm:$0xff]
      %v2320 = vld [vmem:[%s12 + $0x98] sm:$0xff]
      %v2321 = vld [vmem:[%s12 + $0xa0] sm:$0xff]
      %v2322 = vld [vmem:[%s12 + $0xa8] sm:$0xff]
      %v2323 = vld [vmem:[%s12 + $0xb0] sm:$0xff]
      %v2324 = vld [vmem:[%s12 + $0xb8] sm:$0xff]
      %v2325 = vld [vmem:[%s12 + $0xc0] sm:$0xff]
      %v2326 = vld [vmem:[%s12 + $0xc8] sm:$0xff]
      %v2327 = vld [vmem:[%s12 + $0xd0] sm:$0xff]
      %v2328 = vld [vmem:[%s12 + $0xd8] sm:$0xff]
      %v2329 = vld [vmem:[%s12 + $0xe0] sm:$0xff]
      %v2330 = vld [vmem:[%s12 + $0xe8] sm:$0xff]
      %v2331 = vld [vmem:[%s12 + $0xf0] sm:$0xff]
      %v2332 = vld [vmem:[%s12 + $0xf8] sm:$0xff]
      %v2333 = vld [vmem:[%s13] sm:$0x3]
      %v2335 = vlaneseq
      %v2336 = vshrl.u32 %v2335, 7
      %v2337 = vsub.s32 0, %v2336
      %v2338 = vrot.slane %v2333, %v2337
      %v2339 = vlaneseq
      %v2340 = vshrl.u32 %v2339, 7
      %v2341 = vsub.s32 1, %v2340
      %v2342 = vrot.slane %v2333, %v2341
      %2345 = vmatprep.subr.mxu0 %v2302
      %2346 = vmatpush1.msra.mxu0 %v2301
      %2347 = vmatprep.subr.mxu0 %v2304
      %2348 = vmatpush1.msra.mxu0 %v2303
      %2349 = vmatprep.subr.mxu0 %v2306
      %2350 = vmatpush1.msra.mxu0 %v2305
      %2351 = vmatprep.subr.mxu0 %v2308
      %2352 = vmatpush1.msra.mxu0 %v2307
      %2353 = vmatprep.subr.mxu0 %v2310
      %2354 = vmatpush1.msra.mxu0 %v2309
      %2355 = vmatprep.subr.mxu0 %v2312
      %2356 = vmatpush1.msra.mxu0 %v2311
      %2357 = vmatprep.subr.mxu0 %v2314
      %2358 = vmatpush1.msra.mxu0 %v2313
      %2359 = vmatprep.subr.mxu0 %v2316
      %2360 = vmatpush1.msra.mxu0 %v2315
      %2361 = vmatprep.subr.mxu0 %v2318
      %2362 = vmatpush1.msra.mxu0 %v2317
      %2363 = vmatprep.subr.mxu0 %v2320
      %2364 = vmatpush1.msra.mxu0 %v2319
      %2365 = vmatprep.subr.mxu0 %v2322
      %2366 = vmatpush1.msra.mxu0 %v2321
      %2367 = vmatprep.subr.mxu0 %v2324
      %2368 = vmatpush1.msra.mxu0 %v2323
      %2369 = vmatprep.subr.mxu0 %v2326
      %2370 = vmatpush1.msra.mxu0 %v2325
      %2371 = vmatprep.subr.mxu0 %v2328
      %2372 = vmatpush1.msra.mxu0 %v2327
      %2373 = vmatprep.subr.mxu0 %v2330
      %2374 = vmatpush1.msra.mxu0 %v2329
      %2375 = vmatprep.subr.mxu0 %v2332
      %2376 = vmatpush1.msra.mxu0 %v2331
      %2377 = vmatprep.subr.mxu0 0.0
      %2378 = vmatpush1.msra.mxu0 0.0
      %2379 = vmatprep.subr.mxu0 0.0
      %2380 = vmatpush1.msra.mxu0 0.0
      %2381 = vmatprep.subr.mxu0 0.0
      %2382 = vmatpush1.msra.mxu0 0.0
      %2383 = vmatprep.subr.mxu0 0.0
      %2384 = vmatpush1.msra.mxu0 0.0
      %2385 = vmatprep.subr.mxu0 0.0
      %2386 = vmatpush1.msra.mxu0 0.0
      %2387 = vmatprep.subr.mxu0 0.0
      %2388 = vmatpush1.msra.mxu0 0.0
      %2389 = vmatprep.subr.mxu0 0.0
      %2390 = vmatpush1.msra.mxu0 0.0
      %2391 = vmatprep.subr.mxu0 0.0
      %2392 = vmatpush1.msra.mxu0 0.0
      %2393 = vmatprep.subr.mxu0 0.0
      %2394 = vmatpush1.msra.mxu0 0.0
      %2395 = vmatprep.subr.mxu0 0.0
      %2396 = vmatpush1.msra.mxu0 0.0
      %2397 = vmatprep.subr.mxu0 0.0
      %2398 = vmatpush1.msra.mxu0 0.0
      %2399 = vmatprep.subr.mxu0 0.0
      %2400 = vmatpush1.msra.mxu0 0.0
      %2401 = vmatprep.subr.mxu0 0.0
      %2402 = vmatpush1.msra.mxu0 0.0
      %2403 = vmatprep.subr.mxu0 0.0
      %2404 = vmatpush1.msra.mxu0 0.0
      %2405 = vmatprep.subr.mxu0 0.0
      %2406 = vmatpush1.msra.mxu0 0.0
      %2407 = vmatprep.subr.mxu0 0.0
      %2408 = vmatpush1.msra.mxu0 0.0
      %2409 = vmatprep.mubr.f32.mxu0 0.0
      %2410 = vmatmul.mubr.f32.gmra.mrb[0].mxu0 %v2299
      %v2411 = vpop.f32.mrb[0].mxu0
      %v2412 = vadd.f32 %v2338, %v2411
      %v2413 = vpop.f32.mrb[0].mxu0
      %v2414 = vadd.f32 %v2342, %v2413
      %2415 = vmatprep.mubr.f32.mxu0 0.0
      %2416 = vmatmul.mubr.f32.gmra.mrb[0].mxu0 %v2300
      %v2417 = vpop.f32.mrb[0].mxu0
      %v2418 = vadd.f32 %v2338, %v2417
      %v2419 = vpop.f32.mrb[0].mxu0
      %v2420 = vadd.f32 %v2342, %v2419
      %2421 = vdwg.mxu0
      %v2422 = vmul.f32 %v2412, %v2412
      %v2423 = vmul.f32 %v2414, %v2414
      %v2424 = vmul.f32 %v2418, %v2418
      %v2425 = vmul.f32 %v2420, %v2420
      %v2426 = vmul.f32 %v2412, %v2422
      %v2427 = vmul.f32 %v2414, %v2423
      %v2428 = vmul.f32 %v2418, %v2424
      %v2429 = vmul.f32 %v2420, %v2425
      %v2430 = vmul.f32 %v2426, 0.044715
      %v2431 = vmul.f32 %v2427, 0.044715
      %v2432 = vmul.f32 %v2428, 0.044715
      %v2433 = vmul.f32 %v2429, 0.044715
      %v2434 = vadd.f32 %v2412, %v2430
      %v2435 = vadd.f32 %v2414, %v2431
      %v2436 = vadd.f32 %v2418, %v2432
      %v2437 = vadd.f32 %v2420, %v2433
      %v2438 = vmul.f32 %v2434, 0.7978846
      %v2439 = vmul.f32 %v2435, 0.7978846
      %v2440 = vmul.f32 %v2436, 0.7978846
      %v2441 = vmul.f32 %v2437, 0.7978846
      %v2442 = vtanh.pop %v2438
      %v2443 = vtanh.pop %v2439
      %v2444 = vtanh.pop %v2440
      %v2445 = vtanh.pop %v2441
      %v2446 = vadd.f32 %v2442, 1.0
      %v2447 = vadd.f32 %v2443, 1.0
      %v2448 = vadd.f32 %v2444, 1.0
      %v2449 = vadd.f32 %v2445, 1.0
      %v2450 = vmul.f32 %v2446, 0.5
      %v2451 = vmul.f32 %v2447, 0.5
      %v2452 = vmul.f32 %v2448, 0.5
      %v2453 = vmul.f32 %v2449, 0.5
      %v2454 = vmul.f32 %v2412, %v2450
      %v2455 = vmul.f32 %v2414, %v2451
      %v2456 = vmul.f32 %v2418, %v2452
      %v2457 = vmul.f32 %v2420, %v2453
      %v2458 = vld [vmem:[%s14] sm:$0xff]
      %v2459 = vld [vmem:[%s14 + $0x8] sm:$0xff]
      %v2460 = vld [vmem:[%s14 + $0x10] sm:$0xff]
      %v2461 = vld [vmem:[%s14 + $0x18] sm:$0xff]
      %v2462 = vld [vmem:[%s14 + $0x20] sm:$0xff]
      %v2463 = vld [vmem:[%s14 + $0x28] sm:$0xff]
      %v2464 = vld [vmem:[%s14 + $0x30] sm:$0xff]
      %v2465 = vld [vmem:[%s14 + $0x38] sm:$0xff]
      %v2466 = vld [vmem:[%s14 + $0x40] sm:$0xff]
      %v2467 = vld [vmem:[%s14 + $0x48] sm:$0xff]
      %v2468 = vld [vmem:[%s14 + $0x50] sm:$0xff]
      %v2469 = vld [vmem:[%s14 + $0x58] sm:$0xff]
      %v2470 = vld [vmem:[%s14 + $0x60] sm:$0xff]
      %v2471 = vld [vmem:[%s14 + $0x68] sm:$0xff]
      %v2472 = vld [vmem:[%s14 + $0x70] sm:$0xff]
      %v2473 = vld [vmem:[%s14 + $0x78] sm:$0xff]
      %v2474 = vld [vmem:[%s14 + $0x80] sm:$0xff]
      %v2475 = vld [vmem:[%s14 + $0x88] sm:$0xff]
      %v2476 = vld [vmem:[%s14 + $0x90] sm:$0xff]
      %v2477 = vld [vmem:[%s14 + $0x98] sm:$0xff]
      %v2478 = vld [vmem:[%s14 + $0xa0] sm:$0xff]
      %v2479 = vld [vmem:[%s14 + $0xa8] sm:$0xff]
      %v2480 = vld [vmem:[%s14 + $0xb0] sm:$0xff]
      %v2481 = vld [vmem:[%s14 + $0xb8] sm:$0xff]
      %v2482 = vld [vmem:[%s14 + $0xc0] sm:$0xff]
      %v2483 = vld [vmem:[%s14 + $0xc8] sm:$0xff]
      %v2484 = vld [vmem:[%s14 + $0xd0] sm:$0xff]
      %v2485 = vld [vmem:[%s14 + $0xd8] sm:$0xff]
      %v2486 = vld [vmem:[%s14 + $0xe0] sm:$0xff]
      %v2487 = vld [vmem:[%s14 + $0xe8] sm:$0xff]
      %v2488 = vld [vmem:[%s14 + $0xf0] sm:$0xff]
      %v2489 = vld [vmem:[%s14 + $0xf8] sm:$0xff]
      %2490 = vmatprep.subr.mxu0 0.0
      %2491 = vmatpush1.msra.mxu0 %v2458
      %2492 = vmatprep.subr.mxu0 0.0
      %2493 = vmatpush1.msra.mxu0 %v2459
      %2494 = vmatprep.subr.mxu0 0.0
      %2495 = vmatpush1.msra.mxu0 %v2460
      %2496 = vmatprep.subr.mxu0 0.0
      %2497 = vmatpush1.msra.mxu0 %v2461
      %2498 = vmatprep.subr.mxu0 0.0
      %2499 = vmatpush1.msra.mxu0 %v2462
      %2500 = vmatprep.subr.mxu0 0.0
      %2501 = vmatpush1.msra.mxu0 %v2463
      %2502 = vmatprep.subr.mxu0 0.0
      %2503 = vmatpush1.msra.mxu0 %v2464
      %2504 = vmatprep.subr.mxu0 0.0
      %2505 = vmatpush1.msra.mxu0 %v2465
      %2506 = vmatprep.subr.mxu0 0.0
      %2507 = vmatpush1.msra.mxu0 %v2466
      %2508 = vmatprep.subr.mxu0 0.0
      %2509 = vmatpush1.msra.mxu0 %v2467
      %2510 = vmatprep.subr.mxu0 0.0
      %2511 = vmatpush1.msra.mxu0 %v2468
      %2512 = vmatprep.subr.mxu0 0.0
      %2513 = vmatpush1.msra.mxu0 %v2469
      %2514 = vmatprep.subr.mxu0 0.0
      %2515 = vmatpush1.msra.mxu0 %v2470
      %2516 = vmatprep.subr.mxu0 0.0
      %2517 = vmatpush1.msra.mxu0 %v2471
      %2518 = vmatprep.subr.mxu0 0.0
      %2519 = vmatpush1.msra.mxu0 %v2472
      %2520 = vmatprep.subr.mxu0 0.0
      %2521 = vmatpush1.msra.mxu0 %v2473
      %2522 = vmatprep.subr.mxu0 0.0
      %2523 = vmatpush1.msra.mxu0 %v2474
      %2524 = vmatprep.subr.mxu0 0.0
      %2525 = vmatpush1.msra.mxu0 %v2475
      %2526 = vmatprep.subr.mxu0 0.0
      %2527 = vmatpush1.msra.mxu0 %v2476
      %2528 = vmatprep.subr.mxu0 0.0
      %2529 = vmatpush1.msra.mxu0 %v2477
      %2530 = vmatprep.subr.mxu0 0.0
      %2531 = vmatpush1.msra.mxu0 %v2478
      %2532 = vmatprep.subr.mxu0 0.0
      %2533 = vmatpush1.msra.mxu0 %v2479
      %2534 = vmatprep.subr.mxu0 0.0
      %2535 = vmatpush1.msra.mxu0 %v2480
      %2536 = vmatprep.subr.mxu0 0.0
      %2537 = vmatpush1.msra.mxu0 %v2481
      %2538 = vmatprep.subr.mxu0 0.0
      %2539 = vmatpush1.msra.mxu0 %v2482
      %2540 = vmatprep.subr.mxu0 0.0
      %2541 = vmatpush1.msra.mxu0 %v2483
      %2542 = vmatprep.subr.mxu0 0.0
      %2543 = vmatpush1.msra.mxu0 %v2484
      %2544 = vmatprep.subr.mxu0 0.0
      %2545 = vmatpush1.msra.mxu0 %v2485
      %2546 = vmatprep.subr.mxu0 0.0
      %2547 = vmatpush1.msra.mxu0 %v2486
      %2548 = vmatprep.subr.mxu0 0.0
      %2549 = vmatpush1.msra.mxu0 %v2487
      %2550 = vmatprep.subr.mxu0 0.0
      %2551 = vmatpush1.msra.mxu0 %v2488
      %2552 = vmatprep.subr.mxu0 0.0
      %2553 = vmatpush1.msra.mxu0 %v2489
      %2554 = vmatprep.mubr.f32.mxu0 %v2455
      %2555 = vmatmul.mubr.f32.gmra.mrb[0].mxu0 %v2454
      %v2556 = vpop.f32.mrb[0].mxu0
      %v2557 = vadd.f32 0.0, %v2556
      %v2558 = vpop.f32.mrb[0].mxu0
      %2559 = vmatprep.mubr.f32.mxu0 %v2457
      %2560 = vmatmul.mubr.f32.gmra.mrb[0].mxu0 %v2456
      %v2561 = vpop.f32.mrb[0].mxu0
      %v2562 = vadd.f32 0.0, %v2561
      %v2563 = vpop.f32.mrb[0].mxu0
      %2564 = vdwg.mxu0
      %v2565 = vadd.f32 %v2259, %v2557
      %v2566 = vadd.f32 %v2260, %v2562
      %v2567 = vld [vmem:[%s15] sm:$0x1]
      %v2569 = vlaneseq
      %v2570 = vshrl.u32 %v2569, 7
      %v2571 = vsub.s32 0, %v2570
      %v2572 = vrot.slane %v2567, %v2571
      %v2574 = vadd.f32 %v2565, %v2572
      %v2575 = vadd.f32 %v2566, %v2572
      %s2576 = scalar_lea.vmem %s4, 1
      %v2577 = vld [vmem:[%s2576] sm:$0x1]
      %s2578 = scalar_lea.vmem %s5, 1
      %v2579 = vld [vmem:[%s2578] sm:$0x1]
      %2580 = vadd.xlane.f32.xlu0 %v2574
      %v2581 = vpop.xlane.xlu0 %2580
      %2582 = vadd.xlane.f32.xlu0 %v2575
      %v2583 = vpop.xlane.xlu0 %2582
      %v2584 = vmul.f32 %v2581, %v1074
      %v2585 = vmul.f32 %v2583, %v1074
      %v2586 = vsub.f32 %v2574, %v2584
      %v2587 = vsub.f32 %v2575, %v2585
      %v2588 = vmul.f32 %v2586, %v2586
      %v2589 = vmul.f32 %v2587, %v2587
      %2590 = vadd.xlane.f32.xlu0 %v2588
      %v2591 = vpop.xlane.xlu0 %2590
      %2592 = vadd.xlane.f32.xlu0 %v2589
      %v2593 = vpop.xlane.xlu0 %2592
      %v2594 = vmul.f32 %v2591, %v1074
      %v2595 = vmul.f32 %v2593, %v1074
      %v2596 = vadd.f32 %v2594, 1e-05
      %v2597 = vadd.f32 %v2595, 1e-05
      %v2598 = vrsqrt.pop %v2596
      %v2599 = vrsqrt.pop %v2597
      %v2600 = vmul.f32 %v2586, %v2598
      %v2601 = vmul.f32 %v2587, %v2599
      %v2603 = vlaneseq
      %v2604 = vshrl.u32 %v2603, 7
      %v2605 = vsub.s32 0, %v2604
      %v2606 = vrot.slane %v2577, %v2605
      %v2608 = vmul.f32 %v2600, %v2606
      %v2609 = vmul.f32 %v2601, %v2606
      %v2611 = vlaneseq
      %v2612 = vshrl.u32 %v2611, 7
      %v2613 = vsub.s32 0, %v2612
      %v2614 = vrot.slane %v2579, %v2613
      %v2616 = vadd.f32 %v2608, %v2614
      %v2617 = vadd.f32 %v2609, %v2614
      %s2618 = scalar_lea.vmem %s6, 384
      %v2619 = vld [vmem:[%s2618] sm:$0xff]
      %v2620 = vld [vmem:[%s2618 + $0x8] sm:$0xff]
      %v2621 = vld [vmem:[%s2618 + $0x10] sm:$0xff]
      %v2622 = vld [vmem:[%s2618 + $0x18] sm:$0xff]
      %v2623 = vld [vmem:[%s2618 + $0x20] sm:$0xff]
      %v2624 = vld [vmem:[%s2618 + $0x28] sm:$0xff]
      %v2625 = vld [vmem:[%s2618 + $0x30] sm:$0xff]
      %v2626 = vld [vmem:[%s2618 + $0x38] sm:$0xff]
      %v2627 = vld [vmem:[%s2618 + $0x40] sm:$0xff]
      %v2628 = vld [vmem:[%s2618 + $0x48] sm:$0xff]
      %v2629 = vld [vmem:[%s2618 + $0x50] sm:$0xff]
      %v2630 = vld [vmem:[%s2618 + $0x58] sm:$0xff]
      %v2631 = vld [vmem:[%s2618 + $0x60] sm:$0xff]
      %v2632 = vld [vmem:[%s2618 + $0x68] sm:$0xff]
      %v2633 = vld [vmem:[%s2618 + $0x70] sm:$0xff]
      %v2634 = vld [vmem:[%s2618 + $0x78] sm:$0xff]
      %v2635 = vld [vmem:[%s2618 + $0x80] sm:$0xff]
      %v2636 = vld [vmem:[%s2618 + $0x88] sm:$0xff]
      %v2637 = vld [vmem:[%s2618 + $0x90] sm:$0xff]
      %v2638 = vld [vmem:[%s2618 + $0x98] sm:$0xff]
      %v2639 = vld [vmem:[%s2618 + $0xa0] sm:$0xff]
      %v2640 = vld [vmem:[%s2618 + $0xa8] sm:$0xff]
      %v2641 = vld [vmem:[%s2618 + $0xb0] sm:$0xff]
      %v2642 = vld [vmem:[%s2618 + $0xb8] sm:$0xff]
      %v2643 = vld [vmem:[%s2618 + $0xc0] sm:$0xff]
      %v2644 = vld [vmem:[%s2618 + $0xc8] sm:$0xff]
      %v2645 = vld [vmem:[%s2618 + $0xd0] sm:$0xff]
      %v2646 = vld [vmem:[%s2618 + $0xd8] sm:$0xff]
      %v2647 = vld [vmem:[%s2618 + $0xe0] sm:$0xff]
      %v2648 = vld [vmem:[%s2618 + $0xe8] sm:$0xff]
      %v2649 = vld [vmem:[%s2618 + $0xf0] sm:$0xff]
      %v2650 = vld [vmem:[%s2618 + $0xf8] sm:$0xff]
      %v2651 = vld [vmem:[%s2618 + $0x100] sm:$0xff]
      %v2652 = vld [vmem:[%s2618 + $0x108] sm:$0xff]
      %v2653 = vld [vmem:[%s2618 + $0x110] sm:$0xff]
      %v2654 = vld [vmem:[%s2618 + $0x118] sm:$0xff]
      %v2655 = vld [vmem:[%s2618 + $0x120] sm:$0xff]
      %v2656 = vld [vmem:[%s2618 + $0x128] sm:$0xff]
      %v2657 = vld [vmem:[%s2618 + $0x130] sm:$0xff]
      %v2658 = vld [vmem:[%s2618 + $0x138] sm:$0xff]
      %v2659 = vld [vmem:[%s2618 + $0x140] sm:$0xff]
      %v2660 = vld [vmem:[%s2618 + $0x148] sm:$0xff]
      %v2661 = vld [vmem:[%s2618 + $0x150] sm:$0xff]
      %v2662 = vld [vmem:[%s2618 + $0x158] sm:$0xff]
      %v2663 = vld [vmem:[%s2618 + $0x160] sm:$0xff]
      %v2664 = vld [vmem:[%s2618 + $0x168] sm:$0xff]
      %v2665 = vld [vmem:[%s2618 + $0x170] sm:$0xff]
      %v2666 = vld [vmem:[%s2618 + $0x178] sm:$0xff]
      %s2667 = scalar_lea.vmem %s7, 3
      %v2668 = vld [vmem:[%s2667] sm:$0x7]
      %v2670 = vlaneseq
      %v2671 = vshrl.u32 %v2670, 7
      %v2672 = vsub.s32 0, %v2671
      %v2673 = vrot.slane %v2668, %v2672
      %v2674 = vlaneseq
      %v2675 = vshrl.u32 %v2674, 7
      %v2676 = vsub.s32 1, %v2675
      %v2677 = vrot.slane %v2668, %v2676
      %v2678 = vlaneseq
      %v2679 = vshrl.u32 %v2678, 7
      %v2680 = vsub.s32 2, %v2679
      %v2681 = vrot.slane %v2668, %v2680
      %2685 = vmatprep.subr.mxu0 %v2620
      %2686 = vmatpush1.msra.mxu0 %v2619
      %2687 = vmatprep.subr.mxu0 %v2623
      %2688 = vmatpush1.msra.mxu0 %v2622
      %2689 = vmatprep.subr.mxu0 %v2626
      %2690 = vmatpush1.msra.mxu0 %v2625
      %2691 = vmatprep.subr.mxu0 %v2629
      %2692 = vmatpush1.msra.mxu0 %v2628
      %2693 = vmatprep.subr.mxu0 %v2632
      %2694 = vmatpush1.msra.mxu0 %v2631
      %2695 = vmatprep.subr.mxu0 %v2635
      %2696 = vmatpush1.msra.mxu0 %v2634
      %2697 = vmatprep.subr.mxu0 %v2638
      %2698 = vmatpush1.msra.mxu0 %v2637
      %2699 = vmatprep.subr.mxu0 %v2641
      %2700 = vmatpush1.msra.mxu0 %v2640
      %2701 = vmatprep.subr.mxu0 %v2644
      %2702 = vmatpush1.msra.mxu0 %v2643
      %2703 = vmatprep.subr.mxu0 %v2647
      %2704 = vmatpush1.msra.mxu0 %v2646
      %2705 = vmatprep.subr.mxu0 %v2650
      %2706 = vmatpush1.msra.mxu0 %v2649
      %2707 = vmatprep.subr.mxu0 %v2653
      %2708 = vmatpush1.msra.mxu0 %v2652
      %2709 = vmatprep.subr.mxu0 %v2656
      %2710 = vmatpush1.msra.mxu0 %v2655
      %2711 = vmatprep.subr.mxu0 %v2659
      %2712 = vmatpush1.msra.mxu0 %v2658
      %2713 = vmatprep.subr.mxu0 %v2662
      %2714 = vmatpush1.msra.mxu0 %v2661
      %2715 = vmatprep.subr.mxu0 %v2665
      %2716 = vmatpush1.msra.mxu0 %v2664
      %2717 = vmatprep.subr.mxu0 0.0
      %2718 = vmatpush1.msra.mxu0 0.0
      %2719 = vmatprep.subr.mxu0 0.0
      %2720 = vmatpush1.msra.mxu0 0.0
      %2721 = vmatprep.subr.mxu0 0.0
      %2722 = vmatpush1.msra.mxu0 0.0
      %2723 = vmatprep.subr.mxu0 0.0
      %2724 = vmatpush1.msra.mxu0 0.0
      %2725 = vmatprep.subr.mxu0 0.0
      %2726 = vmatpush1.msra.mxu0 0.0
      %2727 = vmatprep.subr.mxu0 0.0
      %2728 = vmatpush1.msra.mxu0 0.0
      %2729 = vmatprep.subr.mxu0 0.0
      %2730 = vmatpush1.msra.mxu0 0.0
      %2731 = vmatprep.subr.mxu0 0.0
      %2732 = vmatpush1.msra.mxu0 0.0
      %2733 = vmatprep.subr.mxu0 0.0
      %2734 = vmatpush1.msra.mxu0 0.0
      %2735 = vmatprep.subr.mxu0 0.0
      %2736 = vmatpush1.msra.mxu0 0.0
      %2737 = vmatprep.subr.mxu0 0.0
      %2738 = vmatpush1.msra.mxu0 0.0
      %2739 = vmatprep.subr.mxu0 0.0
      %2740 = vmatpush1.msra.mxu0 0.0
      %2741 = vmatprep.subr.mxu0 0.0
      %2742 = vmatpush1.msra.mxu0 0.0
      %2743 = vmatprep.subr.mxu0 0.0
      %2744 = vmatpush1.msra.mxu0 0.0
      %2745 = vmatprep.subr.mxu0 0.0
      %2746 = vmatpush1.msra.mxu0 0.0
      %2747 = vmatprep.subr.mxu0 0.0
      %2748 = vmatpush1.msra.mxu0 0.0
      %2749 = vmatprep.mubr.f32.mxu0 0.0
      %2750 = vmatmul.mubr.f32.gmra.mrb[0].mxu0 %v2616
      %v2751 = vpop.f32.mrb[0].mxu0
      %v2752 = vadd.f32 %v2673, %v2751
      %v2753 = vpop.f32.mrb[0].mxu0
      %v2754 = vadd.f32 %v2677, %v2753
      %2755 = vmatprep.mubr.f32.mxu0 0.0
      %2756 = vmatmul.mubr.f32.gmra.mrb[0].mxu0 %v2617
      %v2757 = vpop.f32.mrb[0].mxu0
      %v2758 = vadd.f32 %v2673, %v2757
      %v2759 = vpop.f32.mrb[0].mxu0
      %v2760 = vadd.f32 %v2677, %v2759
      %2761 = vdwg.mxu0
      %2762 = vmatprep.subr.mxu0 0.0
      %2763 = vmatpush1.msra.mxu0 %v2621
      %2764 = vmatprep.subr.mxu0 0.0
      %2765 = vmatpush1.msra.mxu0 %v2624
      %2766 = vmatprep.subr.mxu0 0.0
      %2767 = vmatpush1.msra.mxu0 %v2627
      %2768 = vmatprep.subr.mxu0 0.0
      %2769 = vmatpush1.msra.mxu0 %v2630
      %2770 = vmatprep.subr.mxu0 0.0
      %2771 = vmatpush1.msra.mxu0 %v2633
      %2772 = vmatprep.subr.mxu0 0.0
      %2773 = vmatpush1.msra.mxu0 %v2636
      %2774 = vmatprep.subr.mxu0 0.0
      %2775 = vmatpush1.msra.mxu0 %v2639
      %2776 = vmatprep.subr.mxu0 0.0
      %2777 = vmatpush1.msra.mxu0 %v2642
      %2778 = vmatprep.subr.mxu0 0.0
      %2779 = vmatpush1.msra.mxu0 %v2645
      %2780 = vmatprep.subr.mxu0 0.0
      %2781 = vmatpush1.msra.mxu0 %v2648
      %2782 = vmatprep.subr.mxu0 0.0
      %2783 = vmatpush1.msra.mxu0 %v2651
      %2784 = vmatprep.subr.mxu0 0.0
      %2785 = vmatpush1.msra.mxu0 %v2654
      %2786 = vmatprep.subr.mxu0 0.0
      %2787 = vmatpush1.msra.mxu0 %v2657
      %2788 = vmatprep.subr.mxu0 0.0
      %2789 = vmatpush1.msra.mxu0 %v2660
      %2790 = vmatprep.subr.mxu0 0.0
      %2791 = vmatpush1.msra.mxu0 %v2663
      %2792 = vmatprep.subr.mxu0 0.0
      %2793 = vmatpush1.msra.mxu0 %v2666
      %2794 = vmatprep.subr.mxu0 0.0
      %2795 = vmatpush1.msra.mxu0 0.0
      %2796 = vmatprep.subr.mxu0 0.0
      %2797 = vmatpush1.msra.mxu0 0.0
      %2798 = vmatprep.subr.mxu0 0.0
      %2799 = vmatpush1.msra.mxu0 0.0
      %2800 = vmatprep.subr.mxu0 0.0
      %2801 = vmatpush1.msra.mxu0 0.0
      %2802 = vmatprep.subr.mxu0 0.0
      %2803 = vmatpush1.msra.mxu0 0.0
      %2804 = vmatprep.subr.mxu0 0.0
      %2805 = vmatpush1.msra.mxu0 0.0
      %2806 = vmatprep.subr.mxu0 0.0
      %2807 = vmatpush1.msra.mxu0 0.0
      %2808 = vmatprep.subr.mxu0 0.0
      %2809 = vmatpush1.msra.mxu0 0.0
      %2810 = vmatprep.subr.mxu0 0.0
      %2811 = vmatpush1.msra.mxu0 0.0
      %2812 = vmatprep.subr.mxu0 0.0
      %2813 = vmatpush1.msra.mxu0 0.0
      %2814 = vmatprep.subr.mxu0 0.0
      %2815 = vmatpush1.msra.mxu0 0.0
      %2816 = vmatprep.subr.mxu0 0.0
      %2817 = vmatpush1.msra.mxu0 0.0
      %2818 = vmatprep.subr.mxu0 0.0
      %2819 = vmatpush1.msra.mxu0 0.0
      %2820 = vmatprep.subr.mxu0 0.0
      %2821 = vmatpush1.msra.mxu0 0.0
      %2822 = vmatprep.subr.mxu0 0.0
      %2823 = vmatpush1.msra.mxu0 0.0
      %2824 = vmatprep.subr.mxu0 0.0
      %2825 = vmatpush1.msra.mxu0 0.0
      %2826 = vmatprep.mubr.f32.mxu0 0.0
      %2827 = vmatmul.mubr.f32.gmra.mrb[0].mxu0 %v2616
      %v2828 = vpop.f32.mrb[0].mxu0
      %v2829 = vadd.f32 %v2681, %v2828
      %v2830 = vpop.f32.mrb[0].mxu0
      %2831 = vmatprep.mubr.f32.mxu0 0.0
      %2832 = vmatmul.mubr.f32.gmra.mrb[0].mxu0 %v2617
      %v2833 = vpop.f32.mrb[0].mxu0
      %v2834 = vadd.f32 %v2681, %v2833
      %v2835 = vpop.f32.mrb[0].mxu0
      %2836 = vdwg.mxu0
      %v2837 = vmul.f32 %v2752, 0.17677669
      %v2838 = vmul.f32 %v2758, 0.17677669
      %v2840 = vsel %vm1328, %v2837, 0
      %v2843 = vsel %vm1328, %v2838, 0
      %v2846 = vsel %vm1328, %v2754, 0
      %v2849 = vsel %vm1328, %v2760, 0
      %2851 = vmatprep.subr.mxu0 0.0
      %2852 = vmatpush1.xpose.msra.mxu0 %v2846
      %2853 = vmatprep.subr.mxu0 0.0
      %2854 = vmatpush1.xpose.msra.mxu0 %v2849
      %2855 = vmatprep.subr.mxu0 0.0
      %2856 = vmatpush1.xpose.msra.mxu0 0.0
      %2857 = vmatprep.subr.mxu0 0.0
      %2858 = vmatpush1.xpose.msra.mxu0 0.0
      %2859 = vmatprep.subr.mxu0 0.0
      %2860 = vmatpush1.xpose.msra.mxu0 0.0
      %2861 = vmatprep.subr.mxu0 0.0
      %2862 = vmatpush1.xpose.msra.mxu0 0.0
      %2863 = vmatprep.subr.mxu0 0.0
      %2864 = vmatpush1.xpose.msra.mxu0 0.0
      %2865 = vmatprep.subr.mxu0 0.0
      %2866 = vmatpush1.xpose.msra.mxu0 0.0
      %2867 = vmatprep.subr.mxu0 0.0
      %2868 = vmatpush1.xpose.msra.mxu0 0.0
      %2869 = vmatprep.subr.mxu0 0.0
      %2870 = vmatpush1.xpose.msra.mxu0 0.0
      %2871 = vmatprep.subr.mxu0 0.0
      %2872 = vmatpush1.xpose.msra.mxu0 0.0
      %2873 = vmatprep.subr.mxu0 0.0
      %2874 = vmatpush1.xpose.msra.mxu0 0.0
      %2875 = vmatprep.subr.mxu0 0.0
      %2876 = vmatpush1.xpose.msra.mxu0 0.0
      %2877 = vmatprep.subr.mxu0 0.0
      %2878 = vmatpush1.xpose.msra.mxu0 0.0
      %2879 = vmatprep.subr.mxu0 0.0
      %2880 = vmatpush1.xpose.msra.mxu0 0.0
      %2881 = vmatprep.subr.mxu0 0.0
      %2882 = vmatpush1.xpose.msra.mxu0 0.0
      %2883 = vmatprep.subr.mxu0 0.0
      %2884 = vmatpush1.xpose.msra.mxu0 0.0
      %2885 = vmatprep.subr.mxu0 0.0
      %2886 = vmatpush1.xpose.msra.mxu0 0.0
      %2887 = vmatprep.subr.mxu0 0.0
      %2888 = vmatpush1.xpose.msra.mxu0 0.0
      %2889 = vmatprep.subr.mxu0 0.0
      %2890 = vmatpush1.xpose.msra.mxu0 0.0
      %2891 = vmatprep.subr.mxu0 0.0
      %2892 = vmatpush1.xpose.msra.mxu0 0.0
      %2893 = vmatprep.subr.mxu0 0.0
      %2894 = vmatpush1.xpose.msra.mxu0 0.0
      %2895 = vmatprep.subr.mxu0 0.0
      %2896 = vmatpush1.xpose.msra.mxu0 0.0
      %2897 = vmatprep.subr.mxu0 0.0
      %2898 = vmatpush1.xpose.msra.mxu0 0.0
      %2899 = vmatprep.subr.mxu0 0.0
      %2900 = vmatpush1.xpose.msra.mxu0 0.0
      %2901 = vmatprep.subr.mxu0 0.0
      %2902 = vmatpush1.xpose.msra.mxu0 0.0
      %2903 = vmatprep.subr.mxu0 0.0
      %2904 = vmatpush1.xpose.msra.mxu0 0.0
      %2905 = vmatprep.subr.mxu0 0.0
      %2906 = vmatpush1.xpose.msra.mxu0 0.0
      %2907 = vmatprep.subr.mxu0 0.0
      %2908 = vmatpush1.xpose.msra.mxu0 0.0
      %2909 = vmatprep.subr.mxu0 0.0
      %2910 = vmatpush1.xpose.msra.mxu0 0.0
      %2911 = vmatprep.subr.mxu0 0.0
      %2912 = vmatpush1.xpose.msra.mxu0 0.0
      %2913 = vmatprep.subr.mxu0 0.0
      %2914 = vmatpush1.xpose.msra.mxu0 0.0
      %2915 = vmatprep.mubr.f32.mxu0 0.0
      %2916 = vmatmul.mubr.f32.gmra.mrb[0].mxu0 %v2840
      %v2917 = vpop.f32.mrb[0].mxu0
      %v2918 = vadd.f32 0.0, %v2917
      %v2919 = vpop.f32.mrb[0].mxu0
      %2920 = vmatprep.mubr.f32.mxu0 0.0
      %2921 = vmatmul.mubr.f32.gmra.mrb[0].mxu0 %v2843
      %v2922 = vpop.f32.mrb[0].mxu0
      %v2923 = vadd.f32 0.0, %v2922
      %v2924 = vpop.f32.mrb[0].mxu0
      %2925 = vdwg.mxu0
      %v2926 = vsel %vm1416, %v2918, -inf
      %2927 = vmax.xlane.f32.xlu0 %v2926
      %v2928 = vpop.xlane.xlu0 %2927
      %v2929 = vsel %vm1416, %v2923, -inf
      %2930 = vmax.xlane.f32.xlu0 %v2929
      %v2931 = vpop.xlane.xlu0 %2930
      %v2932 = vsub.f32 %v2918, %v2928
      %v2933 = vsub.f32 %v2923, %v2931
      %v2934 = vmul.f32 %v2932, 1.442695
      %v2935 = vpow.pop %v2934
      %v2936 = vmul.f32 %v2933, 1.442695
      %v2937 = vpow.pop %v2936
      %v2938 = vsel %vm1416, %v2935, 0.0
      %2939 = vadd.xlane.f32.xlu0 %v2938
      %v2940 = vpop.xlane.xlu0 %2939
      %v2941 = vsel %vm1416, %v2937, 0.0
      %2942 = vadd.xlane.f32.xlu0 %v2941
      %v2943 = vpop.xlane.xlu0 %2942
      %v2944 = vrcp.pop %v2940
      %v2945 = vmul.f32 %v2935, %v2944
      %v2946 = vrcp.pop %v2943
      %v2947 = vmul.f32 %v2937, %v2946
      %v2949 = vsel %vm1416, %v2945, 0
      %v2952 = vsel %vm1416, %v2947, 0
      %2954 = vmatprep.subr.mxu0 0.0
      %2955 = vmatpush1.msra.mxu0 %v2829
      %2956 = vmatprep.subr.mxu0 0.0
      %2957 = vmatpush1.msra.mxu0 %v2834
      %2958 = vmatprep.subr.mxu0 0.0
      %2959 = vmatpush1.msra.mxu0 0.0
      %2960 = vmatprep.subr.mxu0 0.0
      %2961 = vmatpush1.msra.mxu0 0.0
      %2962 = vmatprep.subr.mxu0 0.0
      %2963 = vmatpush1.msra.mxu0 0.0
      %2964 = vmatprep.subr.mxu0 0.0
      %2965 = vmatpush1.msra.mxu0 0.0
      %2966 = vmatprep.subr.mxu0 0.0
      %2967 = vmatpush1.msra.mxu0 0.0
      %2968 = vmatprep.subr.mxu0 0.0
      %2969 = vmatpush1.msra.mxu0 0.0
      %2970 = vmatprep.subr.mxu0 0.0
      %2971 = vmatpush1.msra.mxu0 0.0
      %2972 = vmatprep.subr.mxu0 0.0
      %2973 = vmatpush1.msra.mxu0 0.0
      %2974 = vmatprep.subr.mxu0 0.0
      %2975 = vmatpush1.msra.mxu0 0.0
      %2976 = vmatprep.subr.mxu0 0.0
      %2977 = vmatpush1.msra.mxu0 0.0
      %2978 = vmatprep.subr.mxu0 0.0
      %2979 = vmatpush1.msra.mxu0 0.0
      %2980 = vmatprep.subr.mxu0 0.0
      %2981 = vmatpush1.msra.mxu0 0.0
      %2982 = vmatprep.subr.mxu0 0.0
      %2983 = vmatpush1.msra.mxu0 0.0
      %2984 = vmatprep.subr.mxu0 0.0
      %2985 = vmatpush1.msra.mxu0 0.0
      %2986 = vmatprep.subr.mxu0 0.0
      %2987 = vmatpush1.msra.mxu0 0.0
      %2988 = vmatprep.subr.mxu0 0.0
      %2989 = vmatpush1.msra.mxu0 0.0
      %2990 = vmatprep.subr.mxu0 0.0
      %2991 = vmatpush1.msra.mxu0 0.0
      %2992 = vmatprep.subr.mxu0 0.0
      %2993 = vmatpush1.msra.mxu0 0.0
      %2994 = vmatprep.subr.mxu0 0.0
      %2995 = vmatpush1.msra.mxu0 0.0
      %2996 = vmatprep.subr.mxu0 0.0
      %2997 = vmatpush1.msra.mxu0 0.0
      %2998 = vmatprep.subr.mxu0 0.0
      %2999 = vmatpush1.msra.mxu0 0.0
      %3000 = vmatprep.subr.mxu0 0.0
      %3001 = vmatpush1.msra.mxu0 0.0
      %3002 = vmatprep.subr.mxu0 0.0
      %3003 = vmatpush1.msra.mxu0 0.0
      %3004 = vmatprep.subr.mxu0 0.0
      %3005 = vmatpush1.msra.mxu0 0.0
      %3006 = vmatprep.subr.mxu0 0.0
      %3007 = vmatpush1.msra.mxu0 0.0
      %3008 = vmatprep.subr.mxu0 0.0
      %3009 = vmatpush1.msra.mxu0 0.0
      %3010 = vmatprep.subr.mxu0 0.0
      %3011 = vmatpush1.msra.mxu0 0.0
      %3012 = vmatprep.subr.mxu0 0.0
      %3013 = vmatpush1.msra.mxu0 0.0
      %3014 = vmatprep.subr.mxu0 0.0
      %3015 = vmatpush1.msra.mxu0 0.0
      %3016 = vmatprep.subr.mxu0 0.0
      %3017 = vmatpush1.msra.mxu0 0.0
      %3018 = vmatprep.mubr.f32.mxu0 0.0
      %3019 = vmatmul.mubr.f32.gmra.mrb[0].mxu0 %v2949
      %v3020 = vpop.f32.mrb[0].mxu0
      %v3021 = vadd.f32 0.0, %v3020
      %v3022 = vpop.f32.mrb[0].mxu0
      %3023 = vmatprep.mubr.f32.mxu0 0.0
      %3024 = vmatmul.mubr.f32.gmra.mrb[0].mxu0 %v2952
      %v3025 = vpop.f32.mrb[0].mxu0
      %v3026 = vadd.f32 0.0, %v3025
      %v3027 = vpop.f32.mrb[0].mxu0
      %3028 = vdwg.mxu0
      %3029 = vst.msk [vmem:[#allocation2] sm:$0xff] %vm1328, %v3021
      %3030 = vst.msk [vmem:[#allocation2 + $0x8] sm:$0xff] %vm1328, %v3026
      %3031 = vrot.lane.b32.xlu0 %v2837, 96
      %v3032 = vpop.permute.xlu0 %3031
      %3033 = vrot.lane.b32.xlu0 %v2838, 96
      %v3034 = vpop.permute.xlu0 %3033
      %3035 = vrot.lane.b32.xlu0 %v2754, 96
      %v3036 = vpop.permute.xlu0 %3035
      %3037 = vrot.lane.b32.xlu0 %v2760, 96
      %v3038 = vpop.permute.xlu0 %3037
      %v3039 = vsel %vm1328, %v3032, 0
      %v3041 = vsel %vm1328, %v3034, 0
      %v3043 = vsel %vm1328, %v3036, 0
      %v3045 = vsel %vm1328, %v3038, 0
      %3047 = vmatprep.subr.mxu0 0.0
      %3048 = vmatpush1.xpose.msra.mxu0 %v3043
      %3049 = vmatprep.subr.mxu0 0.0
      %3050 = vmatpush1.xpose.msra.mxu0 %v3045
      %3051 = vmatprep.subr.mxu0 0.0
      %3052 = vmatpush1.xpose.msra.mxu0 0.0
      %3053 = vmatprep.subr.mxu0 0.0
      %3054 = vmatpush1.xpose.msra.mxu0 0.0
      %3055 = vmatprep.subr.mxu0 0.0
      %3056 = vmatpush1.xpose.msra.mxu0 0.0
      %3057 = vmatprep.subr.mxu0 0.0
      %3058 = vmatpush1.xpose.msra.mxu0 0.0
      %3059 = vmatprep.subr.mxu0 0.0
      %3060 = vmatpush1.xpose.msra.mxu0 0.0
      %3061 = vmatprep.subr.mxu0 0.0
      %3062 = vmatpush1.xpose.msra.mxu0 0.0
      %3063 = vmatprep.subr.mxu0 0.0
      %3064 = vmatpush1.xpose.msra.mxu0 0.0
      %3065 = vmatprep.subr.mxu0 0.0
      %3066 = vmatpush1.xpose.msra.mxu0 0.0
      %3067 = vmatprep.subr.mxu0 0.0
      %3068 = vmatpush1.xpose.msra.mxu0 0.0
      %3069 = vmatprep.subr.mxu0 0.0
      %3070 = vmatpush1.xpose.msra.mxu0 0.0
      %3071 = vmatprep.subr.mxu0 0.0
      %3072 = vmatpush1.xpose.msra.mxu0 0.0
      %3073 = vmatprep.subr.mxu0 0.0
      %3074 = vmatpush1.xpose.msra.mxu0 0.0
      %3075 = vmatprep.subr.mxu0 0.0
      %3076 = vmatpush1.xpose.msra.mxu0 0.0
      %3077 = vmatprep.subr.mxu0 0.0
      %3078 = vmatpush1.xpose.msra.mxu0 0.0
      %3079 = vmatprep.subr.mxu0 0.0
      %3080 = vmatpush1.xpose.msra.mxu0 0.0
      %3081 = vmatprep.subr.mxu0 0.0
      %3082 = vmatpush1.xpose.msra.mxu0 0.0
      %3083 = vmatprep.subr.mxu0 0.0
      %3084 = vmatpush1.xpose.msra.mxu0 0.0
      %3085 = vmatprep.subr.mxu0 0.0
      %3086 = vmatpush1.xpose.msra.mxu0 0.0
      %3087 = vmatprep.subr.mxu0 0.0
      %3088 = vmatpush1.xpose.msra.mxu0 0.0
      %3089 = vmatprep.subr.mxu0 0.0
      %3090 = vmatpush1.xpose.msra.mxu0 0.0
      %3091 = vmatprep.subr.mxu0 0.0
      %3092 = vmatpush1.xpose.msra.mxu0 0.0
      %3093 = vmatprep.subr.mxu0 0.0
      %3094 = vmatpush1.xpose.msra.mxu0 0.0
      %3095 = vmatprep.subr.mxu0 0.0
      %3096 = vmatpush1.xpose.msra.mxu0 0.0
      %3097 = vmatprep.subr.mxu0 0.0
      %3098 = vmatpush1.xpose.msra.mxu0 0.0
      %3099 = vmatprep.subr.mxu0 0.0
      %3100 = vmatpush1.xpose.msra.mxu0 0.0
      %3101 = vmatprep.subr.mxu0 0.0
      %3102 = vmatpush1.xpose.msra.mxu0 0.0
      %3103 = vmatprep.subr.mxu0 0.0
      %3104 = vmatpush1.xpose.msra.mxu0 0.0
      %3105 = vmatprep.subr.mxu0 0.0
      %3106 = vmatpush1.xpose.msra.mxu0 0.0
      %3107 = vmatprep.subr.mxu0 0.0
      %3108 = vmatpush1.xpose.msra.mxu0 0.0
      %3109 = vmatprep.subr.mxu0 0.0
      %3110 = vmatpush1.xpose.msra.mxu0 0.0
      %3111 = vmatprep.mubr.f32.mxu0 0.0
      %3112 = vmatmul.mubr.f32.gmra.mrb[0].mxu0 %v3039
      %v3113 = vpop.f32.mrb[0].mxu0
      %v3114 = vadd.f32 0.0, %v3113
      %v3115 = vpop.f32.mrb[0].mxu0
      %3116 = vmatprep.mubr.f32.mxu0 0.0
      %3117 = vmatmul.mubr.f32.gmra.mrb[0].mxu0 %v3041
      %v3118 = vpop.f32.mrb[0].mxu0
      %v3119 = vadd.f32 0.0, %v3118
      %v3120 = vpop.f32.mrb[0].mxu0
      %3121 = vdwg.mxu0
      %v3122 = vsel %vm1416, %v3114, -inf
      %3123 = vmax.xlane.f32.xlu0 %v3122
      %v3124 = vpop.xlane.xlu0 %3123
      %v3125 = vsel %vm1416, %v3119, -inf
      %3126 = vmax.xlane.f32.xlu0 %v3125
      %v3127 = vpop.xlane.xlu0 %3126
      %v3128 = vsub.f32 %v3114, %v3124
      %v3129 = vsub.f32 %v3119, %v3127
      %v3130 = vmul.f32 %v3128, 1.442695
      %v3131 = vpow.pop %v3130
      %v3132 = vmul.f32 %v3129, 1.442695
      %v3133 = vpow.pop %v3132
      %v3134 = vsel %vm1416, %v3131, 0.0
      %3135 = vadd.xlane.f32.xlu0 %v3134
      %v3136 = vpop.xlane.xlu0 %3135
      %v3137 = vsel %vm1416, %v3133, 0.0
      %3138 = vadd.xlane.f32.xlu0 %v3137
      %v3139 = vpop.xlane.xlu0 %3138
      %v3140 = vrcp.pop %v3136
      %v3141 = vmul.f32 %v3131, %v3140
      %v3142 = vrcp.pop %v3139
      %v3143 = vmul.f32 %v3133, %v3142
      %3146 = vrot.lane.b32.xlu0 %v2829, 96
      %v3147 = vpop.permute.xlu0 %3146
      %3148 = vrot.lane.b32.xlu0 %v2834, 96
      %v3149 = vpop.permute.xlu0 %3148
      %v3153 = vsel %vm1416, %v3141, 0
      %v3156 = vsel %vm1416, %v3143, 0
      %3158 = vmatprep.subr.mxu0 0.0
      %3159 = vmatpush1.msra.mxu0 %v3147
      %3160 = vmatprep.subr.mxu0 0.0
      %3161 = vmatpush1.msra.mxu0 %v3149
      %3162 = vmatprep.subr.mxu0 0.0
      %3163 = vmatpush1.msra.mxu0 0.0
      %3164 = vmatprep.subr.mxu0 0.0
      %3165 = vmatpush1.msra.mxu0 0.0
      %3166 = vmatprep.subr.mxu0 0.0
      %3167 = vmatpush1.msra.mxu0 0.0
      %3168 = vmatprep.subr.mxu0 0.0
      %3169 = vmatpush1.msra.mxu0 0.0
      %3170 = vmatprep.subr.mxu0 0.0
      %3171 = vmatpush1.msra.mxu0 0.0
      %3172 = vmatprep.subr.mxu0 0.0
      %3173 = vmatpush1.msra.mxu0 0.0
      %3174 = vmatprep.subr.mxu0 0.0
      %3175 = vmatpush1.msra.mxu0 0.0
      %3176 = vmatprep.subr.mxu0 0.0
      %3177 = vmatpush1.msra.mxu0 0.0
      %3178 = vmatprep.subr.mxu0 0.0
      %3179 = vmatpush1.msra.mxu0 0.0
      %3180 = vmatprep.subr.mxu0 0.0
      %3181 = vmatpush1.msra.mxu0 0.0
      %3182 = vmatprep.subr.mxu0 0.0
      %3183 = vmatpush1.msra.mxu0 0.0
      %3184 = vmatprep.subr.mxu0 0.0
      %3185 = vmatpush1.msra.mxu0 0.0
      %3186 = vmatprep.subr.mxu0 0.0
      %3187 = vmatpush1.msra.mxu0 0.0
      %3188 = vmatprep.subr.mxu0 0.0
      %3189 = vmatpush1.msra.mxu0 0.0
      %3190 = vmatprep.subr.mxu0 0.0
      %3191 = vmatpush1.msra.mxu0 0.0
      %3192 = vmatprep.subr.mxu0 0.0
      %3193 = vmatpush1.msra.mxu0 0.0
      %3194 = vmatprep.subr.mxu0 0.0
      %3195 = vmatpush1.msra.mxu0 0.0
      %3196 = vmatprep.subr.mxu0 0.0
      %3197 = vmatpush1.msra.mxu0 0.0
      %3198 = vmatprep.subr.mxu0 0.0
      %3199 = vmatpush1.msra.mxu0 0.0
      %3200 = vmatprep.subr.mxu0 0.0
      %3201 = vmatpush1.msra.mxu0 0.0
      %3202 = vmatprep.subr.mxu0 0.0
      %3203 = vmatpush1.msra.mxu0 0.0
      %3204 = vmatprep.subr.mxu0 0.0
      %3205 = vmatpush1.msra.mxu0 0.0
      %3206 = vmatprep.subr.mxu0 0.0
      %3207 = vmatpush1.msra.mxu0 0.0
      %3208 = vmatprep.subr.mxu0 0.0
      %3209 = vmatpush1.msra.mxu0 0.0
      %3210 = vmatprep.subr.mxu0 0.0
      %3211 = vmatpush1.msra.mxu0 0.0
      %3212 = vmatprep.subr.mxu0 0.0
      %3213 = vmatpush1.msra.mxu0 0.0
      %3214 = vmatprep.subr.mxu0 0.0
      %3215 = vmatpush1.msra.mxu0 0.0
      %3216 = vmatprep.subr.mxu0 0.0
      %3217 = vmatpush1.msra.mxu0 0.0
      %3218 = vmatprep.subr.mxu0 0.0
      %3219 = vmatpush1.msra.mxu0 0.0
      %3220 = vmatprep.subr.mxu0 0.0
      %3221 = vmatpush1.msra.mxu0 0.0
      %3222 = vmatprep.mubr.f32.mxu0 0.0
      %3223 = vmatmul.mubr.f32.gmra.mrb[0].mxu0 %v3153
      %v3224 = vpop.f32.mrb[0].mxu0
      %v3225 = vadd.f32 0.0, %v3224
      %v3226 = vpop.f32.mrb[0].mxu0
      %3227 = vmatprep.mubr.f32.mxu0 0.0
      %3228 = vmatmul.mubr.f32.gmra.mrb[0].mxu0 %v3156
      %v3229 = vpop.f32.mrb[0].mxu0
      %v3230 = vadd.f32 0.0, %v3229
      %v3231 = vpop.f32.mrb[0].mxu0
      %3232 = vdwg.mxu0
      %3235 = vrot.lane.b32.xlu0 %v3225, 32
      %v3236 = vpop.permute.xlu0 %3235
      %3237 = vrot.lane.b32.xlu0 %v3230, 32
      %v3238 = vpop.permute.xlu0 %3237
      %3241 = vst.msk [vmem:[#allocation2] sm:$0xff] %vm1732, %v3236
      %3242 = vst.msk [vmem:[#allocation2 + $0x8] sm:$0xff] %vm1732, %v3238
      %3243 = vrot.lane.b32.xlu0 %v2837, 64
      %v3244 = vpop.permute.xlu0 %3243
      %3245 = vrot.lane.b32.xlu0 %v2838, 64
      %v3246 = vpop.permute.xlu0 %3245
      %3247 = vrot.lane.b32.xlu0 %v2754, 64
      %v3248 = vpop.permute.xlu0 %3247
      %3249 = vrot.lane.b32.xlu0 %v2760, 64
      %v3250 = vpop.permute.xlu0 %3249
      %v3251 = vsel %vm1328, %v3244, 0
      %v3253 = vsel %vm1328, %v3246, 0
      %v3255 = vsel %vm1328, %v3248, 0
      %v3257 = vsel %vm1328, %v3250, 0
      %3259 = vmatprep.subr.mxu0 0.0
      %3260 = vmatpush1.xpose.msra.mxu0 %v3255
      %3261 = vmatprep.subr.mxu0 0.0
      %3262 = vmatpush1.xpose.msra.mxu0 %v3257
      %3263 = vmatprep.subr.mxu0 0.0
      %3264 = vmatpush1.xpose.msra.mxu0 0.0
      %3265 = vmatprep.subr.mxu0 0.0
      %3266 = vmatpush1.xpose.msra.mxu0 0.0
      %3267 = vmatprep.subr.mxu0 0.0
      %3268 = vmatpush1.xpose.msra.mxu0 0.0
      %3269 = vmatprep.subr.mxu0 0.0
      %3270 = vmatpush1.xpose.msra.mxu0 0.0
      %3271 = vmatprep.subr.mxu0 0.0
      %3272 = vmatpush1.xpose.msra.mxu0 0.0
      %3273 = vmatprep.subr.mxu0 0.0
      %3274 = vmatpush1.xpose.msra.mxu0 0.0
      %3275 = vmatprep.subr.mxu0 0.0
      %3276 = vmatpush1.xpose.msra.mxu0 0.0
      %3277 = vmatprep.subr.mxu0 0.0
      %3278 = vmatpush1.xpose.msra.mxu0 0.0
      %3279 = vmatprep.subr.mxu0 0.0
      %3280 = vmatpush1.xpose.msra.mxu0 0.0
      %3281 = vmatprep.subr.mxu0 0.0
      %3282 = vmatpush1.xpose.msra.mxu0 0.0
      %3283 = vmatprep.subr.mxu0 0.0
      %3284 = vmatpush1.xpose.msra.mxu0 0.0
      %3285 = vmatprep.subr.mxu0 0.0
      %3286 = vmatpush1.xpose.msra.mxu0 0.0
      %3287 = vmatprep.subr.mxu0 0.0
      %3288 = vmatpush1.xpose.msra.mxu0 0.0
      %3289 = vmatprep.subr.mxu0 0.0
      %3290 = vmatpush1.xpose.msra.mxu0 0.0
      %3291 = vmatprep.subr.mxu0 0.0
      %3292 = vmatpush1.xpose.msra.mxu0 0.0
      %3293 = vmatprep.subr.mxu0 0.0
      %3294 = vmatpush1.xpose.msra.mxu0 0.0
      %3295 = vmatprep.subr.mxu0 0.0
      %3296 = vmatpush1.xpose.msra.mxu0 0.0
      %3297 = vmatprep.subr.mxu0 0.0
      %3298 = vmatpush1.xpose.msra.mxu0 0.0
      %3299 = vmatprep.subr.mxu0 0.0
      %3300 = vmatpush1.xpose.msra.mxu0 0.0
      %3301 = vmatprep.subr.mxu0 0.0
      %3302 = vmatpush1.xpose.msra.mxu0 0.0
      %3303 = vmatprep.subr.mxu0 0.0
      %3304 = vmatpush1.xpose.msra.mxu0 0.0
      %3305 = vmatprep.subr.mxu0 0.0
      %3306 = vmatpush1.xpose.msra.mxu0 0.0
      %3307 = vmatprep.subr.mxu0 0.0
      %3308 = vmatpush1.xpose.msra.mxu0 0.0
      %3309 = vmatprep.subr.mxu0 0.0
      %3310 = vmatpush1.xpose.msra.mxu0 0.0
      %3311 = vmatprep.subr.mxu0 0.0
      %3312 = vmatpush1.xpose.msra.mxu0 0.0
      %3313 = vmatprep.subr.mxu0 0.0
      %3314 = vmatpush1.xpose.msra.mxu0 0.0
      %3315 = vmatprep.subr.mxu0 0.0
      %3316 = vmatpush1.xpose.msra.mxu0 0.0
      %3317 = vmatprep.subr.mxu0 0.0
      %3318 = vmatpush1.xpose.msra.mxu0 0.0
      %3319 = vmatprep.subr.mxu0 0.0
      %3320 = vmatpush1.xpose.msra.mxu0 0.0
      %3321 = vmatprep.subr.mxu0 0.0
      %3322 = vmatpush1.xpose.msra.mxu0 0.0
      %3323 = vmatprep.mubr.f32.mxu0 0.0
      %3324 = vmatmul.mubr.f32.gmra.mrb[0].mxu0 %v3251
      %v3325 = vpop.f32.mrb[0].mxu0
      %v3326 = vadd.f32 0.0, %v3325
      %v3327 = vpop.f32.mrb[0].mxu0
      %3328 = vmatprep.mubr.f32.mxu0 0.0
      %3329 = vmatmul.mubr.f32.gmra.mrb[0].mxu0 %v3253
      %v3330 = vpop.f32.mrb[0].mxu0
      %v3331 = vadd.f32 0.0, %v3330
      %v3332 = vpop.f32.mrb[0].mxu0
      %3333 = vdwg.mxu0
      %v3334 = vsel %vm1416, %v3326, -inf
      %3335 = vmax.xlane.f32.xlu0 %v3334
      %v3336 = vpop.xlane.xlu0 %3335
      %v3337 = vsel %vm1416, %v3331, -inf
      %3338 = vmax.xlane.f32.xlu0 %v3337
      %v3339 = vpop.xlane.xlu0 %3338
      %v3340 = vsub.f32 %v3326, %v3336
      %v3341 = vsub.f32 %v3331, %v3339
      %v3342 = vmul.f32 %v3340, 1.442695
      %v3343 = vpow.pop %v3342
      %v3344 = vmul.f32 %v3341, 1.442695
      %v3345 = vpow.pop %v3344
      %v3346 = vsel %vm1416, %v3343, 0.0
      %3347 = vadd.xlane.f32.xlu0 %v3346
      %v3348 = vpop.xlane.xlu0 %3347
      %v3349 = vsel %vm1416, %v3345, 0.0
      %3350 = vadd.xlane.f32.xlu0 %v3349
      %v3351 = vpop.xlane.xlu0 %3350
      %v3352 = vrcp.pop %v3348
      %v3353 = vmul.f32 %v3343, %v3352
      %v3354 = vrcp.pop %v3351
      %v3355 = vmul.f32 %v3345, %v3354
      %3356 = vrot.lane.b32.xlu0 %v2829, 64
      %v3357 = vpop.permute.xlu0 %3356
      %3358 = vrot.lane.b32.xlu0 %v2834, 64
      %v3359 = vpop.permute.xlu0 %3358
      %v3363 = vsel %vm1416, %v3353, 0
      %v3366 = vsel %vm1416, %v3355, 0
      %3368 = vmatprep.subr.mxu0 0.0
      %3369 = vmatpush1.msra.mxu0 %v3357
      %3370 = vmatprep.subr.mxu0 0.0
      %3371 = vmatpush1.msra.mxu0 %v3359
      %3372 = vmatprep.subr.mxu0 0.0
      %3373 = vmatpush1.msra.mxu0 0.0
      %3374 = vmatprep.subr.mxu0 0.0
      %3375 = vmatpush1.msra.mxu0 0.0
      %3376 = vmatprep.subr.mxu0 0.0
      %3377 = vmatpush1.msra.mxu0 0.0
      %3378 = vmatprep.subr.mxu0 0.0
      %3379 = vmatpush1.msra.mxu0 0.0
      %3380 = vmatprep.subr.mxu0 0.0
      %3381 = vmatpush1.msra.mxu0 0.0
      %3382 = vmatprep.subr.mxu0 0.0
      %3383 = vmatpush1.msra.mxu0 0.0
      %3384 = vmatprep.subr.mxu0 0.0
      %3385 = vmatpush1.msra.mxu0 0.0
      %3386 = vmatprep.subr.mxu0 0.0
      %3387 = vmatpush1.msra.mxu0 0.0
      %3388 = vmatprep.subr.mxu0 0.0
      %3389 = vmatpush1.msra.mxu0 0.0
      %3390 = vmatprep.subr.mxu0 0.0
      %3391 = vmatpush1.msra.mxu0 0.0
      %3392 = vmatprep.subr.mxu0 0.0
      %3393 = vmatpush1.msra.mxu0 0.0
      %3394 = vmatprep.subr.mxu0 0.0
      %3395 = vmatpush1.msra.mxu0 0.0
      %3396 = vmatprep.subr.mxu0 0.0
      %3397 = vmatpush1.msra.mxu0 0.0
      %3398 = vmatprep.subr.mxu0 0.0
      %3399 = vmatpush1.msra.mxu0 0.0
      %3400 = vmatprep.subr.mxu0 0.0
      %3401 = vmatpush1.msra.mxu0 0.0
      %3402 = vmatprep.subr.mxu0 0.0
      %3403 = vmatpush1.msra.mxu0 0.0
      %3404 = vmatprep.subr.mxu0 0.0
      %3405 = vmatpush1.msra.mxu0 0.0
      %3406 = vmatprep.subr.mxu0 0.0
      %3407 = vmatpush1.msra.mxu0 0.0
      %3408 = vmatprep.subr.mxu0 0.0
      %3409 = vmatpush1.msra.mxu0 0.0
      %3410 = vmatprep.subr.mxu0 0.0
      %3411 = vmatpush1.msra.mxu0 0.0
      %3412 = vmatprep.subr.mxu0 0.0
      %3413 = vmatpush1.msra.mxu0 0.0
      %3414 = vmatprep.subr.mxu0 0.0
      %3415 = vmatpush1.msra.mxu0 0.0
      %3416 = vmatprep.subr.mxu0 0.0
      %3417 = vmatpush1.msra.mxu0 0.0
      %3418 = vmatprep.subr.mxu0 0.0
      %3419 = vmatpush1.msra.mxu0 0.0
      %3420 = vmatprep.subr.mxu0 0.0
      %3421 = vmatpush1.msra.mxu0 0.0
      %3422 = vmatprep.subr.mxu0 0.0
      %3423 = vmatpush1.msra.mxu0 0.0
      %3424 = vmatprep.subr.mxu0 0.0
      %3425 = vmatpush1.msra.mxu0 0.0
      %3426 = vmatprep.subr.mxu0 0.0
      %3427 = vmatpush1.msra.mxu0 0.0
      %3428 = vmatprep.subr.mxu0 0.0
      %3429 = vmatpush1.msra.mxu0 0.0
      %3430 = vmatprep.subr.mxu0 0.0
      %3431 = vmatpush1.msra.mxu0 0.0
      %3432 = vmatprep.mubr.f32.mxu0 0.0
      %3433 = vmatmul.mubr.f32.gmra.mrb[0].mxu0 %v3363
      %v3434 = vpop.f32.mrb[0].mxu0
      %v3435 = vadd.f32 0.0, %v3434
      %v3436 = vpop.f32.mrb[0].mxu0
      %3437 = vmatprep.mubr.f32.mxu0 0.0
      %3438 = vmatmul.mubr.f32.gmra.mrb[0].mxu0 %v3366
      %v3439 = vpop.f32.mrb[0].mxu0
      %v3440 = vadd.f32 0.0, %v3439
      %v3441 = vpop.f32.mrb[0].mxu0
      %3442 = vdwg.mxu0
      %3445 = vrot.lane.b32.xlu0 %v3435, 64
      %v3446 = vpop.permute.xlu0 %3445
      %3447 = vrot.lane.b32.xlu0 %v3440, 64
      %v3448 = vpop.permute.xlu0 %3447
      %3451 = vst.msk [vmem:[#allocation2] sm:$0xff] %vm1943, %v3446
      %3452 = vst.msk [vmem:[#allocation2 + $0x8] sm:$0xff] %vm1943, %v3448
      %3453 = vrot.lane.b32.xlu0 %v2837, 32
      %v3454 = vpop.permute.xlu0 %3453
      %3455 = vrot.lane.b32.xlu0 %v2838, 32
      %v3456 = vpop.permute.xlu0 %3455
      %3457 = vrot.lane.b32.xlu0 %v2754, 32
      %v3458 = vpop.permute.xlu0 %3457
      %3459 = vrot.lane.b32.xlu0 %v2760, 32
      %v3460 = vpop.permute.xlu0 %3459
      %v3461 = vsel %vm1328, %v3454, 0
      %v3463 = vsel %vm1328, %v3456, 0
      %v3465 = vsel %vm1328, %v3458, 0
      %v3467 = vsel %vm1328, %v3460, 0
      %3469 = vmatprep.subr.mxu0 0.0
      %3470 = vmatpush1.xpose.msra.mxu0 %v3465
      %3471 = vmatprep.subr.mxu0 0.0
      %3472 = vmatpush1.xpose.msra.mxu0 %v3467
      %3473 = vmatprep.subr.mxu0 0.0
      %3474 = vmatpush1.xpose.msra.mxu0 0.0
      %3475 = vmatprep.subr.mxu0 0.0
      %3476 = vmatpush1.xpose.msra.mxu0 0.0
      %3477 = vmatprep.subr.mxu0 0.0
      %3478 = vmatpush1.xpose.msra.mxu0 0.0
      %3479 = vmatprep.subr.mxu0 0.0
      %3480 = vmatpush1.xpose.msra.mxu0 0.0
      %3481 = vmatprep.subr.mxu0 0.0
      %3482 = vmatpush1.xpose.msra.mxu0 0.0
      %3483 = vmatprep.subr.mxu0 0.0
      %3484 = vmatpush1.xpose.msra.mxu0 0.0
      %3485 = vmatprep.subr.mxu0 0.0
      %3486 = vmatpush1.xpose.msra.mxu0 0.0
      %3487 = vmatprep.subr.mxu0 0.0
      %3488 = vmatpush1.xpose.msra.mxu0 0.0
      %3489 = vmatprep.subr.mxu0 0.0
      %3490 = vmatpush1.xpose.msra.mxu0 0.0
      %3491 = vmatprep.subr.mxu0 0.0
      %3492 = vmatpush1.xpose.msra.mxu0 0.0
      %3493 = vmatprep.subr.mxu0 0.0
      %3494 = vmatpush1.xpose.msra.mxu0 0.0
      %3495 = vmatprep.subr.mxu0 0.0
      %3496 = vmatpush1.xpose.msra.mxu0 0.0
      %3497 = vmatprep.subr.mxu0 0.0
      %3498 = vmatpush1.xpose.msra.mxu0 0.0
      %3499 = vmatprep.subr.mxu0 0.0
      %3500 = vmatpush1.xpose.msra.mxu0 0.0
      %3501 = vmatprep.subr.mxu0 0.0
      %3502 = vmatpush1.xpose.msra.mxu0 0.0
      %3503 = vmatprep.subr.mxu0 0.0
      %3504 = vmatpush1.xpose.msra.mxu0 0.0
      %3505 = vmatprep.subr.mxu0 0.0
      %3506 = vmatpush1.xpose.msra.mxu0 0.0
      %3507 = vmatprep.subr.mxu0 0.0
      %3508 = vmatpush1.xpose.msra.mxu0 0.0
      %3509 = vmatprep.subr.mxu0 0.0
      %3510 = vmatpush1.xpose.msra.mxu0 0.0
      %3511 = vmatprep.subr.mxu0 0.0
      %3512 = vmatpush1.xpose.msra.mxu0 0.0
      %3513 = vmatprep.subr.mxu0 0.0
      %3514 = vmatpush1.xpose.msra.mxu0 0.0
      %3515 = vmatprep.subr.mxu0 0.0
      %3516 = vmatpush1.xpose.msra.mxu0 0.0
      %3517 = vmatprep.subr.mxu0 0.0
      %3518 = vmatpush1.xpose.msra.mxu0 0.0
      %3519 = vmatprep.subr.mxu0 0.0
      %3520 = vmatpush1.xpose.msra.mxu0 0.0
      %3521 = vmatprep.subr.mxu0 0.0
      %3522 = vmatpush1.xpose.msra.mxu0 0.0
      %3523 = vmatprep.subr.mxu0 0.0
      %3524 = vmatpush1.xpose.msra.mxu0 0.0
      %3525 = vmatprep.subr.mxu0 0.0
      %3526 = vmatpush1.xpose.msra.mxu0 0.0
      %3527 = vmatprep.subr.mxu0 0.0
      %3528 = vmatpush1.xpose.msra.mxu0 0.0
      %3529 = vmatprep.subr.mxu0 0.0
      %3530 = vmatpush1.xpose.msra.mxu0 0.0
      %3531 = vmatprep.subr.mxu0 0.0
      %3532 = vmatpush1.xpose.msra.mxu0 0.0
      %3533 = vmatprep.mubr.f32.mxu0 0.0
      %3534 = vmatmul.mubr.f32.gmra.mrb[0].mxu0 %v3461
      %v3535 = vpop.f32.mrb[0].mxu0
      %v3536 = vadd.f32 0.0, %v3535
      %v3537 = vpop.f32.mrb[0].mxu0
      %3538 = vmatprep.mubr.f32.mxu0 0.0
      %3539 = vmatmul.mubr.f32.gmra.mrb[0].mxu0 %v3463
      %v3540 = vpop.f32.mrb[0].mxu0
      %v3541 = vadd.f32 0.0, %v3540
      %v3542 = vpop.f32.mrb[0].mxu0
      %3543 = vdwg.mxu0
      %v3544 = vsel %vm1416, %v3536, -inf
      %3545 = vmax.xlane.f32.xlu0 %v3544
      %v3546 = vpop.xlane.xlu0 %3545
      %v3547 = vsel %vm1416, %v3541, -inf
      %3548 = vmax.xlane.f32.xlu0 %v3547
      %v3549 = vpop.xlane.xlu0 %3548
      %v3550 = vsub.f32 %v3536, %v3546
      %v3551 = vsub.f32 %v3541, %v3549
      %v3552 = vmul.f32 %v3550, 1.442695
      %v3553 = vpow.pop %v3552
      %v3554 = vmul.f32 %v3551, 1.442695
      %v3555 = vpow.pop %v3554
      %v3556 = vsel %vm1416, %v3553, 0.0
      %3557 = vadd.xlane.f32.xlu0 %v3556
      %v3558 = vpop.xlane.xlu0 %3557
      %v3559 = vsel %vm1416, %v3555, 0.0
      %3560 = vadd.xlane.f32.xlu0 %v3559
      %v3561 = vpop.xlane.xlu0 %3560
      %v3562 = vrcp.pop %v3558
      %v3563 = vmul.f32 %v3553, %v3562
      %v3564 = vrcp.pop %v3561
      %v3565 = vmul.f32 %v3555, %v3564
      %3566 = vrot.lane.b32.xlu0 %v2829, 32
      %v3567 = vpop.permute.xlu0 %3566
      %3568 = vrot.lane.b32.xlu0 %v2834, 32
      %v3569 = vpop.permute.xlu0 %3568
      %v3573 = vsel %vm1416, %v3563, 0
      %v3576 = vsel %vm1416, %v3565, 0
      %3578 = vmatprep.subr.mxu0 0.0
      %3579 = vmatpush1.msra.mxu0 %v3567
      %3580 = vmatprep.subr.mxu0 0.0
      %3581 = vmatpush1.msra.mxu0 %v3569
      %3582 = vmatprep.subr.mxu0 0.0
      %3583 = vmatpush1.msra.mxu0 0.0
      %3584 = vmatprep.subr.mxu0 0.0
      %3585 = vmatpush1.msra.mxu0 0.0
      %3586 = vmatprep.subr.mxu0 0.0
      %3587 = vmatpush1.msra.mxu0 0.0
      %3588 = vmatprep.subr.mxu0 0.0
      %3589 = vmatpush1.msra.mxu0 0.0
      %3590 = vmatprep.subr.mxu0 0.0
      %3591 = vmatpush1.msra.mxu0 0.0
      %3592 = vmatprep.subr.mxu0 0.0
      %3593 = vmatpush1.msra.mxu0 0.0
      %3594 = vmatprep.subr.mxu0 0.0
      %3595 = vmatpush1.msra.mxu0 0.0
      %3596 = vmatprep.subr.mxu0 0.0
      %3597 = vmatpush1.msra.mxu0 0.0
      %3598 = vmatprep.subr.mxu0 0.0
      %3599 = vmatpush1.msra.mxu0 0.0
      %3600 = vmatprep.subr.mxu0 0.0
      %3601 = vmatpush1.msra.mxu0 0.0
      %3602 = vmatprep.subr.mxu0 0.0
      %3603 = vmatpush1.msra.mxu0 0.0
      %3604 = vmatprep.subr.mxu0 0.0
      %3605 = vmatpush1.msra.mxu0 0.0
      %3606 = vmatprep.subr.mxu0 0.0
      %3607 = vmatpush1.msra.mxu0 0.0
      %3608 = vmatprep.subr.mxu0 0.0
      %3609 = vmatpush1.msra.mxu0 0.0
      %3610 = vmatprep.subr.mxu0 0.0
      %3611 = vmatpush1.msra.mxu0 0.0
      %3612 = vmatprep.subr.mxu0 0.0
      %3613 = vmatpush1.msra.mxu0 0.0
      %3614 = vmatprep.subr.mxu0 0.0
      %3615 = vmatpush1.msra.mxu0 0.0
      %3616 = vmatprep.subr.mxu0 0.0
      %3617 = vmatpush1.msra.mxu0 0.0
      %3618 = vmatprep.subr.mxu0 0.0
      %3619 = vmatpush1.msra.mxu0 0.0
      %3620 = vmatprep.subr.mxu0 0.0
      %3621 = vmatpush1.msra.mxu0 0.0
      %3622 = vmatprep.subr.mxu0 0.0
      %3623 = vmatpush1.msra.mxu0 0.0
      %3624 = vmatprep.subr.mxu0 0.0
      %3625 = vmatpush1.msra.mxu0 0.0
      %3626 = vmatprep.subr.mxu0 0.0
      %3627 = vmatpush1.msra.mxu0 0.0
      %3628 = vmatprep.subr.mxu0 0.0
      %3629 = vmatpush1.msra.mxu0 0.0
      %3630 = vmatprep.subr.mxu0 0.0
      %3631 = vmatpush1.msra.mxu0 0.0
      %3632 = vmatprep.subr.mxu0 0.0
      %3633 = vmatpush1.msra.mxu0 0.0
      %3634 = vmatprep.subr.mxu0 0.0
      %3635 = vmatpush1.msra.mxu0 0.0
      %3636 = vmatprep.subr.mxu0 0.0
      %3637 = vmatpush1.msra.mxu0 0.0
      %3638 = vmatprep.subr.mxu0 0.0
      %3639 = vmatpush1.msra.mxu0 0.0
      %3640 = vmatprep.subr.mxu0 0.0
      %3641 = vmatpush1.msra.mxu0 0.0
      %3642 = vmatprep.mubr.f32.mxu0 0.0
      %3643 = vmatmul.mubr.f32.gmra.mrb[0].mxu0 %v3573
      %v3644 = vpop.f32.mrb[0].mxu0
      %v3645 = vadd.f32 0.0, %v3644
      %v3646 = vpop.f32.mrb[0].mxu0
      %3647 = vmatprep.mubr.f32.mxu0 0.0
      %3648 = vmatmul.mubr.f32.gmra.mrb[0].mxu0 %v3576
      %v3649 = vpop.f32.mrb[0].mxu0
      %v3650 = vadd.f32 0.0, %v3649
      %v3651 = vpop.f32.mrb[0].mxu0
      %3652 = vdwg.mxu0
      %3655 = vrot.lane.b32.xlu0 %v3645, 96
      %v3656 = vpop.permute.xlu0 %3655
      %3657 = vrot.lane.b32.xlu0 %v3650, 96
      %v3658 = vpop.permute.xlu0 %3657
      %3661 = vst.msk [vmem:[#allocation2] sm:$0xff] %vm2154, %v3656
      %3662 = vst.msk [vmem:[#allocation2 + $0x8] sm:$0xff] %vm2154, %v3658
      %v3663 = vld [vmem:[#allocation2] sm:$0xff]
      %v3664 = vld [vmem:[#allocation2 + $0x8] sm:$0xff]
      %s3665 = scalar_lea.vmem %s8, 128
      %v3666 = vld [vmem:[%s3665] sm:$0xff]
      %v3667 = vld [vmem:[%s3665 + $0x8] sm:$0xff]
      %v3668 = vld [vmem:[%s3665 + $0x10] sm:$0xff]
      %v3669 = vld [vmem:[%s3665 + $0x18] sm:$0xff]
      %v3670 = vld [vmem:[%s3665 + $0x20] sm:$0xff]
      %v3671 = vld [vmem:[%s3665 + $0x28] sm:$0xff]
      %v3672 = vld [vmem:[%s3665 + $0x30] sm:$0xff]
      %v3673 = vld [vmem:[%s3665 + $0x38] sm:$0xff]
      %v3674 = vld [vmem:[%s3665 + $0x40] sm:$0xff]
      %v3675 = vld [vmem:[%s3665 + $0x48] sm:$0xff]
      %v3676 = vld [vmem:[%s3665 + $0x50] sm:$0xff]
      %v3677 = vld [vmem:[%s3665 + $0x58] sm:$0xff]
      %v3678 = vld [vmem:[%s3665 + $0x60] sm:$0xff]
      %v3679 = vld [vmem:[%s3665 + $0x68] sm:$0xff]
      %v3680 = vld [vmem:[%s3665 + $0x70] sm:$0xff]
      %v3681 = vld [vmem:[%s3665 + $0x78] sm:$0xff]
      %3682 = vmatprep.subr.mxu0 0.0
      %3683 = vmatpush1.msra.mxu0 %v3666
      %3684 = vmatprep.subr.mxu0 0.0
      %3685 = vmatpush1.msra.mxu0 %v3667
      %3686 = vmatprep.subr.mxu0 0.0
      %3687 = vmatpush1.msra.mxu0 %v3668
      %3688 = vmatprep.subr.mxu0 0.0
      %3689 = vmatpush1.msra.mxu0 %v3669
      %3690 = vmatprep.subr.mxu0 0.0
      %3691 = vmatpush1.msra.mxu0 %v3670
      %3692 = vmatprep.subr.mxu0 0.0
      %3693 = vmatpush1.msra.mxu0 %v3671
      %3694 = vmatprep.subr.mxu0 0.0
      %3695 = vmatpush1.msra.mxu0 %v3672
      %3696 = vmatprep.subr.mxu0 0.0
      %3697 = vmatpush1.msra.mxu0 %v3673
      %3698 = vmatprep.subr.mxu0 0.0
      %3699 = vmatpush1.msra.mxu0 %v3674
      %3700 = vmatprep.subr.mxu0 0.0
      %3701 = vmatpush1.msra.mxu0 %v3675
      %3702 = vmatprep.subr.mxu0 0.0
      %3703 = vmatpush1.msra.mxu0 %v3676
      %3704 = vmatprep.subr.mxu0 0.0
      %3705 = vmatpush1.msra.mxu0 %v3677
      %3706 = vmatprep.subr.mxu0 0.0
      %3707 = vmatpush1.msra.mxu0 %v3678
      %3708 = vmatprep.subr.mxu0 0.0
      %3709 = vmatpush1.msra.mxu0 %v3679
      %3710 = vmatprep.subr.mxu0 0.0
      %3711 = vmatpush1.msra.mxu0 %v3680
      %3712 = vmatprep.subr.mxu0 0.0
      %3713 = vmatpush1.msra.mxu0 %v3681
      %3714 = vmatprep.subr.mxu0 0.0
      %3715 = vmatpush1.msra.mxu0 0.0
      %3716 = vmatprep.subr.mxu0 0.0
      %3717 = vmatpush1.msra.mxu0 0.0
      %3718 = vmatprep.subr.mxu0 0.0
      %3719 = vmatpush1.msra.mxu0 0.0
      %3720 = vmatprep.subr.mxu0 0.0
      %3721 = vmatpush1.msra.mxu0 0.0
      %3722 = vmatprep.subr.mxu0 0.0
      %3723 = vmatpush1.msra.mxu0 0.0
      %3724 = vmatprep.subr.mxu0 0.0
      %3725 = vmatpush1.msra.mxu0 0.0
      %3726 = vmatprep.subr.mxu0 0.0
      %3727 = vmatpush1.msra.mxu0 0.0
      %3728 = vmatprep.subr.mxu0 0.0
      %3729 = vmatpush1.msra.mxu0 0.0
      %3730 = vmatprep.subr.mxu0 0.0
      %3731 = vmatpush1.msra.mxu0 0.0
      %3732 = vmatprep.subr.mxu0 0.0
      %3733 = vmatpush1.msra.mxu0 0.0
      %3734 = vmatprep.subr.mxu0 0.0
      %3735 = vmatpush1.msra.mxu0 0.0
      %3736 = vmatprep.subr.mxu0 0.0
      %3737 = vmatpush1.msra.mxu0 0.0
      %3738 = vmatprep.subr.mxu0 0.0
      %3739 = vmatpush1.msra.mxu0 0.0
      %3740 = vmatprep.subr.mxu0 0.0
      %3741 = vmatpush1.msra.mxu0 0.0
      %3742 = vmatprep.subr.mxu0 0.0
      %3743 = vmatpush1.msra.mxu0 0.0
      %3744 = vmatprep.subr.mxu0 0.0
      %3745 = vmatpush1.msra.mxu0 0.0
      %3746 = vmatprep.mubr.f32.mxu0 0.0
      %3747 = vmatmul.mubr.f32.gmra.mrb[0].mxu0 %v3663
      %v3748 = vpop.f32.mrb[0].mxu0
      %v3749 = vadd.f32 0.0, %v3748
      %v3750 = vpop.f32.mrb[0].mxu0
      %3751 = vmatprep.mubr.f32.mxu0 0.0
      %3752 = vmatmul.mubr.f32.gmra.mrb[0].mxu0 %v3664
      %v3753 = vpop.f32.mrb[0].mxu0
      %v3754 = vadd.f32 0.0, %v3753
      %v3755 = vpop.f32.mrb[0].mxu0
      %3756 = vdwg.mxu0
      %v3757 = vadd.f32 %v2574, %v3749
      %v3758 = vadd.f32 %v2575, %v3754
      %s3759 = scalar_lea.vmem %s9, 1
      %v3760 = vld [vmem:[%s3759] sm:$0x1]
      %v3762 = vlaneseq
      %v3763 = vshrl.u32 %v3762, 7
      %v3764 = vsub.s32 0, %v3763
      %v3765 = vrot.slane %v3760, %v3764
      %v3767 = vadd.f32 %v3757, %v3765
      %v3768 = vadd.f32 %v3758, %v3765
      %s3769 = scalar_lea.vmem %s10, 1
      %v3770 = vld [vmem:[%s3769] sm:$0x1]
      %s3771 = scalar_lea.vmem %s11, 1
      %v3772 = vld [vmem:[%s3771] sm:$0x1]
      %3773 = vadd.xlane.f32.xlu0 %v3767
      %v3774 = vpop.xlane.xlu0 %3773
      %3775 = vadd.xlane.f32.xlu0 %v3768
      %v3776 = vpop.xlane.xlu0 %3775
      %v3777 = vmul.f32 %v3774, %v1074
      %v3778 = vmul.f32 %v3776, %v1074
      %v3779 = vsub.f32 %v3767, %v3777
      %v3780 = vsub.f32 %v3768, %v3778
      %v3781 = vmul.f32 %v3779, %v3779
      %v3782 = vmul.f32 %v3780, %v3780
      %3783 = vadd.xlane.f32.xlu0 %v3781
      %v3784 = vpop.xlane.xlu0 %3783
      %3785 = vadd.xlane.f32.xlu0 %v3782
      %v3786 = vpop.xlane.xlu0 %3785
      %v3787 = vmul.f32 %v3784, %v1074
      %v3788 = vmul.f32 %v3786, %v1074
      %v3789 = vadd.f32 %v3787, 1e-05
      %v3790 = vadd.f32 %v3788, 1e-05
      %v3791 = vrsqrt.pop %v3789
      %v3792 = vrsqrt.pop %v3790
      %v3793 = vmul.f32 %v3779, %v3791
      %v3794 = vmul.f32 %v3780, %v3792
      %v3796 = vlaneseq
      %v3797 = vshrl.u32 %v3796, 7
      %v3798 = vsub.s32 0, %v3797
      %v3799 = vrot.slane %v3770, %v3798
      %v3801 = vmul.f32 %v3793, %v3799
      %v3802 = vmul.f32 %v3794, %v3799
      %v3804 = vlaneseq
      %v3805 = vshrl.u32 %v3804, 7
      %v3806 = vsub.s32 0, %v3805
      %v3807 = vrot.slane %v3772, %v3806
      %v3809 = vadd.f32 %v3801, %v3807
      %v3810 = vadd.f32 %v3802, %v3807
      %s3811 = scalar_lea.vmem %s12, 256
      %v3812 = vld [vmem:[%s3811] sm:$0xff]
      %v3813 = vld [vmem:[%s3811 + $0x8] sm:$0xff]
      %v3814 = vld [vmem:[%s3811 + $0x10] sm:$0xff]
      %v3815 = vld [vmem:[%s3811 + $0x18] sm:$0xff]
      %v3816 = vld [vmem:[%s3811 + $0x20] sm:$0xff]
      %v3817 = vld [vmem:[%s3811 + $0x28] sm:$0xff]
      %v3818 = vld [vmem:[%s3811 + $0x30] sm:$0xff]
      %v3819 = vld [vmem:[%s3811 + $0x38] sm:$0xff]
      %v3820 = vld [vmem:[%s3811 + $0x40] sm:$0xff]
      %v3821 = vld [vmem:[%s3811 + $0x48] sm:$0xff]
      %v3822 = vld [vmem:[%s3811 + $0x50] sm:$0xff]
      %v3823 = vld [vmem:[%s3811 + $0x58] sm:$0xff]
      %v3824 = vld [vmem:[%s3811 + $0x60] sm:$0xff]
      %v3825 = vld [vmem:[%s3811 + $0x68] sm:$0xff]
      %v3826 = vld [vmem:[%s3811 + $0x70] sm:$0xff]
      %v3827 = vld [vmem:[%s3811 + $0x78] sm:$0xff]
      %v3828 = vld [vmem:[%s3811 + $0x80] sm:$0xff]
      %v3829 = vld [vmem:[%s3811 + $0x88] sm:$0xff]
      %v3830 = vld [vmem:[%s3811 + $0x90] sm:$0xff]
      %v3831 = vld [vmem:[%s3811 + $0x98] sm:$0xff]
      %v3832 = vld [vmem:[%s3811 + $0xa0] sm:$0xff]
      %v3833 = vld [vmem:[%s3811 + $0xa8] sm:$0xff]
      %v3834 = vld [vmem:[%s3811 + $0xb0] sm:$0xff]
      %v3835 = vld [vmem:[%s3811 + $0xb8] sm:$0xff]
      %v3836 = vld [vmem:[%s3811 + $0xc0] sm:$0xff]
      %v3837 = vld [vmem:[%s3811 + $0xc8] sm:$0xff]
      %v3838 = vld [vmem:[%s3811 + $0xd0] sm:$0xff]
      %v3839 = vld [vmem:[%s3811 + $0xd8] sm:$0xff]
      %v3840 = vld [vmem:[%s3811 + $0xe0] sm:$0xff]
      %v3841 = vld [vmem:[%s3811 + $0xe8] sm:$0xff]
      %v3842 = vld [vmem:[%s3811 + $0xf0] sm:$0xff]
      %v3843 = vld [vmem:[%s3811 + $0xf8] sm:$0xff]
      %s3844 = scalar_lea.vmem %s13, 2
      %v3845 = vld [vmem:[%s3844] sm:$0x3]
      %v3847 = vlaneseq
      %v3848 = vshrl.u32 %v3847, 7
      %v3849 = vsub.s32 0, %v3848
      %v3850 = vrot.slane %v3845, %v3849
      %v3851 = vlaneseq
      %v3852 = vshrl.u32 %v3851, 7
      %v3853 = vsub.s32 1, %v3852
      %v3854 = vrot.slane %v3845, %v3853
      %3857 = vmatprep.subr.mxu0 %v3813
      %3858 = vmatpush1.msra.mxu0 %v3812
      %3859 = vmatprep.subr.mxu0 %v3815
      %3860 = vmatpush1.msra.mxu0 %v3814
      %3861 = vmatprep.subr.mxu0 %v3817
      %3862 = vmatpush1.msra.mxu0 %v3816
      %3863 = vmatprep.subr.mxu0 %v3819
      %3864 = vmatpush1.msra.mxu0 %v3818
      %3865 = vmatprep.subr.mxu0 %v3821
      %3866 = vmatpush1.msra.mxu0 %v3820
      %3867 = vmatprep.subr.mxu0 %v3823
      %3868 = vmatpush1.msra.mxu0 %v3822
      %3869 = vmatprep.subr.mxu0 %v3825
      %3870 = vmatpush1.msra.mxu0 %v3824
      %3871 = vmatprep.subr.mxu0 %v3827
      %3872 = vmatpush1.msra.mxu0 %v3826
      %3873 = vmatprep.subr.mxu0 %v3829
      %3874 = vmatpush1.msra.mxu0 %v3828
      %3875 = vmatprep.subr.mxu0 %v3831
      %3876 = vmatpush1.msra.mxu0 %v3830
      %3877 = vmatprep.subr.mxu0 %v3833
      %3878 = vmatpush1.msra.mxu0 %v3832
      %3879 = vmatprep.subr.mxu0 %v3835
      %3880 = vmatpush1.msra.mxu0 %v3834
      %3881 = vmatprep.subr.mxu0 %v3837
      %3882 = vmatpush1.msra.mxu0 %v3836
      %3883 = vmatprep.subr.mxu0 %v3839
      %3884 = vmatpush1.msra.mxu0 %v3838
      %3885 = vmatprep.subr.mxu0 %v3841
      %3886 = vmatpush1.msra.mxu0 %v3840
      %3887 = vmatprep.subr.mxu0 %v3843
      %3888 = vmatpush1.msra.mxu0 %v3842
      %3889 = vmatprep.subr.mxu0 0.0
      %3890 = vmatpush1.msra.mxu0 0.0
      %3891 = vmatprep.subr.mxu0 0.0
      %3892 = vmatpush1.msra.mxu0 0.0
      %3893 = vmatprep.subr.mxu0 0.0
      %3894 = vmatpush1.msra.mxu0 0.0
      %3895 = vmatprep.subr.mxu0 0.0
      %3896 = vmatpush1.msra.mxu0 0.0
      %3897 = vmatprep.subr.mxu0 0.0
      %3898 = vmatpush1.msra.mxu0 0.0
      %3899 = vmatprep.subr.mxu0 0.0
      %3900 = vmatpush1.msra.mxu0 0.0
      %3901 = vmatprep.subr.mxu0 0.0
      %3902 = vmatpush1.msra.mxu0 0.0
      %3903 = vmatprep.subr.mxu0 0.0
      %3904 = vmatpush1.msra.mxu0 0.0
      %3905 = vmatprep.subr.mxu0 0.0
      %3906 = vmatpush1.msra.mxu0 0.0
      %3907 = vmatprep.subr.mxu0 0.0
      %3908 = vmatpush1.msra.mxu0 0.0
      %3909 = vmatprep.subr.mxu0 0.0
      %3910 = vmatpush1.msra.mxu0 0.0
      %3911 = vmatprep.subr.mxu0 0.0
      %3912 = vmatpush1.msra.mxu0 0.0
      %3913 = vmatprep.subr.mxu0 0.0
      %3914 = vmatpush1.msra.mxu0 0.0
      %3915 = vmatprep.subr.mxu0 0.0
      %3916 = vmatpush1.msra.mxu0 0.0
      %3917 = vmatprep.subr.mxu0 0.0
      %3918 = vmatpush1.msra.mxu0 0.0
      %3919 = vmatprep.subr.mxu0 0.0
      %3920 = vmatpush1.msra.mxu0 0.0
      %3921 = vmatprep.mubr.f32.mxu0 0.0
      %3922 = vmatmul.mubr.f32.gmra.mrb[0].mxu0 %v3809
      %v3923 = vpop.f32.mrb[0].mxu0
      %v3924 = vadd.f32 %v3850, %v3923
      %v3925 = vpop.f32.mrb[0].mxu0
      %v3926 = vadd.f32 %v3854, %v3925
      %3927 = vmatprep.mubr.f32.mxu0 0.0
      %3928 = vmatmul.mubr.f32.gmra.mrb[0].mxu0 %v3810
      %v3929 = vpop.f32.mrb[0].mxu0
      %v3930 = vadd.f32 %v3850, %v3929
      %v3931 = vpop.f32.mrb[0].mxu0
      %v3932 = vadd.f32 %v3854, %v3931
      %3933 = vdwg.mxu0
      %v3934 = vmul.f32 %v3924, %v3924
      %v3935 = vmul.f32 %v3926, %v3926
      %v3936 = vmul.f32 %v3930, %v3930
      %v3937 = vmul.f32 %v3932, %v3932
      %v3938 = vmul.f32 %v3924, %v3934
      %v3939 = vmul.f32 %v3926, %v3935
      %v3940 = vmul.f32 %v3930, %v3936
      %v3941 = vmul.f32 %v3932, %v3937
      %v3942 = vmul.f32 %v3938, 0.044715
      %v3943 = vmul.f32 %v3939, 0.044715
      %v3944 = vmul.f32 %v3940, 0.044715
      %v3945 = vmul.f32 %v3941, 0.044715
      %v3946 = vadd.f32 %v3924, %v3942
      %v3947 = vadd.f32 %v3926, %v3943
      %v3948 = vadd.f32 %v3930, %v3944
      %v3949 = vadd.f32 %v3932, %v3945
      %v3950 = vmul.f32 %v3946, 0.7978846
      %v3951 = vmul.f32 %v3947, 0.7978846
      %v3952 = vmul.f32 %v3948, 0.7978846
      %v3953 = vmul.f32 %v3949, 0.7978846
      %v3954 = vtanh.pop %v3950
      %v3955 = vtanh.pop %v3951
      %v3956 = vtanh.pop %v3952
      %v3957 = vtanh.pop %v3953
      %v3958 = vadd.f32 %v3954, 1.0
      %v3959 = vadd.f32 %v3955, 1.0
      %v3960 = vadd.f32 %v3956, 1.0
      %v3961 = vadd.f32 %v3957, 1.0
      %v3962 = vmul.f32 %v3958, 0.5
      %v3963 = vmul.f32 %v3959, 0.5
      %v3964 = vmul.f32 %v3960, 0.5
      %v3965 = vmul.f32 %v3961, 0.5
      %v3966 = vmul.f32 %v3924, %v3962
      %v3967 = vmul.f32 %v3926, %v3963
      %v3968 = vmul.f32 %v3930, %v3964
      %v3969 = vmul.f32 %v3932, %v3965
      %s3970 = scalar_lea.vmem %s14, 256
      %v3971 = vld [vmem:[%s3970] sm:$0xff]
      %v3972 = vld [vmem:[%s3970 + $0x8] sm:$0xff]
      %v3973 = vld [vmem:[%s3970 + $0x10] sm:$0xff]
      %v3974 = vld [vmem:[%s3970 + $0x18] sm:$0xff]
      %v3975 = vld [vmem:[%s3970 + $0x20] sm:$0xff]
      %v3976 = vld [vmem:[%s3970 + $0x28] sm:$0xff]
      %v3977 = vld [vmem:[%s3970 + $0x30] sm:$0xff]
      %v3978 = vld [vmem:[%s3970 + $0x38] sm:$0xff]
      %v3979 = vld [vmem:[%s3970 + $0x40] sm:$0xff]
      %v3980 = vld [vmem:[%s3970 + $0x48] sm:$0xff]
      %v3981 = vld [vmem:[%s3970 + $0x50] sm:$0xff]
      %v3982 = vld [vmem:[%s3970 + $0x58] sm:$0xff]
      %v3983 = vld [vmem:[%s3970 + $0x60] sm:$0xff]
      %v3984 = vld [vmem:[%s3970 + $0x68] sm:$0xff]
      %v3985 = vld [vmem:[%s3970 + $0x70] sm:$0xff]
      %v3986 = vld [vmem:[%s3970 + $0x78] sm:$0xff]
      %v3987 = vld [vmem:[%s3970 + $0x80] sm:$0xff]
      %v3988 = vld [vmem:[%s3970 + $0x88] sm:$0xff]
      %v3989 = vld [vmem:[%s3970 + $0x90] sm:$0xff]
      %v3990 = vld [vmem:[%s3970 + $0x98] sm:$0xff]
      %v3991 = vld [vmem:[%s3970 + $0xa0] sm:$0xff]
      %v3992 = vld [vmem:[%s3970 + $0xa8] sm:$0xff]
      %v3993 = vld [vmem:[%s3970 + $0xb0] sm:$0xff]
      %v3994 = vld [vmem:[%s3970 + $0xb8] sm:$0xff]
      %v3995 = vld [vmem:[%s3970 + $0xc0] sm:$0xff]
      %v3996 = vld [vmem:[%s3970 + $0xc8] sm:$0xff]
      %v3997 = vld [vmem:[%s3970 + $0xd0] sm:$0xff]
      %v3998 = vld [vmem:[%s3970 + $0xd8] sm:$0xff]
      %v3999 = vld [vmem:[%s3970 + $0xe0] sm:$0xff]
      %v4000 = vld [vmem:[%s3970 + $0xe8] sm:$0xff]
      %v4001 = vld [vmem:[%s3970 + $0xf0] sm:$0xff]
      %v4002 = vld [vmem:[%s3970 + $0xf8] sm:$0xff]
      %4003 = vmatprep.subr.mxu0 0.0
      %4004 = vmatpush1.msra.mxu0 %v3971
      %4005 = vmatprep.subr.mxu0 0.0
      %4006 = vmatpush1.msra.mxu0 %v3972
      %4007 = vmatprep.subr.mxu0 0.0
      %4008 = vmatpush1.msra.mxu0 %v3973
      %4009 = vmatprep.subr.mxu0 0.0
      %4010 = vmatpush1.msra.mxu0 %v3974
      %4011 = vmatprep.subr.mxu0 0.0
      %4012 = vmatpush1.msra.mxu0 %v3975
      %4013 = vmatprep.subr.mxu0 0.0
      %4014 = vmatpush1.msra.mxu0 %v3976
      %4015 = vmatprep.subr.mxu0 0.0
      %4016 = vmatpush1.msra.mxu0 %v3977
      %4017 = vmatprep.subr.mxu0 0.0
      %4018 = vmatpush1.msra.mxu0 %v3978
      %4019 = vmatprep.subr.mxu0 0.0
      %4020 = vmatpush1.msra.mxu0 %v3979
      %4021 = vmatprep.subr.mxu0 0.0
      %4022 = vmatpush1.msra.mxu0 %v3980
      %4023 = vmatprep.subr.mxu0 0.0
      %4024 = vmatpush1.msra.mxu0 %v3981
      %4025 = vmatprep.subr.mxu0 0.0
      %4026 = vmatpush1.msra.mxu0 %v3982
      %4027 = vmatprep.subr.mxu0 0.0
      %4028 = vmatpush1.msra.mxu0 %v3983
      %4029 = vmatprep.subr.mxu0 0.0
      %4030 = vmatpush1.msra.mxu0 %v3984
      %4031 = vmatprep.subr.mxu0 0.0
      %4032 = vmatpush1.msra.mxu0 %v3985
      %4033 = vmatprep.subr.mxu0 0.0
      %4034 = vmatpush1.msra.mxu0 %v3986
      %4035 = vmatprep.subr.mxu0 0.0
      %4036 = vmatpush1.msra.mxu0 %v3987
      %4037 = vmatprep.subr.mxu0 0.0
      %4038 = vmatpush1.msra.mxu0 %v3988
      %4039 = vmatprep.subr.mxu0 0.0
      %4040 = vmatpush1.msra.mxu0 %v3989
      %4041 = vmatprep.subr.mxu0 0.0
      %4042 = vmatpush1.msra.mxu0 %v3990
      %4043 = vmatprep.subr.mxu0 0.0
      %4044 = vmatpush1.msra.mxu0 %v3991
      %4045 = vmatprep.subr.mxu0 0.0
      %4046 = vmatpush1.msra.mxu0 %v3992
      %4047 = vmatprep.subr.mxu0 0.0
      %4048 = vmatpush1.msra.mxu0 %v3993
      %4049 = vmatprep.subr.mxu0 0.0
      %4050 = vmatpush1.msra.mxu0 %v3994
      %4051 = vmatprep.subr.mxu0 0.0
      %4052 = vmatpush1.msra.mxu0 %v3995
      %4053 = vmatprep.subr.mxu0 0.0
      %4054 = vmatpush1.msra.mxu0 %v3996
      %4055 = vmatprep.subr.mxu0 0.0
      %4056 = vmatpush1.msra.mxu0 %v3997
      %4057 = vmatprep.subr.mxu0 0.0
      %4058 = vmatpush1.msra.mxu0 %v3998
      %4059 = vmatprep.subr.mxu0 0.0
      %4060 = vmatpush1.msra.mxu0 %v3999
      %4061 = vmatprep.subr.mxu0 0.0
      %4062 = vmatpush1.msra.mxu0 %v4000
      %4063 = vmatprep.subr.mxu0 0.0
      %4064 = vmatpush1.msra.mxu0 %v4001
      %4065 = vmatprep.subr.mxu0 0.0
      %4066 = vmatpush1.msra.mxu0 %v4002
      %4067 = vmatprep.mubr.f32.mxu0 %v3967
      %4068 = vmatmul.mubr.f32.gmra.mrb[0].mxu0 %v3966
      %v4069 = vpop.f32.mrb[0].mxu0
      %v4070 = vadd.f32 0.0, %v4069
      %v4071 = vpop.f32.mrb[0].mxu0
      %4072 = vmatprep.mubr.f32.mxu0 %v3969
      %4073 = vmatmul.mubr.f32.gmra.mrb[0].mxu0 %v3968
      %v4074 = vpop.f32.mrb[0].mxu0
      %v4075 = vadd.f32 0.0, %v4074
      %v4076 = vpop.f32.mrb[0].mxu0
      %4077 = vdwg.mxu0
      %v4078 = vadd.f32 %v3767, %v4070
      %v4079 = vadd.f32 %v3768, %v4075
      %s4080 = scalar_lea.vmem %s15, 1
      %v4081 = vld [vmem:[%s4080] sm:$0x1]
      %v4083 = vlaneseq
      %v4084 = vshrl.u32 %v4083, 7
      %v4085 = vsub.s32 0, %v4084
      %v4086 = vrot.slane %v4081, %v4085
      %v4088 = vadd.f32 %v4078, %v4086
      %v4089 = vadd.f32 %v4079, %v4086
      %v4090 = vld [vmem:[%s16] sm:$0x1]
      %v4091 = vld [vmem:[%s17] sm:$0x1]
      %4092 = vadd.xlane.f32.xlu0 %v4088
      %v4093 = vpop.xlane.xlu0 %4092
      %4094 = vadd.xlane.f32.xlu0 %v4089
      %v4095 = vpop.xlane.xlu0 %4094
      %v4096 = vmul.f32 %v4093, %v1074
      %v4097 = vmul.f32 %v4095, %v1074
      %v4098 = vsub.f32 %v4088, %v4096
      %v4099 = vsub.f32 %v4089, %v4097
      %v4100 = vmul.f32 %v4098, %v4098
      %v4101 = vmul.f32 %v4099, %v4099
      %4102 = vadd.xlane.f32.xlu0 %v4100
      %v4103 = vpop.xlane.xlu0 %4102
      %4104 = vadd.xlane.f32.xlu0 %v4101
      %v4105 = vpop.xlane.xlu0 %4104
      %v4106 = vmul.f32 %v4103, %v1074
      %v4107 = vmul.f32 %v4105, %v1074
      %v4108 = vadd.f32 %v4106, 1e-05
      %v4109 = vadd.f32 %v4107, 1e-05
      %v4110 = vrsqrt.pop %v4108
      %v4111 = vrsqrt.pop %v4109
      %v4112 = vmul.f32 %v4098, %v4110
      %v4113 = vmul.f32 %v4099, %v4111
      %v4115 = vlaneseq
      %v4116 = vshrl.u32 %v4115, 7
      %v4117 = vsub.s32 0, %v4116
      %v4118 = vrot.slane %v4090, %v4117
      %v4120 = vmul.f32 %v4112, %v4118
      %v4121 = vmul.f32 %v4113, %v4118
      %v4123 = vlaneseq
      %v4124 = vshrl.u32 %v4123, 7
      %v4125 = vsub.s32 0, %v4124
      %v4126 = vrot.slane %v4091, %v4125
      %v4128 = vadd.f32 %v4120, %v4126
      %v4129 = vadd.f32 %v4121, %v4126
      %v4130 = vld [vmem:[%s18] sm:$0xff]
      %v4131 = vld [vmem:[%s18 + $0x8] sm:$0xff]
      %v4132 = vld [vmem:[%s18 + $0x10] sm:$0xff]
      %v4133 = vld [vmem:[%s18 + $0x18] sm:$0xff]
      %v4134 = vld [vmem:[%s18 + $0x20] sm:$0xff]
      %v4135 = vld [vmem:[%s18 + $0x28] sm:$0xff]
      %v4136 = vld [vmem:[%s18 + $0x30] sm:$0xff]
      %v4137 = vld [vmem:[%s18 + $0x38] sm:$0xff]
      %v4138 = vld [vmem:[%s18 + $0x40] sm:$0xff]
      %v4139 = vld [vmem:[%s18 + $0x48] sm:$0xff]
      %v4140 = vld [vmem:[%s18 + $0x50] sm:$0xff]
      %v4141 = vld [vmem:[%s18 + $0x58] sm:$0xff]
      %v4142 = vld [vmem:[%s18 + $0x60] sm:$0xff]
      %v4143 = vld [vmem:[%s18 + $0x68] sm:$0xff]
      %v4144 = vld [vmem:[%s18 + $0x70] sm:$0xff]
      %v4145 = vld [vmem:[%s18 + $0x78] sm:$0xff]
      %v4146 = vld [vmem:[%s19] sm:$0x1]
      %v4148 = vlaneseq
      %v4149 = vshrl.u32 %v4148, 7
      %v4150 = vsub.s32 0, %v4149
      %v4151 = vrot.slane %v4146, %v4150
      %4153 = vmatprep.subr.mxu0 0.0
      %4154 = vmatpush1.msra.mxu0 %v4130
      %4155 = vmatprep.subr.mxu0 0.0
      %4156 = vmatpush1.msra.mxu0 %v4131
      %4157 = vmatprep.subr.mxu0 0.0
      %4158 = vmatpush1.msra.mxu0 %v4132
      %4159 = vmatprep.subr.mxu0 0.0
      %4160 = vmatpush1.msra.mxu0 %v4133
      %4161 = vmatprep.subr.mxu0 0.0
      %4162 = vmatpush1.msra.mxu0 %v4134
      %4163 = vmatprep.subr.mxu0 0.0
      %4164 = vmatpush1.msra.mxu0 %v4135
      %4165 = vmatprep.subr.mxu0 0.0
      %4166 = vmatpush1.msra.mxu0 %v4136
      %4167 = vmatprep.subr.mxu0 0.0
      %4168 = vmatpush1.msra.mxu0 %v4137
      %4169 = vmatprep.subr.mxu0 0.0
      %4170 = vmatpush1.msra.mxu0 %v4138
      %4171 = vmatprep.subr.mxu0 0.0
      %4172 = vmatpush1.msra.mxu0 %v4139
      %4173 = vmatprep.subr.mxu0 0.0
      %4174 = vmatpush1.msra.mxu0 %v4140
      %4175 = vmatprep.subr.mxu0 0.0
      %4176 = vmatpush1.msra.mxu0 %v4141
      %4177 = vmatprep.subr.mxu0 0.0
      %4178 = vmatpush1.msra.mxu0 %v4142
      %4179 = vmatprep.subr.mxu0 0.0
      %4180 = vmatpush1.msra.mxu0 %v4143
      %4181 = vmatprep.subr.mxu0 0.0
      %4182 = vmatpush1.msra.mxu0 %v4144
      %4183 = vmatprep.subr.mxu0 0.0
      %4184 = vmatpush1.msra.mxu0 %v4145
      %4185 = vmatprep.subr.mxu0 0.0
      %4186 = vmatpush1.msra.mxu0 0.0
      %4187 = vmatprep.subr.mxu0 0.0
      %4188 = vmatpush1.msra.mxu0 0.0
      %4189 = vmatprep.subr.mxu0 0.0
      %4190 = vmatpush1.msra.mxu0 0.0
      %4191 = vmatprep.subr.mxu0 0.0
      %4192 = vmatpush1.msra.mxu0 0.0
      %4193 = vmatprep.subr.mxu0 0.0
      %4194 = vmatpush1.msra.mxu0 0.0
      %4195 = vmatprep.subr.mxu0 0.0
      %4196 = vmatpush1.msra.mxu0 0.0
      %4197 = vmatprep.subr.mxu0 0.0
      %4198 = vmatpush1.msra.mxu0 0.0
      %4199 = vmatprep.subr.mxu0 0.0
      %4200 = vmatpush1.msra.mxu0 0.0
      %4201 = vmatprep.subr.mxu0 0.0
      %4202 = vmatpush1.msra.mxu0 0.0
      %4203 = vmatprep.subr.mxu0 0.0
      %4204 = vmatpush1.msra.mxu0 0.0
      %4205 = vmatprep.subr.mxu0 0.0
      %4206 = vmatpush1.msra.mxu0 0.0
      %4207 = vmatprep.subr.mxu0 0.0
      %4208 = vmatpush1.msra.mxu0 0.0
      %4209 = vmatprep.subr.mxu0 0.0
      %4210 = vmatpush1.msra.mxu0 0.0
      %4211 = vmatprep.subr.mxu0 0.0
      %4212 = vmatpush1.msra.mxu0 0.0
      %4213 = vmatprep.subr.mxu0 0.0
      %4214 = vmatpush1.msra.mxu0 0.0
      %4215 = vmatprep.subr.mxu0 0.0
      %4216 = vmatpush1.msra.mxu0 0.0
      %4217 = vmatprep.mubr.f32.mxu0 0.0
      %4218 = vmatmul.mubr.f32.gmra.mrb[0].mxu0 %v4128
      %v4219 = vpop.f32.mrb[0].mxu0
      %v4220 = vadd.f32 %v4151, %v4219
      %v4221 = vpop.f32.mrb[0].mxu0
      %4222 = vmatprep.mubr.f32.mxu0 0.0
      %4223 = vmatmul.mubr.f32.gmra.mrb[0].mxu0 %v4129
      %v4224 = vpop.f32.mrb[0].mxu0
      %v4225 = vadd.f32 %v4151, %v4224
      %v4226 = vpop.f32.mrb[0].mxu0
      %4227 = vdwg.mxu0
      %v4228 = vld [vmem:[%s20] sm:$0xff]
      %v4229 = vld [vmem:[%s20 + $0x8] sm:$0xff]
      %v4230 = vld [vmem:[%s20 + $0x10] sm:$0xff]
      %v4231 = vld [vmem:[%s20 + $0x18] sm:$0xff]
      %v4232 = vld [vmem:[%s20 + $0x20] sm:$0xff]
      %v4233 = vld [vmem:[%s20 + $0x28] sm:$0xff]
      %v4234 = vld [vmem:[%s20 + $0x30] sm:$0xff]
      %v4235 = vld [vmem:[%s20 + $0x38] sm:$0xff]
      %v4236 = vld [vmem:[%s20 + $0x40] sm:$0xff]
      %v4237 = vld [vmem:[%s20 + $0x48] sm:$0xff]
      %v4238 = vld [vmem:[%s20 + $0x50] sm:$0xff]
      %v4239 = vld [vmem:[%s20 + $0x58] sm:$0xff]
      %v4240 = vld [vmem:[%s20 + $0x60] sm:$0xff]
      %v4241 = vld [vmem:[%s20 + $0x68] sm:$0xff]
      %v4242 = vld [vmem:[%s20 + $0x70] sm:$0xff]
      %v4243 = vld [vmem:[%s20 + $0x78] sm:$0xff]
      %v4244 = vld [vmem:[%s21] sm:$0x1]
      %v4246 = vlaneseq
      %v4247 = vshrl.u32 %v4246, 7
      %v4248 = vsub.s32 0, %v4247
      %v4249 = vrot.slane %v4244, %v4248
      %4251 = vmatprep.subr.mxu0 0.0
      %4252 = vmatpush1.msra.mxu0 %v4228
      %4253 = vmatprep.subr.mxu0 0.0
      %4254 = vmatpush1.msra.mxu0 %v4229
      %4255 = vmatprep.subr.mxu0 0.0
      %4256 = vmatpush1.msra.mxu0 %v4230
      %4257 = vmatprep.subr.mxu0 0.0
      %4258 = vmatpush1.msra.mxu0 %v4231
      %4259 = vmatprep.subr.mxu0 0.0
      %4260 = vmatpush1.msra.mxu0 %v4232
      %4261 = vmatprep.subr.mxu0 0.0
      %4262 = vmatpush1.msra.mxu0 %v4233
      %4263 = vmatprep.subr.mxu0 0.0
      %4264 = vmatpush1.msra.mxu0 %v4234
      %4265 = vmatprep.subr.mxu0 0.0
      %4266 = vmatpush1.msra.mxu0 %v4235
      %4267 = vmatprep.subr.mxu0 0.0
      %4268 = vmatpush1.msra.mxu0 %v4236
      %4269 = vmatprep.subr.mxu0 0.0
      %4270 = vmatpush1.msra.mxu0 %v4237
      %4271 = vmatprep.subr.mxu0 0.0
      %4272 = vmatpush1.msra.mxu0 %v4238
      %4273 = vmatprep.subr.mxu0 0.0
      %4274 = vmatpush1.msra.mxu0 %v4239
      %4275 = vmatprep.subr.mxu0 0.0
      %4276 = vmatpush1.msra.mxu0 %v4240
      %4277 = vmatprep.subr.mxu0 0.0
      %4278 = vmatpush1.msra.mxu0 %v4241
      %4279 = vmatprep.subr.mxu0 0.0
      %4280 = vmatpush1.msra.mxu0 %v4242
      %4281 = vmatprep.subr.mxu0 0.0
      %4282 = vmatpush1.msra.mxu0 %v4243
      %4283 = vmatprep.subr.mxu0 0.0
      %4284 = vmatpush1.msra.mxu0 0.0
      %4285 = vmatprep.subr.mxu0 0.0
      %4286 = vmatpush1.msra.mxu0 0.0
      %4287 = vmatprep.subr.mxu0 0.0
      %4288 = vmatpush1.msra.mxu0 0.0
      %4289 = vmatprep.subr.mxu0 0.0
      %4290 = vmatpush1.msra.mxu0 0.0
      %4291 = vmatprep.subr.mxu0 0.0
      %4292 = vmatpush1.msra.mxu0 0.0
      %4293 = vmatprep.subr.mxu0 0.0
      %4294 = vmatpush1.msra.mxu0 0.0
      %4295 = vmatprep.subr.mxu0 0.0
      %4296 = vmatpush1.msra.mxu0 0.0
      %4297 = vmatprep.subr.mxu0 0.0
      %4298 = vmatpush1.msra.mxu0 0.0
      %4299 = vmatprep.subr.mxu0 0.0
      %4300 = vmatpush1.msra.mxu0 0.0
      %4301 = vmatprep.subr.mxu0 0.0
      %4302 = vmatpush1.msra.mxu0 0.0
      %4303 = vmatprep.subr.mxu0 0.0
      %4304 = vmatpush1.msra.mxu0 0.0
      %4305 = vmatprep.subr.mxu0 0.0
      %4306 = vmatpush1.msra.mxu0 0.0
      %4307 = vmatprep.subr.mxu0 0.0
      %4308 = vmatpush1.msra.mxu0 0.0
      %4309 = vmatprep.subr.mxu0 0.0
      %4310 = vmatpush1.msra.mxu0 0.0
      %4311 = vmatprep.subr.mxu0 0.0
      %4312 = vmatpush1.msra.mxu0 0.0
      %4313 = vmatprep.subr.mxu0 0.0
      %4314 = vmatpush1.msra.mxu0 0.0
      %4315 = vmatprep.mubr.f32.mxu0 0.0
      %4316 = vmatmul.mubr.f32.gmra.mrb[0].mxu0 %v4128
      %v4317 = vpop.f32.mrb[0].mxu0
      %v4318 = vadd.f32 %v4249, %v4317
      %v4319 = vpop.f32.mrb[0].mxu0
      %4320 = vmatprep.mubr.f32.mxu0 0.0
      %4321 = vmatmul.mubr.f32.gmra.mrb[0].mxu0 %v4129
      %v4322 = vpop.f32.mrb[0].mxu0
      %v4323 = vadd.f32 %v4249, %v4322
      %v4324 = vpop.f32.mrb[0].mxu0
      %4325 = vdwg.mxu0
      %4326 = vmatprep.subr.mxu0 0.0
      %4327 = vmatpush1.xpose.msra.mxu0 %v4318
      %4328 = vmatprep.subr.mxu0 0.0
      %4329 = vmatpush1.xpose.msra.mxu0 %v4323
      %4330 = vmatprep.subr.mxu0 0.0
      %4331 = vmatpush1.xpose.msra.mxu0 0.0
      %4332 = vmatprep.subr.mxu0 0.0
      %4333 = vmatpush1.xpose.msra.mxu0 0.0
      %4334 = vmatprep.subr.mxu0 0.0
      %4335 = vmatpush1.xpose.msra.mxu0 0.0
      %4336 = vmatprep.subr.mxu0 0.0
      %4337 = vmatpush1.xpose.msra.mxu0 0.0
      %4338 = vmatprep.subr.mxu0 0.0
      %4339 = vmatpush1.xpose.msra.mxu0 0.0
      %4340 = vmatprep.subr.mxu0 0.0
      %4341 = vmatpush1.xpose.msra.mxu0 0.0
      %4342 = vmatprep.subr.mxu0 0.0
      %4343 = vmatpush1.xpose.msra.mxu0 0.0
      %4344 = vmatprep.subr.mxu0 0.0
      %4345 = vmatpush1.xpose.msra.mxu0 0.0
      %4346 = vmatprep.subr.mxu0 0.0
      %4347 = vmatpush1.xpose.msra.mxu0 0.0
      %4348 = vmatprep.subr.mxu0 0.0
      %4349 = vmatpush1.xpose.msra.mxu0 0.0
      %4350 = vmatprep.subr.mxu0 0.0
      %4351 = vmatpush1.xpose.msra.mxu0 0.0
      %4352 = vmatprep.subr.mxu0 0.0
      %4353 = vmatpush1.xpose.msra.mxu0 0.0
      %4354 = vmatprep.subr.mxu0 0.0
      %4355 = vmatpush1.xpose.msra.mxu0 0.0
      %4356 = vmatprep.subr.mxu0 0.0
      %4357 = vmatpush1.xpose.msra.mxu0 0.0
      %4358 = vmatprep.subr.mxu0 0.0
      %4359 = vmatpush1.xpose.msra.mxu0 0.0
      %4360 = vmatprep.subr.mxu0 0.0
      %4361 = vmatpush1.xpose.msra.mxu0 0.0
      %4362 = vmatprep.subr.mxu0 0.0
      %4363 = vmatpush1.xpose.msra.mxu0 0.0
      %4364 = vmatprep.subr.mxu0 0.0
      %4365 = vmatpush1.xpose.msra.mxu0 0.0
      %4366 = vmatprep.subr.mxu0 0.0
      %4367 = vmatpush1.xpose.msra.mxu0 0.0
      %4368 = vmatprep.subr.mxu0 0.0
      %4369 = vmatpush1.xpose.msra.mxu0 0.0
      %4370 = vmatprep.subr.mxu0 0.0
      %4371 = vmatpush1.xpose.msra.mxu0 0.0
      %4372 = vmatprep.subr.mxu0 0.0
      %4373 = vmatpush1.xpose.msra.mxu0 0.0
      %4374 = vmatprep.subr.mxu0 0.0
      %4375 = vmatpush1.xpose.msra.mxu0 0.0
      %4376 = vmatprep.subr.mxu0 0.0
      %4377 = vmatpush1.xpose.msra.mxu0 0.0
      %4378 = vmatprep.subr.mxu0 0.0
      %4379 = vmatpush1.xpose.msra.mxu0 0.0
      %4380 = vmatprep.subr.mxu0 0.0
      %4381 = vmatpush1.xpose.msra.mxu0 0.0
      %4382 = vmatprep.subr.mxu0 0.0
      %4383 = vmatpush1.xpose.msra.mxu0 0.0
      %4384 = vmatprep.subr.mxu0 0.0
      %4385 = vmatpush1.xpose.msra.mxu0 0.0
      %4386 = vmatprep.subr.mxu0 0.0
      %4387 = vmatpush1.xpose.msra.mxu0 0.0
      %4388 = vmatprep.subr.mxu0 0.0
      %4389 = vmatpush1.xpose.msra.mxu0 0.0
      %4390 = vmatprep.mubr.f32.mxu0 0.0
      %4391 = vmatmul.mubr.f32.gmra.mrb[0].mxu0 %v4220
      %v4392 = vpop.f32.mrb[0].mxu0
      %v4393 = vadd.f32 0.0, %v4392
      %v4394 = vpop.f32.mrb[0].mxu0
      %4395 = vmatprep.mubr.f32.mxu0 0.0
      %4396 = vmatmul.mubr.f32.gmra.mrb[0].mxu0 %v4225
      %v4397 = vpop.f32.mrb[0].mxu0
      %v4398 = vadd.f32 0.0, %v4397
      %v4399 = vpop.f32.mrb[0].mxu0
      %4400 = vdwg.mxu0
      %v4401 = vsel %vm1416, %v4393, -inf
      %4402 = vmax.xlane.f32.xlu0 %v4401
      %v4403 = vpop.xlane.xlu0 %4402
      %v4404 = vsel %vm1416, %v4398, -inf
      %4405 = vmax.xlane.f32.xlu0 %v4404
      %v4406 = vpop.xlane.xlu0 %4405
      %v4407 = vsub.f32 %v4393, %v4403
      %v4408 = vsub.f32 %v4398, %v4406
      %v4409 = vmul.f32 %v4407, 1.442695
      %v4410 = vpow.pop %v4409
      %v4411 = vmul.f32 %v4408, 1.442695
      %v4412 = vpow.pop %v4411
      %v4413 = vsel %vm1416, %v4410, 0.0
      %4414 = vadd.xlane.f32.xlu0 %v4413
      %v4415 = vpop.xlane.xlu0 %4414
      %v4416 = vsel %vm1416, %v4412, 0.0
      %4417 = vadd.xlane.f32.xlu0 %v4416
      %v4418 = vpop.xlane.xlu0 %4417
      %v4419 = vrcp.pop %v4415
      %v4420 = vmul.f32 %v4410, %v4419
      %v4421 = vrcp.pop %v4418
      %v4422 = vmul.f32 %v4412, %v4421
      %4423 = vst [vmem:[%s718] sm:$0xff] %v4220
      %4424 = vst [vmem:[%s718 + $0x8] sm:$0xff] %v4225
      %4425 = vst [vmem:[%s723] sm:$0xff] 0.0
      %4426 = vst [vmem:[%s723 + $0x8] sm:$0xff] 0.0
      %4427 = vst.msk [vmem:[%s723] sm:$0xff] %vm1416, %v4420
      %4428 = vst.msk [vmem:[%s723 + $0x8] sm:$0xff] %vm1416, %v4422
      %p4429 = scmp.lt.s32.totalorder %s35, 1
      %s4430 = scalar_select %p4429, %s35, 1
      %s4431 = smul.addr %s4430, 2
      %s4432 = smul.addr %s4431, 8
      %s4433 = scalar_lea.vmem %s22, %s4432
      %p4434 = scmp.lt.s32.totalorder %s35, 1
      %s4435 = scalar_select %p4434, %s35, 1
      %s4436 = smul.addr %s4435, 2
      %s4437 = smul.addr %s4436, 8
      %s4438 = scalar_lea.vmem %s23, %s4437
      // Predicated region
      $region109: #{scene_graph_vit_forward.1} parent=107 // pred_check
        %p4439 = pneg %p520
      $region110: #{scene_graph_vit_forward.1} parent=107 // pred_check_branch
        %4441 = sbr.rel (%p4439) target = $region112
      $region111: #{scene_graph_vit_forward.1} parent=107 // pred_region
        _
      $region112: #{scene_graph_vit_forward.1} parent=107 // pred_fallthru
        _
      // Predicated region
      $region113: #{scene_graph_vit_forward.1} parent=107 // pred_check
        %p4442 = pneg %p546
      $region114: #{scene_graph_vit_forward.1} parent=107 // pred_check_branch
        %4444 = sbr.rel (%p4442) target = $region116
      $region115: #{scene_graph_vit_forward.1} parent=107 // pred_region
        _
      $region116: #{scene_graph_vit_forward.1} parent=107 // pred_fallthru
        _
    $region108: #{scene_graph_vit_forward.1} parent=5 // pred_fallthru
      _
    %p4445 = scmp.le.s32.totalorder 2, %s30
    // Predicated region
    $region117: #{scene_graph_vit_forward.1} parent=5 // pred_check
      %p4446 = pneg %p4445
    $region118: #{scene_graph_vit_forward.1} parent=5 // pred_check_branch
      %4448 = sbr.rel (%p4446) target = $region120
    $region119: #{scene_graph_vit_forward.1} parent=5 // pred_region
      %s4449 = ssub.s32 %s30, 2
      // Predicated region
      $region121: #{scene_graph_vit_forward.1} parent=119 // pred_check
        %p4450 = pneg %p526
      $region122: #{scene_graph_vit_forward.1} parent=119 // pred_check_branch
        %4452 = sbr.rel (%p4450) target = $region124
      $region123: #{scene_graph_vit_forward.1} parent=119 // pred_region
        %p4453 = scmp.lt.s32.totalorder %s36, 1
        %s4454 = scalar_select %p4453, %s36, 1
        %s4455 = smul.addr %s4454, 2
        %s4456 = smul.addr %s4455, 8
        %s4457 = scalar_lea.vmem %s22, %s4456
      $region124: #{scene_graph_vit_forward.1} parent=119 // pred_fallthru
        _
      // Predicated region
      $region125: #{scene_graph_vit_forward.1} parent=119 // pred_check
        %p4458 = pneg %p552
      $region126: #{scene_graph_vit_forward.1} parent=119 // pred_check_branch
        %4460 = sbr.rel (%p4458) target = $region128
      $region127: #{scene_graph_vit_forward.1} parent=119 // pred_region
        %p4461 = scmp.lt.s32.totalorder %s36, 1
        %s4462 = scalar_select %p4461, %s36, 1
        %s4463 = smul.addr %s4462, 2
        %s4464 = smul.addr %s4463, 8
        %s4465 = scalar_lea.vmem %s23, %s4464
      $region128: #{scene_graph_vit_forward.1} parent=119 // pred_fallthru
        _
    $region120: #{scene_graph_vit_forward.1} parent=5 // pred_fallthru
      _
  $region6: #{scene_graph_vit_forward.1} parent=0 // loop_footer
    %s34 = sadd.s32 1, %s30
  $region7: #{scene_graph_vit_forward.1} parent=0 // loop_footer_branch
    %29 = sbr.rel target = $region3
  $region8: #{scene_graph_vit_forward.1} parent=0 // loop_exit
    _

</llo_original>
